<compile_context>
chip_gen: v5e
topology: v5e:2x2
jax: 0.10.0
libtpu: 0.0.40
codegen_flags: <defaults>
</compile_context>

<pallas_src>
import jax
import jax.numpy as jnp
from jax.experimental import pallas as pl
from jax.experimental.pallas import tpu as pltpu

SEQ = 50          # hard-coded sequence length in the PyTorch forward
NOISE_DIM = 10    # GRU input/hidden size (hard-coded)
POSE_DIM = 36     # final_linear output size (hard-coded)
OUT_PAD = 128     # lane-dense padded output width


def _round_up(x, m):
    return (x + m - 1) // m * m


# ----------------------------- Pallas kernel ------------------------------- #
def _mlp_kernel(inp_ref, aux_ref, w0i_ref, w0a_ref, b0_ref,
                wa_ref, sha_ref, wb_ref, shb_ref,
                wf_ref, bf_ref, out_ref):
    # layer0: split-K matmul instead of materializing the concat in HBM.
    h = (jnp.dot(inp_ref[...], w0i_ref[...], preferred_element_type=jnp.float32)
         + jnp.dot(aux_ref[...], w0a_ref[...], preferred_element_type=jnp.float32)
         + b0_ref[...])

    # three res_linear_layer blocks, statically unrolled.
    # BN(eval) already folded into the bf16 weights / f32 shifts at init time.
    for i in range(3):
        y = jnp.dot(h.astype(jnp.bfloat16), wa_ref[i],
                    preferred_element_type=jnp.float32) + sha_ref[i]
        y = jnp.maximum(y, 0.0)
        y = jnp.dot(y.astype(jnp.bfloat16), wb_ref[i],
                    preferred_element_type=jnp.float32) + shb_ref[i]
        y = jnp.maximum(y, 0.0)
        h = y + h                                   # residual add

    # TODO(synk): nn.Dropout(p=0.5) is stochastic in training mode; modeled as
    # inference-mode identity here.
    o = jnp.dot(h.astype(jnp.bfloat16), wf_ref[...],
                preferred_element_type=jnp.float32) + bf_ref[...]
    out_ref[...] = jnp.tanh(o)                      # rnn_noise_squashing


def mlp_stack(inp, aux, params):
    """inp: (N, tmpsize) f32, aux: (N, 10) f32 -> (N, 36) f32."""
    n = inp.shape[0]
    tile_m = min(256, _round_up(n, 8))              # 256 for big N, tight for demo
    n_pad = _round_up(n, tile_m)
    if n_pad != n:
        inp = jnp.pad(inp, ((0, n_pad - n), (0, 0)))
        aux = jnp.pad(aux, ((0, n_pad - n), (0, 0)))
    inp = inp.astype(jnp.bfloat16)
    aux = aux.astype(jnp.bfloat16)
    grid_m = n_pad // tile_m

    def _wspec(a):
        nd = a.ndim
        return pl.BlockSpec(a.shape, lambda i, nd=nd: (0,) * nd)

    weights = (params["w0i"], params["w0a"], params["b0"],
               params["wa"], params["sha"], params["wb"], params["shb"],
               params["wf"], params["bf"])

    out = pl.pallas_call(
        _mlp_kernel,
        out_shape=jax.ShapeDtypeStruct((n_pad, OUT_PAD), jnp.float32),
        grid_spec=pltpu.PrefetchScalarGridSpec(
            num_scalar_prefetch=0,
            grid=(grid_m,),
            in_specs=[pl.BlockSpec((tile_m, inp.shape[1]), lambda i: (i, 0)),
                      pl.BlockSpec((tile_m, NOISE_DIM), lambda i: (i, 0))]
                     + [_wspec(w) for w in weights],
            out_specs=pl.BlockSpec((tile_m, OUT_PAD), lambda i: (i, 0)),
        ),
        compiler_params=pltpu.CompilerParams(
            dimension_semantics=("parallel",),        # megacore sharding on v7x
            vmem_limit_bytes=48 * 1024 * 1024),       # headroom on v7x's 64 MiB
    )(inp, aux, *weights)
    return out[:n, :POSE_DIM]


# ----------------------------- JAX glue ------------------------------------ #
def gru(noise, gru_params):
    """PyTorch-style GRU(10,10), batch_first, zero initial state.

    noise: (B, T, 10).  Weights use PyTorch layout (3*H, in), gate order [r,z,n].
    The input projection is hoisted out of the recurrence (one batched matmul);
    the scan only carries the h-dependent half.
    """
    w_ih, w_hh, b_ih, b_hh = gru_params
    b, t, _ = noise.shape

    gi_all = noise.reshape(b * t, NOISE_DIM) @ w_ih.T + b_ih
    gi_all = gi_all.reshape(b, t, 3 * NOISE_DIM)

    def step(h, gi_t):
        gh = h @ w_hh.T + b_hh
        i_r, i_z, i_n = jnp.split(gi_t, 3, axis=-1)
        h_r, h_z, h_n = jnp.split(gh, 3, axis=-1)
        r = jax.nn.sigmoid(i_r + h_r)
        z = jax.nn.sigmoid(i_z + h_z)
        n_ = jnp.tanh(i_n + r * h_n)
        h_new = (1.0 - z) * n_ + z * h
        return h_new, h_new

    h0 = jnp.zeros((b, NOISE_DIM), jnp.float32)
    _, ys = jax.lax.scan(step, h0, jnp.swapaxes(gi_all, 0, 1))
    return jnp.swapaxes(ys, 0, 1)  # (B, T, H)


def hr_pose_generator_forward(inp, initpose, params, noise_key, batch):
    # initpose is unused for encoder='gru' (matches the PyTorch branch logic).
    del initpose
    # noise = FloatTensor(batch, 50, 10).normal_(0, 0.33)
    noise = 0.33 * jax.random.normal(noise_key, (batch, SEQ, NOISE_DIM), jnp.float32)
    aux = jnp.tanh(gru(noise, params["gru"]))       # rnn_noise + tanh
    inp_flat = inp.reshape(-1, inp.shape[-1])       # (B*50, tmpsize)
    aux_flat = aux.reshape(-1, NOISE_DIM)           # (B*50, 10)
    out = mlp_stack(inp_flat, aux_flat, params)     # Pallas kernel (hot path)
    return out.reshape(batch, SEQ, POSE_DIM)


# ----------------------------- parameters ----------------------------------- #
def init_params(key, size, hidden):
    keys = jax.random.split(key, 6)
    tmpsize = size - NOISE_DIM

    def lin(k, fan_in, fan_out):
        bound = 1.0 / (fan_in ** 0.5)
        kw, kb = jax.random.split(k)
        w = jax.random.uniform(kw, (fan_in, fan_out), jnp.float32, -bound, bound)
        b = jax.random.uniform(kb, (1, fan_out), jnp.float32, -bound, bound)
        return w, b

    def bn_fold(k, feat):
        kg, kb, km, kv = jax.random.split(k, 4)
        gamma = jax.random.uniform(kg, (1, feat), jnp.float32, 0.8, 1.2)
        beta = 0.1 * jax.random.normal(kb, (1, feat), jnp.float32)
        rmean = 0.1 * jax.random.normal(km, (1, feat), jnp.float32)
        rvar = jax.random.uniform(kv, (1, feat), jnp.float32, 0.5, 1.5)
        scale = gamma / jnp.sqrt(rvar + 1e-5)
        shift = beta - rmean * scale
        return scale, shift

    # GRU(10 -> 10): PyTorch layout (3*H, in), gate order [r, z, n]
    gb = 1.0 / (NOISE_DIM ** 0.5)
    kg = jax.random.split(keys[0], 4)
    gru_p = (
        jax.random.uniform(kg[0], (3 * NOISE_DIM, NOISE_DIM), jnp.float32, -gb, gb),
        jax.random.uniform(kg[1], (3 * NOISE_DIM, NOISE_DIM), jnp.float32, -gb, gb),
        jax.random.uniform(kg[2], (3 * NOISE_DIM,), jnp.float32, -gb, gb),
        jax.random.uniform(kg[3], (3 * NOISE_DIM,), jnp.float32, -gb, gb),
    )

    # layer0, split so the kernel never needs the concatenated input.
    w0, b0 = lin(keys[1], size, hidden)
    w0i = w0[:tmpsize].astype(jnp.bfloat16)
    w0a = w0[tmpsize:].astype(jnp.bfloat16)

    # res blocks: fold BN scale into the weight columns, linear bias into shift.
    wa, sha, wb, shb = [], [], [], []
    for i in range(3):
        k1, k2, k3, k4 = jax.random.split(keys[2 + i], 4)
        w1, b1 = lin(k1, hidden, hidden)
        w2, b2 = lin(k2, hidden, hidden)
        s1, t1 = bn_fold(k3, hidden)
        s2, t2 = bn_fold(k4, hidden)
        wa.append((w1 * s1).astype(jnp.bfloat16)); sha.append(b1 * s1 + t1)
        wb.append((w2 * s2).astype(jnp.bfloat16)); shb.append(b2 * s2 + t2)

    # final_linear, padded to a lane-dense 128-wide output slab.
    wf, bf = lin(keys[5], hidden, POSE_DIM)
    wf_pad = jnp.zeros((hidden, OUT_PAD), jnp.float32).at[:, :POSE_DIM].set(wf)
    bf_pad = jnp.zeros((1, OUT_PAD), jnp.float32).at[:, :POSE_DIM].set(bf)

    return dict(
        gru=gru_p, w0i=w0i, w0a=w0a, b0=b0,
        wa=jnp.stack(wa), sha=jnp.stack(sha),
        wb=jnp.stack(wb), shb=jnp.stack(shb),
        wf=wf_pad.astype(jnp.bfloat16), bf=bf_pad,
    )


# ----------------------------- demo ----------------------------------------- #
if __name__ == "__main__":
    batch = 2
    encoder = "gru"                 # -> tmpsize = 256, size = 266, no initp branch
    tmpsize = 128 if "min" in encoder else 256
    size = tmpsize + NOISE_DIM      # 266
    linear_hidden = 256             # small demo size (PyTorch default is 1024)

    key = jax.random.PRNGKey(0)
    k_in, k_initp, k_noise, k_par = jax.random.split(key, 4)

    x_in = jax.random.normal(k_in, (batch, SEQ, tmpsize), jnp.float32)
    initpose = jax.random.normal(k_initp, (batch, POSE_DIM), jnp.float32)  # unused ('gru')
    params = init_params(k_par, size, linear_hidden)

    out = hr_pose_generator_forward(x_in, initpose, params, k_noise, batch)
    out = jax.block_until_ready(out)
    assert out.shape == (batch, SEQ, POSE_DIM)
    assert bool(jnp.all(jnp.isfinite(out)))
    print("KERNEL_OK")
</pallas_src>

<mosaic_0001>
module attributes {stable_mosaic.version = 11 : i64} {
  func.func @_mlp_kernel(%arg0: i32, %arg1: memref<104x256xbf16, #tpu.memory_space<vmem>>, %arg2: memref<104x10xbf16, #tpu.memory_space<vmem>>, %arg3: memref<256x256xbf16, #tpu.memory_space<vmem>>, %arg4: memref<10x256xbf16, #tpu.memory_space<vmem>>, %arg5: memref<1x256xf32, #tpu.memory_space<vmem>>, %arg6: memref<3x256x256xbf16, #tpu.memory_space<vmem>>, %arg7: memref<3x1x256xf32, #tpu.memory_space<vmem>>, %arg8: memref<3x256x256xbf16, #tpu.memory_space<vmem>>, %arg9: memref<3x1x256xf32, #tpu.memory_space<vmem>>, %arg10: memref<256x128xbf16, #tpu.memory_space<vmem>>, %arg11: memref<1x128xf32, #tpu.memory_space<vmem>>, %arg12: memref<104x128xf32, #tpu.memory_space<vmem>>) attributes {dimension_semantics = [#tpu.dimension_semantics<parallel>], iteration_bounds = array<i64: 1>, scalar_prefetch = 0 : i64, scratch_operands = 0 : i64, tpu.core_type = #tpu.core_type<tc>, window_params = [{transform_indices = @transform_0, window_bounds = array<i64: 104, 256>}, {transform_indices = @transform_1, window_bounds = array<i64: 104, 10>}, {pipeline_mode = #tpu.pipeline_mode<synchronous>, transform_indices = @transform_2, window_bounds = array<i64: 256, 256>}, {pipeline_mode = #tpu.pipeline_mode<synchronous>, transform_indices = @transform_3, window_bounds = array<i64: 10, 256>}, {pipeline_mode = #tpu.pipeline_mode<synchronous>, transform_indices = @transform_4, window_bounds = array<i64: 1, 256>}, {pipeline_mode = #tpu.pipeline_mode<synchronous>, transform_indices = @transform_5, window_bounds = array<i64: 3, 256, 256>}, {pipeline_mode = #tpu.pipeline_mode<synchronous>, transform_indices = @transform_6, window_bounds = array<i64: 3, 1, 256>}, {pipeline_mode = #tpu.pipeline_mode<synchronous>, transform_indices = @transform_7, window_bounds = array<i64: 3, 256, 256>}, {pipeline_mode = #tpu.pipeline_mode<synchronous>, transform_indices = @transform_8, window_bounds = array<i64: 3, 1, 256>}, {pipeline_mode = #tpu.pipeline_mode<synchronous>, transform_indices = @transform_9, window_bounds = array<i64: 256, 128>}, {pipeline_mode = #tpu.pipeline_mode<synchronous>, transform_indices = @transform_10, window_bounds = array<i64: 1, 128>}, {transform_indices = @transform_11, window_bounds = array<i64: 104, 128>}]} {
    %c0 = arith.constant 0 : index
    %c0_0 = arith.constant 0 : index
    %0 = vector.load %arg1[%c0, %c0_0] : memref<104x256xbf16, #tpu.memory_space<vmem>>, vector<104x256xbf16>
    %c0_1 = arith.constant 0 : index
    %c0_2 = arith.constant 0 : index
    %1 = vector.load %arg3[%c0_1, %c0_2] : memref<256x256xbf16, #tpu.memory_space<vmem>>, vector<256x256xbf16>
    %cst = arith.constant dense<0.000000e+00> : vector<104x256xf32>
    %2 = tpu.matmul %0, %1, %cst {dimension_numbers = #tpu.dot_dimension_numbers<[1], [0], [0], [1], [0, 0, 1, 1], [], []>} : vector<104x256xbf16>, vector<256x256xbf16>, vector<104x256xf32> -> vector<104x256xf32>
    %c0_3 = arith.constant 0 : index
    %c0_4 = arith.constant 0 : index
    %3 = vector.load %arg2[%c0_3, %c0_4] : memref<104x10xbf16, #tpu.memory_space<vmem>>, vector<104x10xbf16>
    %c0_5 = arith.constant 0 : index
    %c0_6 = arith.constant 0 : index
    %4 = vector.load %arg4[%c0_5, %c0_6] : memref<10x256xbf16, #tpu.memory_space<vmem>>, vector<10x256xbf16>
    %cst_7 = arith.constant dense<0.000000e+00> : vector<104x256xf32>
    %5 = tpu.matmul %3, %4, %cst_7 {dimension_numbers = #tpu.dot_dimension_numbers<[1], [0], [0], [1], [0, 0, 1, 1], [], []>} : vector<104x10xbf16>, vector<10x256xbf16>, vector<104x256xf32> -> vector<104x256xf32>
    %6 = arith.addf %2, %5 : vector<104x256xf32>
    %c0_8 = arith.constant 0 : index
    %c0_9 = arith.constant 0 : index
    %7 = vector.load %arg5[%c0_8, %c0_9] : memref<1x256xf32, #tpu.memory_space<vmem>>, vector<1x256xf32>
    %8 = vector.broadcast %7 : vector<1x256xf32> to vector<104x256xf32>
    %9 = arith.addf %6, %8 : vector<104x256xf32>
    %10 = arith.truncf %9 : vector<104x256xf32> to vector<104x256xbf16>
    %c0_10 = arith.constant 0 : index
    %c0_11 = arith.constant 0 : index
    %c0_12 = arith.constant 0 : index
    %11 = vector.load %arg6[%c0_10, %c0_11, %c0_12] : memref<3x256x256xbf16, #tpu.memory_space<vmem>>, vector<1x256x256xbf16>
    %12 = vector.shape_cast %11 : vector<1x256x256xbf16> to vector<256x256xbf16>
    %cst_13 = arith.constant dense<0.000000e+00> : vector<104x256xf32>
    %13 = tpu.matmul %10, %12, %cst_13 {dimension_numbers = #tpu.dot_dimension_numbers<[1], [0], [0], [1], [0, 0, 1, 1], [], []>} : vector<104x256xbf16>, vector<256x256xbf16>, vector<104x256xf32> -> vector<104x256xf32>
    %c0_14 = arith.constant 0 : index
    %c0_15 = arith.constant 0 : index
    %c0_16 = arith.constant 0 : index
    %14 = vector.load %arg7[%c0_14, %c0_15, %c0_16] : memref<3x1x256xf32, #tpu.memory_space<vmem>>, vector<1x1x256xf32>
    %15 = vector.shape_cast %14 : vector<1x1x256xf32> to vector<1x256xf32>
    %16 = vector.broadcast %15 : vector<1x256xf32> to vector<104x256xf32>
    %17 = arith.addf %13, %16 : vector<104x256xf32>
    %cst_17 = arith.constant 0.000000e+00 : f32
    %18 = vector.broadcast %cst_17 : f32 to vector<104x256xf32>
    %19 = arith.maximumf %17, %18 : vector<104x256xf32>
    %20 = arith.truncf %19 : vector<104x256xf32> to vector<104x256xbf16>
    %c0_18 = arith.constant 0 : index
    %c0_19 = arith.constant 0 : index
    %c0_20 = arith.constant 0 : index
    %21 = vector.load %arg8[%c0_18, %c0_19, %c0_20] : memref<3x256x256xbf16, #tpu.memory_space<vmem>>, vector<1x256x256xbf16>
    %22 = vector.shape_cast %21 : vector<1x256x256xbf16> to vector<256x256xbf16>
    %cst_21 = arith.constant dense<0.000000e+00> : vector<104x256xf32>
    %23 = tpu.matmul %20, %22, %cst_21 {dimension_numbers = #tpu.dot_dimension_numbers<[1], [0], [0], [1], [0, 0, 1, 1], [], []>} : vector<104x256xbf16>, vector<256x256xbf16>, vector<104x256xf32> -> vector<104x256xf32>
    %c0_22 = arith.constant 0 : index
    %c0_23 = arith.constant 0 : index
    %c0_24 = arith.constant 0 : index
    %24 = vector.load %arg9[%c0_22, %c0_23, %c0_24] : memref<3x1x256xf32, #tpu.memory_space<vmem>>, vector<1x1x256xf32>
    %25 = vector.shape_cast %24 : vector<1x1x256xf32> to vector<1x256xf32>
    %26 = vector.broadcast %25 : vector<1x256xf32> to vector<104x256xf32>
    %27 = arith.addf %23, %26 : vector<104x256xf32>
    %cst_25 = arith.constant 0.000000e+00 : f32
    %28 = vector.broadcast %cst_25 : f32 to vector<104x256xf32>
    %29 = arith.maximumf %27, %28 : vector<104x256xf32>
    %30 = arith.addf %29, %9 : vector<104x256xf32>
    %31 = arith.truncf %30 : vector<104x256xf32> to vector<104x256xbf16>
    %c1 = arith.constant 1 : index
    %c0_26 = arith.constant 0 : index
    %c0_27 = arith.constant 0 : index
    %32 = vector.load %arg6[%c1, %c0_26, %c0_27] : memref<3x256x256xbf16, #tpu.memory_space<vmem>>, vector<1x256x256xbf16>
    %33 = vector.shape_cast %32 : vector<1x256x256xbf16> to vector<256x256xbf16>
    %cst_28 = arith.constant dense<0.000000e+00> : vector<104x256xf32>
    %34 = tpu.matmul %31, %33, %cst_28 {dimension_numbers = #tpu.dot_dimension_numbers<[1], [0], [0], [1], [0, 0, 1, 1], [], []>} : vector<104x256xbf16>, vector<256x256xbf16>, vector<104x256xf32> -> vector<104x256xf32>
    %c1_29 = arith.constant 1 : index
    %c0_30 = arith.constant 0 : index
    %c0_31 = arith.constant 0 : index
    %35 = vector.load %arg7[%c1_29, %c0_30, %c0_31] : memref<3x1x256xf32, #tpu.memory_space<vmem>>, vector<1x1x256xf32>
    %36 = vector.shape_cast %35 : vector<1x1x256xf32> to vector<1x256xf32>
    %37 = vector.broadcast %36 : vector<1x256xf32> to vector<104x256xf32>
    %38 = arith.addf %34, %37 : vector<104x256xf32>
    %cst_32 = arith.constant 0.000000e+00 : f32
    %39 = vector.broadcast %cst_32 : f32 to vector<104x256xf32>
    %40 = arith.maximumf %38, %39 : vector<104x256xf32>
    %41 = arith.truncf %40 : vector<104x256xf32> to vector<104x256xbf16>
    %c1_33 = arith.constant 1 : index
    %c0_34 = arith.constant 0 : index
    %c0_35 = arith.constant 0 : index
    %42 = vector.load %arg8[%c1_33, %c0_34, %c0_35] : memref<3x256x256xbf16, #tpu.memory_space<vmem>>, vector<1x256x256xbf16>
    %43 = vector.shape_cast %42 : vector<1x256x256xbf16> to vector<256x256xbf16>
    %cst_36 = arith.constant dense<0.000000e+00> : vector<104x256xf32>
    %44 = tpu.matmul %41, %43, %cst_36 {dimension_numbers = #tpu.dot_dimension_numbers<[1], [0], [0], [1], [0, 0, 1, 1], [], []>} : vector<104x256xbf16>, vector<256x256xbf16>, vector<104x256xf32> -> vector<104x256xf32>
    %c1_37 = arith.constant 1 : index
    %c0_38 = arith.constant 0 : index
    %c0_39 = arith.constant 0 : index
    %45 = vector.load %arg9[%c1_37, %c0_38, %c0_39] : memref<3x1x256xf32, #tpu.memory_space<vmem>>, vector<1x1x256xf32>
    %46 = vector.shape_cast %45 : vector<1x1x256xf32> to vector<1x256xf32>
    %47 = vector.broadcast %46 : vector<1x256xf32> to vector<104x256xf32>
    %48 = arith.addf %44, %47 : vector<104x256xf32>
    %cst_40 = arith.constant 0.000000e+00 : f32
    %49 = vector.broadcast %cst_40 : f32 to vector<104x256xf32>
    %50 = arith.maximumf %48, %49 : vector<104x256xf32>
    %51 = arith.addf %50, %30 : vector<104x256xf32>
    %52 = arith.truncf %51 : vector<104x256xf32> to vector<104x256xbf16>
    %c2 = arith.constant 2 : index
    %c0_41 = arith.constant 0 : index
    %c0_42 = arith.constant 0 : index
    %53 = vector.load %arg6[%c2, %c0_41, %c0_42] : memref<3x256x256xbf16, #tpu.memory_space<vmem>>, vector<1x256x256xbf16>
    %54 = vector.shape_cast %53 : vector<1x256x256xbf16> to vector<256x256xbf16>
    %cst_43 = arith.constant dense<0.000000e+00> : vector<104x256xf32>
    %55 = tpu.matmul %52, %54, %cst_43 {dimension_numbers = #tpu.dot_dimension_numbers<[1], [0], [0], [1], [0, 0, 1, 1], [], []>} : vector<104x256xbf16>, vector<256x256xbf16>, vector<104x256xf32> -> vector<104x256xf32>
    %c2_44 = arith.constant 2 : index
    %c0_45 = arith.constant 0 : index
    %c0_46 = arith.constant 0 : index
    %56 = vector.load %arg7[%c2_44, %c0_45, %c0_46] : memref<3x1x256xf32, #tpu.memory_space<vmem>>, vector<1x1x256xf32>
    %57 = vector.shape_cast %56 : vector<1x1x256xf32> to vector<1x256xf32>
    %58 = vector.broadcast %57 : vector<1x256xf32> to vector<104x256xf32>
    %59 = arith.addf %55, %58 : vector<104x256xf32>
    %cst_47 = arith.constant 0.000000e+00 : f32
    %60 = vector.broadcast %cst_47 : f32 to vector<104x256xf32>
    %61 = arith.maximumf %59, %60 : vector<104x256xf32>
    %62 = arith.truncf %61 : vector<104x256xf32> to vector<104x256xbf16>
    %c2_48 = arith.constant 2 : index
    %c0_49 = arith.constant 0 : index
    %c0_50 = arith.constant 0 : index
    %63 = vector.load %arg8[%c2_48, %c0_49, %c0_50] : memref<3x256x256xbf16, #tpu.memory_space<vmem>>, vector<1x256x256xbf16>
    %64 = vector.shape_cast %63 : vector<1x256x256xbf16> to vector<256x256xbf16>
    %cst_51 = arith.constant dense<0.000000e+00> : vector<104x256xf32>
    %65 = tpu.matmul %62, %64, %cst_51 {dimension_numbers = #tpu.dot_dimension_numbers<[1], [0], [0], [1], [0, 0, 1, 1], [], []>} : vector<104x256xbf16>, vector<256x256xbf16>, vector<104x256xf32> -> vector<104x256xf32>
    %c2_52 = arith.constant 2 : index
    %c0_53 = arith.constant 0 : index
    %c0_54 = arith.constant 0 : index
    %66 = vector.load %arg9[%c2_52, %c0_53, %c0_54] : memref<3x1x256xf32, #tpu.memory_space<vmem>>, vector<1x1x256xf32>
    %67 = vector.shape_cast %66 : vector<1x1x256xf32> to vector<1x256xf32>
    %68 = vector.broadcast %67 : vector<1x256xf32> to vector<104x256xf32>
    %69 = arith.addf %65, %68 : vector<104x256xf32>
    %cst_55 = arith.constant 0.000000e+00 : f32
    %70 = vector.broadcast %cst_55 : f32 to vector<104x256xf32>
    %71 = arith.maximumf %69, %70 : vector<104x256xf32>
    %72 = arith.addf %71, %51 : vector<104x256xf32>
    %73 = arith.truncf %72 : vector<104x256xf32> to vector<104x256xbf16>
    %c0_56 = arith.constant 0 : index
    %c0_57 = arith.constant 0 : index
    %74 = vector.load %arg10[%c0_56, %c0_57] : memref<256x128xbf16, #tpu.memory_space<vmem>>, vector<256x128xbf16>
    %cst_58 = arith.constant dense<0.000000e+00> : vector<104x128xf32>
    %75 = tpu.matmul %73, %74, %cst_58 {dimension_numbers = #tpu.dot_dimension_numbers<[1], [0], [0], [1], [0, 0, 1, 1], [], []>} : vector<104x256xbf16>, vector<256x128xbf16>, vector<104x128xf32> -> vector<104x128xf32>
    %c0_59 = arith.constant 0 : index
    %c0_60 = arith.constant 0 : index
    %76 = vector.load %arg11[%c0_59, %c0_60] : memref<1x128xf32, #tpu.memory_space<vmem>>, vector<1x128xf32>
    %77 = vector.broadcast %76 : vector<1x128xf32> to vector<104x128xf32>
    %78 = arith.addf %75, %77 : vector<104x128xf32>
    %79 = math.tanh %78 : vector<104x128xf32>
    %c0_61 = arith.constant 0 : index
    %c0_62 = arith.constant 0 : index
    %80 = vector.load %arg12[%c0_61, %c0_62] : memref<104x128xf32, #tpu.memory_space<vmem>>, vector<104x128xf32>
    tpu.vector_store %arg12[%c0_61, %c0_62], %79 {strides = array<i32>} : memref<104x128xf32, #tpu.memory_space<vmem>>, vector<104x128xf32>,
    return
  }
  func.func @transform_0(%arg0: i32) -> (i32, i32) {
    %c0_i32 = arith.constant 0 : i32
    %c0_i32_0 = arith.constant 0 : i32
    return %arg0, %c0_i32 : i32, i32
  }
  func.func @transform_1(%arg0: i32) -> (i32, i32) {
    %c0_i32 = arith.constant 0 : i32
    %c0_i32_0 = arith.constant 0 : i32
    return %arg0, %c0_i32 : i32, i32
  }
  func.func @transform_2(%arg0: i32) -> (i32, i32) {
    %c0_i32 = arith.constant 0 : i32
    %c0_i32_0 = arith.constant 0 : i32
    %c0_i32_1 = arith.constant 0 : i32
    return %c0_i32, %c0_i32_0 : i32, i32
  }
  func.func @transform_3(%arg0: i32) -> (i32, i32) {
    %c0_i32 = arith.constant 0 : i32
    %c0_i32_0 = arith.constant 0 : i32
    %c0_i32_1 = arith.constant 0 : i32
    return %c0_i32, %c0_i32_0 : i32, i32
  }
  func.func @transform_4(%arg0: i32) -> (i32, i32) {
    %c0_i32 = arith.constant 0 : i32
    %c0_i32_0 = arith.constant 0 : i32
    %c0_i32_1 = arith.constant 0 : i32
    return %c0_i32, %c0_i32_0 : i32, i32
  }
  func.func @transform_5(%arg0: i32) -> (i32, i32, i32) {
    %c0_i32 = arith.constant 0 : i32
    %c0_i32_0 = arith.constant 0 : i32
    %c0_i32_1 = arith.constant 0 : i32
    %c0_i32_2 = arith.constant 0 : i32
    return %c0_i32, %c0_i32_0, %c0_i32_1 : i32, i32, i32
  }
  func.func @transform_6(%arg0: i32) -> (i32, i32, i32) {
    %c0_i32 = arith.constant 0 : i32
    %c0_i32_0 = arith.constant 0 : i32
    %c0_i32_1 = arith.constant 0 : i32
    %c0_i32_2 = arith.constant 0 : i32
    return %c0_i32, %c0_i32_0, %c0_i32_1 : i32, i32, i32
  }
  func.func @transform_7(%arg0: i32) -> (i32, i32, i32) {
    %c0_i32 = arith.constant 0 : i32
    %c0_i32_0 = arith.constant 0 : i32
    %c0_i32_1 = arith.constant 0 : i32
    %c0_i32_2 = arith.constant 0 : i32
    return %c0_i32, %c0_i32_0, %c0_i32_1 : i32, i32, i32
  }
  func.func @transform_8(%arg0: i32) -> (i32, i32, i32) {
    %c0_i32 = arith.constant 0 : i32
    %c0_i32_0 = arith.constant 0 : i32
    %c0_i32_1 = arith.constant 0 : i32
    %c0_i32_2 = arith.constant 0 : i32
    return %c0_i32, %c0_i32_0, %c0_i32_1 : i32, i32, i32
  }
  func.func @transform_9(%arg0: i32) -> (i32, i32) {
    %c0_i32 = arith.constant 0 : i32
    %c0_i32_0 = arith.constant 0 : i32
    %c0_i32_1 = arith.constant 0 : i32
    return %c0_i32, %c0_i32_0 : i32, i32
  }
  func.func @transform_10(%arg0: i32) -> (i32, i32) {
    %c0_i32 = arith.constant 0 : i32
    %c0_i32_0 = arith.constant 0 : i32
    %c0_i32_1 = arith.constant 0 : i32
    return %c0_i32, %c0_i32_0 : i32, i32
  }
  func.func @transform_11(%arg0: i32) -> (i32, i32) {
    %c0_i32 = arith.constant 0 : i32
    %c0_i32_0 = arith.constant 0 : i32
    return %arg0, %c0_i32 : i32, i32
  }
}

</mosaic_0001>

<llo_original>
// kernel: tpu_custom_call.1
$region0: #{tpu_custom_call.1}
  #allocation0 [shape = 'u32[]', space=smem, size = 0x4, offset = 0x4, fixed_abs, tag = 'smem constant byte address 0x4 - core index']
  #allocation1 [shape = 'u32[72,128]{1,0:T(1,128)}', space=vmem, size = 0x9000, scoped, tag = 'internal scratch']
  %s0 = inlined_call_operand.hbm [shape: bf16[104,256], index: 0, kind: input, shape index: {}]
  %s1 = inlined_call_operand.vmem [shape: bf16[104,10], index: 1, kind: input, shape index: {}]
  %s2 = inlined_call_operand.hbm [shape: bf16[256,256], index: 2, kind: input, shape index: {}]
  %s3 = inlined_call_operand.vmem [shape: bf16[10,256], index: 3, kind: input, shape index: {}]
  %s4 = inlined_call_operand.vmem [shape: f32[1,256], index: 4, kind: input, shape index: {}]
  %s5 = inlined_call_operand.hbm [shape: bf16[3,256,256], index: 5, kind: input, shape index: {}]
  %s6 = inlined_call_operand.vmem [shape: f32[3,1,256], index: 6, kind: input, shape index: {}]
  %s7 = inlined_call_operand.hbm [shape: bf16[3,256,256], index: 7, kind: input, shape index: {}]
  %s8 = inlined_call_operand.vmem [shape: f32[3,1,256], index: 8, kind: input, shape index: {}]
  %s9 = inlined_call_operand.hbm [shape: bf16[256,128], index: 9, kind: input, shape index: {}]
  %s10 = inlined_call_operand.vmem [shape: f32[1,128], index: 10, kind: input, shape index: {}]
  %s11 = inlined_call_operand.hbm [shape: f32[104,128], index: 11, kind: output, shape index: {}]
  %s12 = sld [smem:[#allocation0]]
  $region74: #{tpu_custom_call.1} parent=0
    _
  %s14 = ssub.s32 1, %s12
  %s15 = scalar_select 0, %s14, %s12
  $region1: #{tpu_custom_call.1} parent=0
    #allocation2 [shape = 'u8[53248]{0}', space=vmem, size = 0xd000, scoped, tag = 'input window, operand 0, single buffered']
    #allocation3 [shape = 's32[1]{0}', space=sflag, size = 0x4, scoped, tag = 'scoped memory for tpu_custom_call.1']
    #allocation4 [shape = 's32[1]{0}', space=sflag, size = 0x4, scoped, tag = 'scoped memory for tpu_custom_call.1']
    #allocation5 [shape = 'u8[131072]{0}', space=vmem, size = 0x20000, scoped, tag = 'input window, operand 2, single buffered']
    #allocation6 [shape = 's32[1]{0}', space=sflag, size = 0x4, scoped, tag = 'scoped memory for tpu_custom_call.1']
    #allocation7 [shape = 'u8[393216]{0}', space=vmem, size = 0x60000, scoped, tag = 'input window, operand 5, single buffered']
    #allocation8 [shape = 'u8[393216]{0}', space=vmem, size = 0x60000, scoped, tag = 'input window, operand 7, single buffered']
    #allocation9 [shape = 's32[1]{0}', space=sflag, size = 0x4, scoped, tag = 'scoped memory for tpu_custom_call.1']
    #allocation10 [shape = 'u8[65536]{0}', space=vmem, size = 0x10000, scoped, tag = 'input window, operand 9, single buffered']
    #allocation11 [shape = 'u8[53248]{0}', space=vmem, size = 0xd000, scoped, tag = 'output window, operand 0, single buffered']
    %16 = vsyncpa [#allocation3], 0
    %17 = vsyncpa [#allocation6], 0
    %18 = vsyncpa [#allocation9], 0
    %19 = vsyncpa [#allocation4], 0
    // Predicated region
    $region2: #{tpu_custom_call.1} parent=1 // pred_check
      _
    $region3: #{tpu_custom_call.1} parent=1 // pred_check_branch
      %21 = sbr.rel (0) target = $region5
    $region4: #{tpu_custom_call.1} parent=1 // pred_region
      %23 = vsyncadd [#allocation3], 0
      %s24 = sshll.u32 %s0, 4
      %s25 = int_to_ptr.hbm [resolvable:$true] %s24
      %s26 = sshll.u32 [#allocation2], 4
      %s27 = int_to_ptr.vmem [resolvable:$true] %s26
      %32 = dma.hbm_to_vmem [thread:$0]  %s25, 1664, %s27, [#allocation3], 128, 128, 8
    $region5: #{tpu_custom_call.1} parent=1 // pred_fallthru
      _
    // Predicated region
    $region6: #{tpu_custom_call.1} parent=1 // pred_check
      _
    $region7: #{tpu_custom_call.1} parent=1 // pred_check_branch
      %34 = sbr.rel (0) target = $region9
    $region8: #{tpu_custom_call.1} parent=1 // pred_region
      _
    $region9: #{tpu_custom_call.1} parent=1 // pred_fallthru
      _
    // Predicated region
    $region10: #{tpu_custom_call.1} parent=1 // pred_check
      _
    $region11: #{tpu_custom_call.1} parent=1 // pred_check_branch
      %36 = sbr.rel (0) target = $region13
    $region12: #{tpu_custom_call.1} parent=1 // pred_region
      %38 = vsyncadd [#allocation6], 0
      %s39 = sshll.u32 %s2, 4
      %s40 = int_to_ptr.hbm [resolvable:$true] %s39
      %s41 = sshll.u32 [#allocation5], 4
      %s42 = int_to_ptr.vmem [resolvable:$true] %s41
      %47 = dma.hbm_to_vmem [thread:$0]  %s40, 4096, %s42, [#allocation6], 128, 128, 8
    $region13: #{tpu_custom_call.1} parent=1 // pred_fallthru
      _
    // Predicated region
    $region14: #{tpu_custom_call.1} parent=1 // pred_check
      _
    $region15: #{tpu_custom_call.1} parent=1 // pred_check_branch
      %49 = sbr.rel (0) target = $region17
    $region16: #{tpu_custom_call.1} parent=1 // pred_region
      _
    $region17: #{tpu_custom_call.1} parent=1 // pred_fallthru
      _
    // Predicated region
    $region18: #{tpu_custom_call.1} parent=1 // pred_check
      _
    $region19: #{tpu_custom_call.1} parent=1 // pred_check_branch
      %51 = sbr.rel (0) target = $region21
    $region20: #{tpu_custom_call.1} parent=1 // pred_region
      _
    $region21: #{tpu_custom_call.1} parent=1 // pred_fallthru
      _
    // Predicated region
    $region22: #{tpu_custom_call.1} parent=1 // pred_check
      _
    $region23: #{tpu_custom_call.1} parent=1 // pred_check_branch
      %53 = sbr.rel (0) target = $region25
    $region24: #{tpu_custom_call.1} parent=1 // pred_region
      %55 = vsyncadd [#allocation6], 0
      %s56 = sshll.u32 %s5, 4
      %s57 = int_to_ptr.hbm [resolvable:$true] %s56
      %s58 = sshll.u32 [#allocation7], 4
      %s59 = int_to_ptr.vmem [resolvable:$true] %s58
      %64 = dma.hbm_to_vmem [thread:$0]  %s57, 12288, %s59, [#allocation6], 128, 128, 8
    $region25: #{tpu_custom_call.1} parent=1 // pred_fallthru
      _
    // Predicated region
    $region26: #{tpu_custom_call.1} parent=1 // pred_check
      _
    $region27: #{tpu_custom_call.1} parent=1 // pred_check_branch
      %66 = sbr.rel (0) target = $region29
    $region28: #{tpu_custom_call.1} parent=1 // pred_region
      _
    $region29: #{tpu_custom_call.1} parent=1 // pred_fallthru
      _
    // Predicated region
    $region30: #{tpu_custom_call.1} parent=1 // pred_check
      _
    $region31: #{tpu_custom_call.1} parent=1 // pred_check_branch
      %68 = sbr.rel (0) target = $region33
    $region32: #{tpu_custom_call.1} parent=1 // pred_region
      %70 = vsyncadd [#allocation9], 0
      %s71 = sshll.u32 %s7, 4
      %s72 = int_to_ptr.hbm [resolvable:$true] %s71
      %s73 = sshll.u32 [#allocation8], 4
      %s74 = int_to_ptr.vmem [resolvable:$true] %s73
      %79 = dma.hbm_to_vmem [thread:$0]  %s72, 12288, %s74, [#allocation9], 128, 128, 8
    $region33: #{tpu_custom_call.1} parent=1 // pred_fallthru
      _
    // Predicated region
    $region34: #{tpu_custom_call.1} parent=1 // pred_check
      _
    $region35: #{tpu_custom_call.1} parent=1 // pred_check_branch
      %81 = sbr.rel (0) target = $region37
    $region36: #{tpu_custom_call.1} parent=1 // pred_region
      _
    $region37: #{tpu_custom_call.1} parent=1 // pred_fallthru
      _
    // Predicated region
    $region38: #{tpu_custom_call.1} parent=1 // pred_check
      _
    $region39: #{tpu_custom_call.1} parent=1 // pred_check_branch
      %83 = sbr.rel (0) target = $region41
    $region40: #{tpu_custom_call.1} parent=1 // pred_region
      %85 = vsyncadd [#allocation9], 0
      %s86 = sshll.u32 %s9, 4
      %s87 = int_to_ptr.hbm [resolvable:$true] %s86
      %s88 = sshll.u32 [#allocation10], 4
      %s89 = int_to_ptr.vmem [resolvable:$true] %s88
      %94 = dma.hbm_to_vmem [thread:$0]  %s87, 2048, %s89, [#allocation9], 64, 64, 4
    $region41: #{tpu_custom_call.1} parent=1 // pred_fallthru
      _
    // Predicated region
    $region42: #{tpu_custom_call.1} parent=1 // pred_check
      _
    $region43: #{tpu_custom_call.1} parent=1 // pred_check_branch
      %96 = sbr.rel (0) target = $region45
    $region44: #{tpu_custom_call.1} parent=1 // pred_region
      _
    $region45: #{tpu_custom_call.1} parent=1 // pred_fallthru
      _
    // Predicated region
    $region46: #{tpu_custom_call.1} parent=1 // pred_check
      _
    $region47: #{tpu_custom_call.1} parent=1 // pred_check_branch
      %98 = sbr.rel (0) target = $region49
    $region48: #{tpu_custom_call.1} parent=1 // pred_region
      %100 = dma.done [#allocation3], 1664
    $region49: #{tpu_custom_call.1} parent=1 // pred_fallthru
      _
    // Predicated region
    $region50: #{tpu_custom_call.1} parent=1 // pred_check
      _
    $region51: #{tpu_custom_call.1} parent=1 // pred_check_branch
      %102 = sbr.rel (0) target = $region53
    $region52: #{tpu_custom_call.1} parent=1 // pred_region
      %104 = dma.done [#allocation6], 4096
    $region53: #{tpu_custom_call.1} parent=1 // pred_fallthru
      _
    // Predicated region
    $region54: #{tpu_custom_call.1} parent=1 // pred_check
      _
    $region55: #{tpu_custom_call.1} parent=1 // pred_check_branch
      %106 = sbr.rel (0) target = $region57
    $region56: #{tpu_custom_call.1} parent=1 // pred_region
      %108 = dma.done [#allocation6], 12288
    $region57: #{tpu_custom_call.1} parent=1 // pred_fallthru
      _
    // Predicated region
    $region58: #{tpu_custom_call.1} parent=1 // pred_check
      _
    $region59: #{tpu_custom_call.1} parent=1 // pred_check_branch
      %110 = sbr.rel (0) target = $region61
    $region60: #{tpu_custom_call.1} parent=1 // pred_region
      %112 = dma.done [#allocation9], 12288
    $region61: #{tpu_custom_call.1} parent=1 // pred_fallthru
      _
    // Predicated region
    $region62: #{tpu_custom_call.1} parent=1 // pred_check
      _
    $region63: #{tpu_custom_call.1} parent=1 // pred_check_branch
      %114 = sbr.rel (0) target = $region65
    $region64: #{tpu_custom_call.1} parent=1 // pred_region
      %116 = dma.done [#allocation9], 2048
    $region65: #{tpu_custom_call.1} parent=1 // pred_fallthru
      _
    %v118 = vld [vmem:[#allocation2] sm:$0xff]
    %v119 = vld [vmem:[#allocation2 + $0x8] sm:$0xff]
    %v120 = vld [vmem:[#allocation2 + $0x10] sm:$0xff]
    %v121 = vld [vmem:[#allocation2 + $0x18] sm:$0xff]
    %v122 = vld [vmem:[#allocation2 + $0x20] sm:$0xff]
    %v123 = vld [vmem:[#allocation2 + $0x28] sm:$0xff]
    %v124 = vld [vmem:[#allocation2 + $0x30] sm:$0xff]
    %v125 = vld [vmem:[#allocation2 + $0x38] sm:$0xff]
    %v126 = vld [vmem:[#allocation2 + $0x40] sm:$0xff]
    %v127 = vld [vmem:[#allocation2 + $0x48] sm:$0xff]
    %v128 = vld [vmem:[#allocation2 + $0x50] sm:$0xff]
    %v129 = vld [vmem:[#allocation2 + $0x58] sm:$0xff]
    %v130 = vld [vmem:[#allocation2 + $0x60] sm:$0xff]
    %v131 = vld [vmem:[#allocation5] sm:$0xff]
    %v132 = vld [vmem:[#allocation5 + $0x8] sm:$0xff]
    %v133 = vld [vmem:[#allocation5 + $0x10] sm:$0xff]
    %v134 = vld [vmem:[#allocation5 + $0x18] sm:$0xff]
    %v135 = vld [vmem:[#allocation5 + $0x20] sm:$0xff]
    %v136 = vld [vmem:[#allocation5 + $0x28] sm:$0xff]
    %v137 = vld [vmem:[#allocation5 + $0x30] sm:$0xff]
    %v138 = vld [vmem:[#allocation5 + $0x38] sm:$0xff]
    %v139 = vld [vmem:[#allocation5 + $0x40] sm:$0xff]
    %v140 = vld [vmem:[#allocation5 + $0x48] sm:$0xff]
    %v141 = vld [vmem:[#allocation5 + $0x50] sm:$0xff]
    %v142 = vld [vmem:[#allocation5 + $0x58] sm:$0xff]
    %v143 = vld [vmem:[#allocation5 + $0x60] sm:$0xff]
    %v144 = vld [vmem:[#allocation5 + $0x68] sm:$0xff]
    %v145 = vld [vmem:[#allocation5 + $0x70] sm:$0xff]
    %v146 = vld [vmem:[#allocation5 + $0x78] sm:$0xff]
    %v147 = vld [vmem:[#allocation5 + $0x80] sm:$0xff]
    %v148 = vld [vmem:[#allocation5 + $0x88] sm:$0xff]
    %v149 = vld [vmem:[#allocation5 + $0x90] sm:$0xff]
    %v150 = vld [vmem:[#allocation5 + $0x98] sm:$0xff]
    %v151 = vld [vmem:[#allocation5 + $0xa0] sm:$0xff]
    %v152 = vld [vmem:[#allocation5 + $0xa8] sm:$0xff]
    %v153 = vld [vmem:[#allocation5 + $0xb0] sm:$0xff]
    %v154 = vld [vmem:[#allocation5 + $0xb8] sm:$0xff]
    %v155 = vld [vmem:[#allocation5 + $0xc0] sm:$0xff]
    %v156 = vld [vmem:[#allocation5 + $0xc8] sm:$0xff]
    %v157 = vld [vmem:[#allocation5 + $0xd0] sm:$0xff]
    %v158 = vld [vmem:[#allocation5 + $0xd8] sm:$0xff]
    %v159 = vld [vmem:[#allocation5 + $0xe0] sm:$0xff]
    %v160 = vld [vmem:[#allocation5 + $0xe8] sm:$0xff]
    %v161 = vld [vmem:[#allocation5 + $0xf0] sm:$0xff]
    %v162 = vld [vmem:[#allocation5 + $0xf8] sm:$0xff]
    %v163 = vld [vmem:[%s1] sm:$0xf]
    %v164 = vld [vmem:[%s1 + $0x4] sm:$0xf]
    %v165 = vld [vmem:[%s1 + $0x8] sm:$0xf]
    %v166 = vld [vmem:[%s1 + $0xc] sm:$0xf]
    %v167 = vld [vmem:[%s1 + $0x10] sm:$0xf]
    %v168 = vld [vmem:[%s1 + $0x14] sm:$0xf]
    %v169 = vld [vmem:[%s1 + $0x18] sm:$0xf]
    %v170 = vld [vmem:[%s1 + $0x1c] sm:$0xf]
    %v171 = vld [vmem:[%s1 + $0x20] sm:$0xf]
    %v172 = vld [vmem:[%s1 + $0x24] sm:$0xf]
    %v173 = vld [vmem:[%s1 + $0x28] sm:$0xf]
    %v174 = vld [vmem:[%s1 + $0x2c] sm:$0xf]
    %v175 = vld [vmem:[%s1 + $0x30] sm:$0xf]
    %v176 = vld [vmem:[%s3] sm:$0xff]
    %v177 = vld [vmem:[%s3 + $0x8] sm:$0x11]
    %v191 = vunpack.c.l.b16 %v163
    %v192 = vunpack.c.l.b16 %v164
    %v193 = vunpack.c.l.b16 %v165
    %v194 = vunpack.c.l.b16 %v166
    %v195 = vunpack.c.l.b16 %v167
    %v196 = vunpack.c.l.b16 %v168
    %v197 = vunpack.c.l.b16 %v169
    %v198 = vunpack.c.l.b16 %v170
    %v199 = vunpack.c.l.b16 %v171
    %v200 = vunpack.c.l.b16 %v172
    %v201 = vunpack.c.l.b16 %v173
    %v202 = vunpack.c.l.b16 %v174
    %v203 = vunpack.c.l.b16 %v175
    %v204 = vpack.c.b16 %v192, %v191
    %v205 = vpack.c.b16 %v194, %v193
    %v206 = vpack.c.b16 %v196, %v195
    %v207 = vpack.c.b16 %v198, %v197
    %v208 = vpack.c.b16 %v200, %v199
    %v209 = vpack.c.b16 %v202, %v201
    %v210 = vpack.c.b16 %v203, %v203
    %v213 = vunpack.c.l.b16 %v176
    %v214 = vunpack.c.h.b16 %v176
    %v215 = vunpack.c.l.b16 %v177
    %v216 = vunpack.c.h.b16 %v177
    %v217 = vpack.c.b16 %v215, %v213
    %v218 = vpack.c.b16 %v216, %v214
    %vm219 = vcmask 80896
    %v221 = vsel %vm219, %v204, 0
    %v224 = vsel %vm219, %v205, 0
    %v227 = vsel %vm219, %v206, 0
    %v230 = vsel %vm219, %v207, 0
    %v233 = vsel %vm219, %v208, 0
    %v236 = vsel %vm219, %v209, 0
    %v239 = vsel %vm219, %v210, 0
    %vm241 = vcmask 1044480
    %v243 = vsel %vm241, %v217, 0
    %v246 = vsel %vm241, %v218, 0
    %248 = vmatpush.bf16.msra.mxu0 0
    %249 = vmatpush.bf16.msra.mxu0 0
    %250 = vmatpush.bf16.msra.mxu0 0
    %251 = vmatpush.bf16.msra.mxu0 0
    %252 = vmatpush.bf16.msra.mxu0 0
    %253 = vmatpush.bf16.msra.mxu0 0
    %254 = vmatpush.bf16.msra.mxu0 0
    %255 = vmatpush.bf16.msra.mxu0 %v243
    %256 = vmatmul.bf16.gmra.mxu0 %v221
    %v257 = vpop.f32.mrf.mxu0
    %v258 = vadd.f32 0.0, %v257
    %v259 = vpop.f32.mrf.mxu0
    %v260 = vadd.f32 0.0, %v259
    %261 = vmatmul.bf16.gmra.mxu0 %v224
    %v262 = vpop.f32.mrf.mxu0
    %v263 = vadd.f32 0.0, %v262
    %v264 = vpop.f32.mrf.mxu0
    %v265 = vadd.f32 0.0, %v264
    %266 = vmatmul.bf16.gmra.mxu0 %v227
    %v267 = vpop.f32.mrf.mxu0
    %v268 = vadd.f32 0.0, %v267
    %v269 = vpop.f32.mrf.mxu0
    %v270 = vadd.f32 0.0, %v269
    %271 = vmatmul.bf16.gmra.mxu0 %v230
    %v272 = vpop.f32.mrf.mxu0
    %v273 = vadd.f32 0.0, %v272
    %v274 = vpop.f32.mrf.mxu0
    %v275 = vadd.f32 0.0, %v274
    %276 = vmatmul.bf16.gmra.mxu0 %v233
    %v277 = vpop.f32.mrf.mxu0
    %v278 = vadd.f32 0.0, %v277
    %v279 = vpop.f32.mrf.mxu0
    %v280 = vadd.f32 0.0, %v279
    %281 = vmatmul.bf16.gmra.mxu0 %v236
    %v282 = vpop.f32.mrf.mxu0
    %v283 = vadd.f32 0.0, %v282
    %v284 = vpop.f32.mrf.mxu0
    %v285 = vadd.f32 0.0, %v284
    %286 = vmatmul.bf16.gmra.mxu0 %v239
    %v287 = vpop.f32.mrf.mxu0
    %v288 = vadd.f32 0.0, %v287
    %v289 = vpop.f32.mrf.mxu0
    %290 = vdwg.mxu0
    %291 = vmatpush.bf16.msra.mxu0 0
    %292 = vmatpush.bf16.msra.mxu0 0
    %293 = vmatpush.bf16.msra.mxu0 0
    %294 = vmatpush.bf16.msra.mxu0 0
    %295 = vmatpush.bf16.msra.mxu0 0
    %296 = vmatpush.bf16.msra.mxu0 0
    %297 = vmatpush.bf16.msra.mxu0 0
    %298 = vmatpush.bf16.msra.mxu0 %v246
    %299 = vmatmul.bf16.gmra.mxu0 %v221
    %v300 = vpop.f32.mrf.mxu0
    %v301 = vadd.f32 0.0, %v300
    %v302 = vpop.f32.mrf.mxu0
    %v303 = vadd.f32 0.0, %v302
    %304 = vmatmul.bf16.gmra.mxu0 %v224
    %v305 = vpop.f32.mrf.mxu0
    %v306 = vadd.f32 0.0, %v305
    %v307 = vpop.f32.mrf.mxu0
    %v308 = vadd.f32 0.0, %v307
    %309 = vmatmul.bf16.gmra.mxu0 %v227
    %v310 = vpop.f32.mrf.mxu0
    %v311 = vadd.f32 0.0, %v310
    %v312 = vpop.f32.mrf.mxu0
    %v313 = vadd.f32 0.0, %v312
    %314 = vmatmul.bf16.gmra.mxu0 %v230
    %v315 = vpop.f32.mrf.mxu0
    %v316 = vadd.f32 0.0, %v315
    %v317 = vpop.f32.mrf.mxu0
    %v318 = vadd.f32 0.0, %v317
    %319 = vmatmul.bf16.gmra.mxu0 %v233
    %v320 = vpop.f32.mrf.mxu0
    %v321 = vadd.f32 0.0, %v320
    %v322 = vpop.f32.mrf.mxu0
    %v323 = vadd.f32 0.0, %v322
    %324 = vmatmul.bf16.gmra.mxu0 %v236
    %v325 = vpop.f32.mrf.mxu0
    %v326 = vadd.f32 0.0, %v325
    %v327 = vpop.f32.mrf.mxu0
    %v328 = vadd.f32 0.0, %v327
    %329 = vmatmul.bf16.gmra.mxu0 %v239
    %v330 = vpop.f32.mrf.mxu0
    %v331 = vadd.f32 0.0, %v330
    %v332 = vpop.f32.mrf.mxu0
    %333 = vdwg.mxu0
    %v347 = vunpack.c.l.b16 %v118
    %v348 = vunpack.c.h.b16 %v118
    %v349 = vunpack.c.l.b16 %v119
    %v350 = vunpack.c.h.b16 %v119
    %v351 = vunpack.c.l.b16 %v120
    %v352 = vunpack.c.h.b16 %v120
    %v353 = vunpack.c.l.b16 %v121
    %v354 = vunpack.c.h.b16 %v121
    %v355 = vunpack.c.l.b16 %v122
    %v356 = vunpack.c.h.b16 %v122
    %v357 = vunpack.c.l.b16 %v123
    %v358 = vunpack.c.h.b16 %v123
    %v359 = vunpack.c.l.b16 %v124
    %v360 = vunpack.c.h.b16 %v124
    %v361 = vunpack.c.l.b16 %v125
    %v362 = vunpack.c.h.b16 %v125
    %v363 = vunpack.c.l.b16 %v126
    %v364 = vunpack.c.h.b16 %v126
    %v365 = vunpack.c.l.b16 %v127
    %v366 = vunpack.c.h.b16 %v127
    %v367 = vunpack.c.l.b16 %v128
    %v368 = vunpack.c.h.b16 %v128
    %v369 = vunpack.c.l.b16 %v129
    %v370 = vunpack.c.h.b16 %v129
    %v371 = vunpack.c.l.b16 %v130
    %v372 = vunpack.c.h.b16 %v130
    %v373 = vpack.c.b16 %v349, %v347
    %v374 = vpack.c.b16 %v350, %v348
    %v375 = vpack.c.b16 %v353, %v351
    %v376 = vpack.c.b16 %v354, %v352
    %v377 = vpack.c.b16 %v357, %v355
    %v378 = vpack.c.b16 %v358, %v356
    %v379 = vpack.c.b16 %v361, %v359
    %v380 = vpack.c.b16 %v362, %v360
    %v381 = vpack.c.b16 %v365, %v363
    %v382 = vpack.c.b16 %v366, %v364
    %v383 = vpack.c.b16 %v369, %v367
    %v384 = vpack.c.b16 %v370, %v368
    %v385 = vpack.c.b16 %v371, %v371
    %v386 = vpack.c.b16 %v372, %v372
    %v433 = vunpack.c.l.b16 %v131
    %v434 = vunpack.c.h.b16 %v131
    %v435 = vunpack.c.l.b16 %v132
    %v436 = vunpack.c.h.b16 %v132
    %v437 = vunpack.c.l.b16 %v133
    %v438 = vunpack.c.h.b16 %v133
    %v439 = vunpack.c.l.b16 %v134
    %v440 = vunpack.c.h.b16 %v134
    %v441 = vunpack.c.l.b16 %v135
    %v442 = vunpack.c.h.b16 %v135
    %v443 = vunpack.c.l.b16 %v136
    %v444 = vunpack.c.h.b16 %v136
    %v445 = vunpack.c.l.b16 %v137
    %v446 = vunpack.c.h.b16 %v137
    %v447 = vunpack.c.l.b16 %v138
    %v448 = vunpack.c.h.b16 %v138
    %v449 = vunpack.c.l.b16 %v139
    %v450 = vunpack.c.h.b16 %v139
    %v451 = vunpack.c.l.b16 %v140
    %v452 = vunpack.c.h.b16 %v140
    %v453 = vunpack.c.l.b16 %v141
    %v454 = vunpack.c.h.b16 %v141
    %v455 = vunpack.c.l.b16 %v142
    %v456 = vunpack.c.h.b16 %v142
    %v457 = vunpack.c.l.b16 %v143
    %v458 = vunpack.c.h.b16 %v143
    %v459 = vunpack.c.l.b16 %v144
    %v460 = vunpack.c.h.b16 %v144
    %v461 = vunpack.c.l.b16 %v145
    %v462 = vunpack.c.h.b16 %v145
    %v463 = vunpack.c.l.b16 %v146
    %v464 = vunpack.c.h.b16 %v146
    %v465 = vunpack.c.l.b16 %v147
    %v466 = vunpack.c.h.b16 %v147
    %v467 = vunpack.c.l.b16 %v148
    %v468 = vunpack.c.h.b16 %v148
    %v469 = vunpack.c.l.b16 %v149
    %v470 = vunpack.c.h.b16 %v149
    %v471 = vunpack.c.l.b16 %v150
    %v472 = vunpack.c.h.b16 %v150
    %v473 = vunpack.c.l.b16 %v151
    %v474 = vunpack.c.h.b16 %v151
    %v475 = vunpack.c.l.b16 %v152
    %v476 = vunpack.c.h.b16 %v152
    %v477 = vunpack.c.l.b16 %v153
    %v478 = vunpack.c.h.b16 %v153
    %v479 = vunpack.c.l.b16 %v154
    %v480 = vunpack.c.h.b16 %v154
    %v481 = vunpack.c.l.b16 %v155
    %v482 = vunpack.c.h.b16 %v155
    %v483 = vunpack.c.l.b16 %v156
    %v484 = vunpack.c.h.b16 %v156
    %v485 = vunpack.c.l.b16 %v157
    %v486 = vunpack.c.h.b16 %v157
    %v487 = vunpack.c.l.b16 %v158
    %v488 = vunpack.c.h.b16 %v158
    %v489 = vunpack.c.l.b16 %v159
    %v490 = vunpack.c.h.b16 %v159
    %v491 = vunpack.c.l.b16 %v160
    %v492 = vunpack.c.h.b16 %v160
    %v493 = vunpack.c.l.b16 %v161
    %v494 = vunpack.c.h.b16 %v161
    %v495 = vunpack.c.l.b16 %v162
    %v496 = vunpack.c.h.b16 %v162
    %v497 = vpack.c.b16 %v435, %v433
    %v498 = vpack.c.b16 %v436, %v434
    %v499 = vpack.c.b16 %v439, %v437
    %v500 = vpack.c.b16 %v440, %v438
    %v501 = vpack.c.b16 %v443, %v441
    %v502 = vpack.c.b16 %v444, %v442
    %v503 = vpack.c.b16 %v447, %v445
    %v504 = vpack.c.b16 %v448, %v446
    %v505 = vpack.c.b16 %v451, %v449
    %v506 = vpack.c.b16 %v452, %v450
    %v507 = vpack.c.b16 %v455, %v453
    %v508 = vpack.c.b16 %v456, %v454
    %v509 = vpack.c.b16 %v459, %v457
    %v510 = vpack.c.b16 %v460, %v458
    %v511 = vpack.c.b16 %v463, %v461
    %v512 = vpack.c.b16 %v464, %v462
    %v513 = vpack.c.b16 %v467, %v465
    %v514 = vpack.c.b16 %v468, %v466
    %v515 = vpack.c.b16 %v471, %v469
    %v516 = vpack.c.b16 %v472, %v470
    %v517 = vpack.c.b16 %v475, %v473
    %v518 = vpack.c.b16 %v476, %v474
    %v519 = vpack.c.b16 %v479, %v477
    %v520 = vpack.c.b16 %v480, %v478
    %v521 = vpack.c.b16 %v483, %v481
    %v522 = vpack.c.b16 %v484, %v482
    %v523 = vpack.c.b16 %v487, %v485
    %v524 = vpack.c.b16 %v488, %v486
    %v525 = vpack.c.b16 %v491, %v489
    %v526 = vpack.c.b16 %v492, %v490
    %v527 = vpack.c.b16 %v495, %v493
    %v528 = vpack.c.b16 %v496, %v494
    %561 = vmatpush.bf16.msra.mxu0 %v511
    %562 = vmatpush.bf16.msra.mxu0 %v509
    %563 = vmatpush.bf16.msra.mxu0 %v507
    %564 = vmatpush.bf16.msra.mxu0 %v505
    %565 = vmatpush.bf16.msra.mxu0 %v503
    %566 = vmatpush.bf16.msra.mxu0 %v501
    %567 = vmatpush.bf16.msra.mxu0 %v499
    %568 = vmatpush.bf16.msra.mxu0 %v497
    %569 = vmatmul.bf16.gmra.mxu0 %v373
    %v570 = vpop.f32.mrf.mxu0
    %v571 = vadd.f32 %v258, %v570
    %v572 = vpop.f32.mrf.mxu0
    %v573 = vadd.f32 %v260, %v572
    %574 = vmatmul.bf16.gmra.mxu0 %v375
    %v575 = vpop.f32.mrf.mxu0
    %v576 = vadd.f32 %v263, %v575
    %v577 = vpop.f32.mrf.mxu0
    %v578 = vadd.f32 %v265, %v577
    %579 = vmatmul.bf16.gmra.mxu0 %v377
    %v580 = vpop.f32.mrf.mxu0
    %v581 = vadd.f32 %v268, %v580
    %v582 = vpop.f32.mrf.mxu0
    %v583 = vadd.f32 %v270, %v582
    %584 = vmatmul.bf16.gmra.mxu0 %v379
    %v585 = vpop.f32.mrf.mxu0
    %v586 = vadd.f32 %v273, %v585
    %v587 = vpop.f32.mrf.mxu0
    %v588 = vadd.f32 %v275, %v587
    %589 = vmatmul.bf16.gmra.mxu0 %v381
    %v590 = vpop.f32.mrf.mxu0
    %v591 = vadd.f32 %v278, %v590
    %v592 = vpop.f32.mrf.mxu0
    %v593 = vadd.f32 %v280, %v592
    %594 = vmatmul.bf16.gmra.mxu0 %v383
    %v595 = vpop.f32.mrf.mxu0
    %v596 = vadd.f32 %v283, %v595
    %v597 = vpop.f32.mrf.mxu0
    %v598 = vadd.f32 %v285, %v597
    %599 = vmatmul.bf16.gmra.mxu0 %v385
    %v600 = vpop.f32.mrf.mxu0
    %v601 = vadd.f32 %v288, %v600
    %v602 = vpop.f32.mrf.mxu0
    %603 = vdwg.mxu0
    %604 = vmatpush.bf16.msra.mxu0 %v527
    %605 = vmatpush.bf16.msra.mxu0 %v525
    %606 = vmatpush.bf16.msra.mxu0 %v523
    %607 = vmatpush.bf16.msra.mxu0 %v521
    %608 = vmatpush.bf16.msra.mxu0 %v519
    %609 = vmatpush.bf16.msra.mxu0 %v517
    %610 = vmatpush.bf16.msra.mxu0 %v515
    %611 = vmatpush.bf16.msra.mxu0 %v513
    %612 = vmatmul.bf16.gmra.mxu0 %v374
    %v613 = vpop.f32.mrf.mxu0
    %v614 = vadd.f32 %v571, %v613
    %v615 = vpop.f32.mrf.mxu0
    %v616 = vadd.f32 %v573, %v615
    %617 = vmatmul.bf16.gmra.mxu0 %v376
    %v618 = vpop.f32.mrf.mxu0
    %v619 = vadd.f32 %v576, %v618
    %v620 = vpop.f32.mrf.mxu0
    %v621 = vadd.f32 %v578, %v620
    %622 = vmatmul.bf16.gmra.mxu0 %v378
    %v623 = vpop.f32.mrf.mxu0
    %v624 = vadd.f32 %v581, %v623
    %v625 = vpop.f32.mrf.mxu0
    %v626 = vadd.f32 %v583, %v625
    %627 = vmatmul.bf16.gmra.mxu0 %v380
    %v628 = vpop.f32.mrf.mxu0
    %v629 = vadd.f32 %v586, %v628
    %v630 = vpop.f32.mrf.mxu0
    %v631 = vadd.f32 %v588, %v630
    %632 = vmatmul.bf16.gmra.mxu0 %v382
    %v633 = vpop.f32.mrf.mxu0
    %v634 = vadd.f32 %v591, %v633
    %v635 = vpop.f32.mrf.mxu0
    %v636 = vadd.f32 %v593, %v635
    %637 = vmatmul.bf16.gmra.mxu0 %v384
    %v638 = vpop.f32.mrf.mxu0
    %v639 = vadd.f32 %v596, %v638
    %v640 = vpop.f32.mrf.mxu0
    %v641 = vadd.f32 %v598, %v640
    %642 = vmatmul.bf16.gmra.mxu0 %v386
    %v643 = vpop.f32.mrf.mxu0
    %v644 = vadd.f32 %v601, %v643
    %v645 = vpop.f32.mrf.mxu0
    %646 = vdwg.mxu0
    %647 = vmatpush.bf16.msra.mxu0 %v512
    %648 = vmatpush.bf16.msra.mxu0 %v510
    %649 = vmatpush.bf16.msra.mxu0 %v508
    %650 = vmatpush.bf16.msra.mxu0 %v506
    %651 = vmatpush.bf16.msra.mxu0 %v504
    %652 = vmatpush.bf16.msra.mxu0 %v502
    %653 = vmatpush.bf16.msra.mxu0 %v500
    %654 = vmatpush.bf16.msra.mxu0 %v498
    %655 = vmatmul.bf16.gmra.mxu0 %v373
    %v656 = vpop.f32.mrf.mxu0
    %v657 = vadd.f32 %v301, %v656
    %v658 = vpop.f32.mrf.mxu0
    %v659 = vadd.f32 %v303, %v658
    %660 = vmatmul.bf16.gmra.mxu0 %v375
    %v661 = vpop.f32.mrf.mxu0
    %v662 = vadd.f32 %v306, %v661
    %v663 = vpop.f32.mrf.mxu0
    %v664 = vadd.f32 %v308, %v663
    %665 = vmatmul.bf16.gmra.mxu0 %v377
    %v666 = vpop.f32.mrf.mxu0
    %v667 = vadd.f32 %v311, %v666
    %v668 = vpop.f32.mrf.mxu0
    %v669 = vadd.f32 %v313, %v668
    %670 = vmatmul.bf16.gmra.mxu0 %v379
    %v671 = vpop.f32.mrf.mxu0
    %v672 = vadd.f32 %v316, %v671
    %v673 = vpop.f32.mrf.mxu0
    %v674 = vadd.f32 %v318, %v673
    %675 = vmatmul.bf16.gmra.mxu0 %v381
    %v676 = vpop.f32.mrf.mxu0
    %v677 = vadd.f32 %v321, %v676
    %v678 = vpop.f32.mrf.mxu0
    %v679 = vadd.f32 %v323, %v678
    %680 = vmatmul.bf16.gmra.mxu0 %v383
    %v681 = vpop.f32.mrf.mxu0
    %v682 = vadd.f32 %v326, %v681
    %v683 = vpop.f32.mrf.mxu0
    %v684 = vadd.f32 %v328, %v683
    %685 = vmatmul.bf16.gmra.mxu0 %v385
    %v686 = vpop.f32.mrf.mxu0
    %v687 = vadd.f32 %v331, %v686
    %v688 = vpop.f32.mrf.mxu0
    %689 = vdwg.mxu0
    %690 = vmatpush.bf16.msra.mxu0 %v528
    %691 = vmatpush.bf16.msra.mxu0 %v526
    %692 = vmatpush.bf16.msra.mxu0 %v524
    %693 = vmatpush.bf16.msra.mxu0 %v522
    %694 = vmatpush.bf16.msra.mxu0 %v520
    %695 = vmatpush.bf16.msra.mxu0 %v518
    %696 = vmatpush.bf16.msra.mxu0 %v516
    %697 = vmatpush.bf16.msra.mxu0 %v514
    %698 = vmatmul.bf16.gmra.mxu0 %v374
    %v699 = vpop.f32.mrf.mxu0
    %v700 = vadd.f32 %v657, %v699
    %v701 = vpop.f32.mrf.mxu0
    %v702 = vadd.f32 %v659, %v701
    %703 = vmatmul.bf16.gmra.mxu0 %v376
    %v704 = vpop.f32.mrf.mxu0
    %v705 = vadd.f32 %v662, %v704
    %v706 = vpop.f32.mrf.mxu0
    %v707 = vadd.f32 %v664, %v706
    %708 = vmatmul.bf16.gmra.mxu0 %v378
    %v709 = vpop.f32.mrf.mxu0
    %v710 = vadd.f32 %v667, %v709
    %v711 = vpop.f32.mrf.mxu0
    %v712 = vadd.f32 %v669, %v711
    %713 = vmatmul.bf16.gmra.mxu0 %v380
    %v714 = vpop.f32.mrf.mxu0
    %v715 = vadd.f32 %v672, %v714
    %v716 = vpop.f32.mrf.mxu0
    %v717 = vadd.f32 %v674, %v716
    %718 = vmatmul.bf16.gmra.mxu0 %v382
    %v719 = vpop.f32.mrf.mxu0
    %v720 = vadd.f32 %v677, %v719
    %v721 = vpop.f32.mrf.mxu0
    %v722 = vadd.f32 %v679, %v721
    %723 = vmatmul.bf16.gmra.mxu0 %v384
    %v724 = vpop.f32.mrf.mxu0
    %v725 = vadd.f32 %v682, %v724
    %v726 = vpop.f32.mrf.mxu0
    %v727 = vadd.f32 %v684, %v726
    %728 = vmatmul.bf16.gmra.mxu0 %v386
    %v729 = vpop.f32.mrf.mxu0
    %v730 = vadd.f32 %v687, %v729
    %v731 = vpop.f32.mrf.mxu0
    %732 = vdwg.mxu0
    %v733 = vld [vmem:[%s4] sm:$0x3]
    %v735 = vperm.slane %v733, 0
    %v736 = vperm.slane %v733, 1
    %v739 = vadd.f32 %v614, %v735
    %v740 = vadd.f32 %v700, %v736
    %v741 = vadd.f32 %v616, %v735
    %v742 = vadd.f32 %v702, %v736
    %v743 = vadd.f32 %v619, %v735
    %v744 = vadd.f32 %v705, %v736
    %v745 = vadd.f32 %v621, %v735
    %v746 = vadd.f32 %v707, %v736
    %v747 = vadd.f32 %v624, %v735
    %v748 = vadd.f32 %v710, %v736
    %v749 = vadd.f32 %v626, %v735
    %v750 = vadd.f32 %v712, %v736
    %v751 = vadd.f32 %v629, %v735
    %v752 = vadd.f32 %v715, %v736
    %v753 = vadd.f32 %v631, %v735
    %v754 = vadd.f32 %v717, %v736
    %v755 = vadd.f32 %v634, %v735
    %v756 = vadd.f32 %v720, %v736
    %v757 = vadd.f32 %v636, %v735
    %v758 = vadd.f32 %v722, %v736
    %v759 = vadd.f32 %v639, %v735
    %v760 = vadd.f32 %v725, %v736
    %v761 = vadd.f32 %v641, %v735
    %v762 = vadd.f32 %v727, %v736
    %v763 = vadd.f32 %v644, %v735
    %v764 = vadd.f32 %v730, %v736
    %v765 = vpack.c.bf16 %v741, %v739
    %v766 = vpack.c.bf16 %v742, %v740
    %v767 = vpack.c.bf16 %v745, %v743
    %v768 = vpack.c.bf16 %v746, %v744
    %v769 = vpack.c.bf16 %v749, %v747
    %v770 = vpack.c.bf16 %v750, %v748
    %v771 = vpack.c.bf16 %v753, %v751
    %v772 = vpack.c.bf16 %v754, %v752
    %v773 = vpack.c.bf16 %v757, %v755
    %v774 = vpack.c.bf16 %v758, %v756
    %v775 = vpack.c.bf16 %v761, %v759
    %v776 = vpack.c.bf16 %v762, %v760
    %v777 = vpack.c.bf16 %v763, %v763
    %v778 = vpack.c.bf16 %v764, %v764
    %v779 = vld [vmem:[#allocation7] sm:$0xff]
    %v780 = vld [vmem:[#allocation7 + $0x8] sm:$0xff]
    %v781 = vld [vmem:[#allocation7 + $0x10] sm:$0xff]
    %v782 = vld [vmem:[#allocation7 + $0x18] sm:$0xff]
    %v783 = vld [vmem:[#allocation7 + $0x20] sm:$0xff]
    %v784 = vld [vmem:[#allocation7 + $0x28] sm:$0xff]
    %v785 = vld [vmem:[#allocation7 + $0x30] sm:$0xff]
    %v786 = vld [vmem:[#allocation7 + $0x38] sm:$0xff]
    %v787 = vld [vmem:[#allocation7 + $0x40] sm:$0xff]
    %v788 = vld [vmem:[#allocation7 + $0x48] sm:$0xff]
    %v789 = vld [vmem:[#allocation7 + $0x50] sm:$0xff]
    %v790 = vld [vmem:[#allocation7 + $0x58] sm:$0xff]
    %v791 = vld [vmem:[#allocation7 + $0x60] sm:$0xff]
    %v792 = vld [vmem:[#allocation7 + $0x68] sm:$0xff]
    %v793 = vld [vmem:[#allocation7 + $0x70] sm:$0xff]
    %v794 = vld [vmem:[#allocation7 + $0x78] sm:$0xff]
    %v795 = vld [vmem:[#allocation7 + $0x80] sm:$0xff]
    %v796 = vld [vmem:[#allocation7 + $0x88] sm:$0xff]
    %v797 = vld [vmem:[#allocation7 + $0x90] sm:$0xff]
    %v798 = vld [vmem:[#allocation7 + $0x98] sm:$0xff]
    %v799 = vld [vmem:[#allocation7 + $0xa0] sm:$0xff]
    %v800 = vld [vmem:[#allocation7 + $0xa8] sm:$0xff]
    %v801 = vld [vmem:[#allocation7 + $0xb0] sm:$0xff]
    %v802 = vld [vmem:[#allocation7 + $0xb8] sm:$0xff]
    %v803 = vld [vmem:[#allocation7 + $0xc0] sm:$0xff]
    %v804 = vld [vmem:[#allocation7 + $0xc8] sm:$0xff]
    %v805 = vld [vmem:[#allocation7 + $0xd0] sm:$0xff]
    %v806 = vld [vmem:[#allocation7 + $0xd8] sm:$0xff]
    %v807 = vld [vmem:[#allocation7 + $0xe0] sm:$0xff]
    %v808 = vld [vmem:[#allocation7 + $0xe8] sm:$0xff]
    %v809 = vld [vmem:[#allocation7 + $0xf0] sm:$0xff]
    %v810 = vld [vmem:[#allocation7 + $0xf8] sm:$0xff]
    %v811 = vld [vmem:[%s6] sm:$0x3]
    %v813 = vperm.slane %v811, 0
    %v814 = vperm.slane %v811, 1
    %v849 = vunpack.c.l.b16 %v779
    %v850 = vunpack.c.h.b16 %v779
    %v851 = vunpack.c.l.b16 %v780
    %v852 = vunpack.c.h.b16 %v780
    %v853 = vunpack.c.l.b16 %v781
    %v854 = vunpack.c.h.b16 %v781
    %v855 = vunpack.c.l.b16 %v782
    %v856 = vunpack.c.h.b16 %v782
    %v857 = vunpack.c.l.b16 %v783
    %v858 = vunpack.c.h.b16 %v783
    %v859 = vunpack.c.l.b16 %v784
    %v860 = vunpack.c.h.b16 %v784
    %v861 = vunpack.c.l.b16 %v785
    %v862 = vunpack.c.h.b16 %v785
    %v863 = vunpack.c.l.b16 %v786
    %v864 = vunpack.c.h.b16 %v786
    %v865 = vunpack.c.l.b16 %v787
    %v866 = vunpack.c.h.b16 %v787
    %v867 = vunpack.c.l.b16 %v788
    %v868 = vunpack.c.h.b16 %v788
    %v869 = vunpack.c.l.b16 %v789
    %v870 = vunpack.c.h.b16 %v789
    %v871 = vunpack.c.l.b16 %v790
    %v872 = vunpack.c.h.b16 %v790
    %v873 = vunpack.c.l.b16 %v791
    %v874 = vunpack.c.h.b16 %v791
    %v875 = vunpack.c.l.b16 %v792
    %v876 = vunpack.c.h.b16 %v792
    %v877 = vunpack.c.l.b16 %v793
    %v878 = vunpack.c.h.b16 %v793
    %v879 = vunpack.c.l.b16 %v794
    %v880 = vunpack.c.h.b16 %v794
    %v881 = vunpack.c.l.b16 %v795
    %v882 = vunpack.c.h.b16 %v795
    %v883 = vunpack.c.l.b16 %v796
    %v884 = vunpack.c.h.b16 %v796
    %v885 = vunpack.c.l.b16 %v797
    %v886 = vunpack.c.h.b16 %v797
    %v887 = vunpack.c.l.b16 %v798
    %v888 = vunpack.c.h.b16 %v798
    %v889 = vunpack.c.l.b16 %v799
    %v890 = vunpack.c.h.b16 %v799
    %v891 = vunpack.c.l.b16 %v800
    %v892 = vunpack.c.h.b16 %v800
    %v893 = vunpack.c.l.b16 %v801
    %v894 = vunpack.c.h.b16 %v801
    %v895 = vunpack.c.l.b16 %v802
    %v896 = vunpack.c.h.b16 %v802
    %v897 = vunpack.c.l.b16 %v803
    %v898 = vunpack.c.h.b16 %v803
    %v899 = vunpack.c.l.b16 %v804
    %v900 = vunpack.c.h.b16 %v804
    %v901 = vunpack.c.l.b16 %v805
    %v902 = vunpack.c.h.b16 %v805
    %v903 = vunpack.c.l.b16 %v806
    %v904 = vunpack.c.h.b16 %v806
    %v905 = vunpack.c.l.b16 %v807
    %v906 = vunpack.c.h.b16 %v807
    %v907 = vunpack.c.l.b16 %v808
    %v908 = vunpack.c.h.b16 %v808
    %v909 = vunpack.c.l.b16 %v809
    %v910 = vunpack.c.h.b16 %v809
    %v911 = vunpack.c.l.b16 %v810
    %v912 = vunpack.c.h.b16 %v810
    %v913 = vpack.c.b16 %v851, %v849
    %v914 = vpack.c.b16 %v852, %v850
    %v915 = vpack.c.b16 %v855, %v853
    %v916 = vpack.c.b16 %v856, %v854
    %v917 = vpack.c.b16 %v859, %v857
    %v918 = vpack.c.b16 %v860, %v858
    %v919 = vpack.c.b16 %v863, %v861
    %v920 = vpack.c.b16 %v864, %v862
    %v921 = vpack.c.b16 %v867, %v865
    %v922 = vpack.c.b16 %v868, %v866
    %v923 = vpack.c.b16 %v871, %v869
    %v924 = vpack.c.b16 %v872, %v870
    %v925 = vpack.c.b16 %v875, %v873
    %v926 = vpack.c.b16 %v876, %v874
    %v927 = vpack.c.b16 %v879, %v877
    %v928 = vpack.c.b16 %v880, %v878
    %v929 = vpack.c.b16 %v883, %v881
    %v930 = vpack.c.b16 %v884, %v882
    %v931 = vpack.c.b16 %v887, %v885
    %v932 = vpack.c.b16 %v888, %v886
    %v933 = vpack.c.b16 %v891, %v889
    %v934 = vpack.c.b16 %v892, %v890
    %v935 = vpack.c.b16 %v895, %v893
    %v936 = vpack.c.b16 %v896, %v894
    %v937 = vpack.c.b16 %v899, %v897
    %v938 = vpack.c.b16 %v900, %v898
    %v939 = vpack.c.b16 %v903, %v901
    %v940 = vpack.c.b16 %v904, %v902
    %v941 = vpack.c.b16 %v907, %v905
    %v942 = vpack.c.b16 %v908, %v906
    %v943 = vpack.c.b16 %v911, %v909
    %v944 = vpack.c.b16 %v912, %v910
    %977 = vmatpush.bf16.msra.mxu0 %v927
    %978 = vmatpush.bf16.msra.mxu0 %v925
    %979 = vmatpush.bf16.msra.mxu0 %v923
    %980 = vmatpush.bf16.msra.mxu0 %v921
    %981 = vmatpush.bf16.msra.mxu0 %v919
    %982 = vmatpush.bf16.msra.mxu0 %v917
    %983 = vmatpush.bf16.msra.mxu0 %v915
    %984 = vmatpush.bf16.msra.mxu0 %v913
    %985 = vmatmul.bf16.gmra.mxu0 %v765
    %v986 = vpop.f32.mrf.mxu0
    %v987 = vadd.f32 %v813, %v986
    %v988 = vpop.f32.mrf.mxu0
    %v989 = vadd.f32 %v813, %v988
    %990 = vmatmul.bf16.gmra.mxu0 %v767
    %v991 = vpop.f32.mrf.mxu0
    %v992 = vadd.f32 %v813, %v991
    %v993 = vpop.f32.mrf.mxu0
    %v994 = vadd.f32 %v813, %v993
    %995 = vmatmul.bf16.gmra.mxu0 %v769
    %v996 = vpop.f32.mrf.mxu0
    %v997 = vadd.f32 %v813, %v996
    %v998 = vpop.f32.mrf.mxu0
    %v999 = vadd.f32 %v813, %v998
    %1000 = vmatmul.bf16.gmra.mxu0 %v771
    %v1001 = vpop.f32.mrf.mxu0
    %v1002 = vadd.f32 %v813, %v1001
    %v1003 = vpop.f32.mrf.mxu0
    %v1004 = vadd.f32 %v813, %v1003
    %1005 = vmatmul.bf16.gmra.mxu0 %v773
    %v1006 = vpop.f32.mrf.mxu0
    %v1007 = vadd.f32 %v813, %v1006
    %v1008 = vpop.f32.mrf.mxu0
    %v1009 = vadd.f32 %v813, %v1008
    %1010 = vmatmul.bf16.gmra.mxu0 %v775
    %v1011 = vpop.f32.mrf.mxu0
    %v1012 = vadd.f32 %v813, %v1011
    %v1013 = vpop.f32.mrf.mxu0
    %v1014 = vadd.f32 %v813, %v1013
    %1015 = vmatmul.bf16.gmra.mxu0 %v777
    %v1016 = vpop.f32.mrf.mxu0
    %v1017 = vadd.f32 %v813, %v1016
    %v1018 = vpop.f32.mrf.mxu0
    %1019 = vdwg.mxu0
    %1020 = vmatpush.bf16.msra.mxu0 %v943
    %1021 = vmatpush.bf16.msra.mxu0 %v941
    %1022 = vmatpush.bf16.msra.mxu0 %v939
    %1023 = vmatpush.bf16.msra.mxu0 %v937
    %1024 = vmatpush.bf16.msra.mxu0 %v935
    %1025 = vmatpush.bf16.msra.mxu0 %v933
    %1026 = vmatpush.bf16.msra.mxu0 %v931
    %1027 = vmatpush.bf16.msra.mxu0 %v929
    %1028 = vmatmul.bf16.gmra.mxu0 %v766
    %v1029 = vpop.f32.mrf.mxu0
    %v1030 = vadd.f32 %v987, %v1029
    %v1031 = vpop.f32.mrf.mxu0
    %v1032 = vadd.f32 %v989, %v1031
    %1033 = vmatmul.bf16.gmra.mxu0 %v768
    %v1034 = vpop.f32.mrf.mxu0
    %v1035 = vadd.f32 %v992, %v1034
    %v1036 = vpop.f32.mrf.mxu0
    %v1037 = vadd.f32 %v994, %v1036
    %1038 = vmatmul.bf16.gmra.mxu0 %v770
    %v1039 = vpop.f32.mrf.mxu0
    %v1040 = vadd.f32 %v997, %v1039
    %v1041 = vpop.f32.mrf.mxu0
    %v1042 = vadd.f32 %v999, %v1041
    %1043 = vmatmul.bf16.gmra.mxu0 %v772
    %v1044 = vpop.f32.mrf.mxu0
    %v1045 = vadd.f32 %v1002, %v1044
    %v1046 = vpop.f32.mrf.mxu0
    %v1047 = vadd.f32 %v1004, %v1046
    %1048 = vmatmul.bf16.gmra.mxu0 %v774
    %v1049 = vpop.f32.mrf.mxu0
    %v1050 = vadd.f32 %v1007, %v1049
    %v1051 = vpop.f32.mrf.mxu0
    %v1052 = vadd.f32 %v1009, %v1051
    %1053 = vmatmul.bf16.gmra.mxu0 %v776
    %v1054 = vpop.f32.mrf.mxu0
    %v1055 = vadd.f32 %v1012, %v1054
    %v1056 = vpop.f32.mrf.mxu0
    %v1057 = vadd.f32 %v1014, %v1056
    %1058 = vmatmul.bf16.gmra.mxu0 %v778
    %v1059 = vpop.f32.mrf.mxu0
    %v1060 = vadd.f32 %v1017, %v1059
    %v1061 = vpop.f32.mrf.mxu0
    %1062 = vdwg.mxu0
    %1063 = vmatpush.bf16.msra.mxu0 %v928
    %1064 = vmatpush.bf16.msra.mxu0 %v926
    %1065 = vmatpush.bf16.msra.mxu0 %v924
    %1066 = vmatpush.bf16.msra.mxu0 %v922
    %1067 = vmatpush.bf16.msra.mxu0 %v920
    %1068 = vmatpush.bf16.msra.mxu0 %v918
    %1069 = vmatpush.bf16.msra.mxu0 %v916
    %1070 = vmatpush.bf16.msra.mxu0 %v914
    %1071 = vmatmul.bf16.gmra.mxu0 %v765
    %v1072 = vpop.f32.mrf.mxu0
    %v1073 = vadd.f32 %v814, %v1072
    %v1074 = vpop.f32.mrf.mxu0
    %v1075 = vadd.f32 %v814, %v1074
    %1076 = vmatmul.bf16.gmra.mxu0 %v767
    %v1077 = vpop.f32.mrf.mxu0
    %v1078 = vadd.f32 %v814, %v1077
    %v1079 = vpop.f32.mrf.mxu0
    %v1080 = vadd.f32 %v814, %v1079
    %1081 = vmatmul.bf16.gmra.mxu0 %v769
    %v1082 = vpop.f32.mrf.mxu0
    %v1083 = vadd.f32 %v814, %v1082
    %v1084 = vpop.f32.mrf.mxu0
    %v1085 = vadd.f32 %v814, %v1084
    %1086 = vmatmul.bf16.gmra.mxu0 %v771
    %v1087 = vpop.f32.mrf.mxu0
    %v1088 = vadd.f32 %v814, %v1087
    %v1089 = vpop.f32.mrf.mxu0
    %v1090 = vadd.f32 %v814, %v1089
    %1091 = vmatmul.bf16.gmra.mxu0 %v773
    %v1092 = vpop.f32.mrf.mxu0
    %v1093 = vadd.f32 %v814, %v1092
    %v1094 = vpop.f32.mrf.mxu0
    %v1095 = vadd.f32 %v814, %v1094
    %1096 = vmatmul.bf16.gmra.mxu0 %v775
    %v1097 = vpop.f32.mrf.mxu0
    %v1098 = vadd.f32 %v814, %v1097
    %v1099 = vpop.f32.mrf.mxu0
    %v1100 = vadd.f32 %v814, %v1099
    %1101 = vmatmul.bf16.gmra.mxu0 %v777
    %v1102 = vpop.f32.mrf.mxu0
    %v1103 = vadd.f32 %v814, %v1102
    %v1104 = vpop.f32.mrf.mxu0
    %1105 = vdwg.mxu0
    %1106 = vmatpush.bf16.msra.mxu0 %v944
    %1107 = vmatpush.bf16.msra.mxu0 %v942
    %1108 = vmatpush.bf16.msra.mxu0 %v940
    %1109 = vmatpush.bf16.msra.mxu0 %v938
    %1110 = vmatpush.bf16.msra.mxu0 %v936
    %1111 = vmatpush.bf16.msra.mxu0 %v934
    %1112 = vmatpush.bf16.msra.mxu0 %v932
    %1113 = vmatpush.bf16.msra.mxu0 %v930
    %1114 = vmatmul.bf16.gmra.mxu0 %v766
    %v1115 = vpop.f32.mrf.mxu0
    %v1116 = vadd.f32 %v1073, %v1115
    %v1117 = vpop.f32.mrf.mxu0
    %v1118 = vadd.f32 %v1075, %v1117
    %1119 = vmatmul.bf16.gmra.mxu0 %v768
    %v1120 = vpop.f32.mrf.mxu0
    %v1121 = vadd.f32 %v1078, %v1120
    %v1122 = vpop.f32.mrf.mxu0
    %v1123 = vadd.f32 %v1080, %v1122
    %1124 = vmatmul.bf16.gmra.mxu0 %v770
    %v1125 = vpop.f32.mrf.mxu0
    %v1126 = vadd.f32 %v1083, %v1125
    %v1127 = vpop.f32.mrf.mxu0
    %v1128 = vadd.f32 %v1085, %v1127
    %1129 = vmatmul.bf16.gmra.mxu0 %v772
    %v1130 = vpop.f32.mrf.mxu0
    %v1131 = vadd.f32 %v1088, %v1130
    %v1132 = vpop.f32.mrf.mxu0
    %v1133 = vadd.f32 %v1090, %v1132
    %1134 = vmatmul.bf16.gmra.mxu0 %v774
    %v1135 = vpop.f32.mrf.mxu0
    %v1136 = vadd.f32 %v1093, %v1135
    %v1137 = vpop.f32.mrf.mxu0
    %v1138 = vadd.f32 %v1095, %v1137
    %1139 = vmatmul.bf16.gmra.mxu0 %v776
    %v1140 = vpop.f32.mrf.mxu0
    %v1141 = vadd.f32 %v1098, %v1140
    %v1142 = vpop.f32.mrf.mxu0
    %v1143 = vadd.f32 %v1100, %v1142
    %1144 = vmatmul.bf16.gmra.mxu0 %v778
    %v1145 = vpop.f32.mrf.mxu0
    %v1146 = vadd.f32 %v1103, %v1145
    %v1147 = vpop.f32.mrf.mxu0
    %1148 = vdwg.mxu0
    %v1149 = vmax.f32 %v1030, 0.0
    %v1150 = vmax.f32 %v1116, 0.0
    %v1151 = vmax.f32 %v1032, 0.0
    %v1152 = vmax.f32 %v1118, 0.0
    %v1153 = vmax.f32 %v1035, 0.0
    %v1154 = vmax.f32 %v1121, 0.0
    %v1155 = vmax.f32 %v1037, 0.0
    %v1156 = vmax.f32 %v1123, 0.0
    %v1157 = vmax.f32 %v1040, 0.0
    %v1158 = vmax.f32 %v1126, 0.0
    %v1159 = vmax.f32 %v1042, 0.0
    %v1160 = vmax.f32 %v1128, 0.0
    %v1161 = vmax.f32 %v1045, 0.0
    %v1162 = vmax.f32 %v1131, 0.0
    %v1163 = vmax.f32 %v1047, 0.0
    %v1164 = vmax.f32 %v1133, 0.0
    %v1165 = vmax.f32 %v1050, 0.0
    %v1166 = vmax.f32 %v1136, 0.0
    %v1167 = vmax.f32 %v1052, 0.0
    %v1168 = vmax.f32 %v1138, 0.0
    %v1169 = vmax.f32 %v1055, 0.0
    %v1170 = vmax.f32 %v1141, 0.0
    %v1171 = vmax.f32 %v1057, 0.0
    %v1172 = vmax.f32 %v1143, 0.0
    %v1173 = vmax.f32 %v1060, 0.0
    %v1174 = vmax.f32 %v1146, 0.0
    %v1175 = vpack.c.bf16 %v1151, %v1149
    %v1176 = vpack.c.bf16 %v1152, %v1150
    %v1177 = vpack.c.bf16 %v1155, %v1153
    %v1178 = vpack.c.bf16 %v1156, %v1154
    %v1179 = vpack.c.bf16 %v1159, %v1157
    %v1180 = vpack.c.bf16 %v1160, %v1158
    %v1181 = vpack.c.bf16 %v1163, %v1161
    %v1182 = vpack.c.bf16 %v1164, %v1162
    %v1183 = vpack.c.bf16 %v1167, %v1165
    %v1184 = vpack.c.bf16 %v1168, %v1166
    %v1185 = vpack.c.bf16 %v1171, %v1169
    %v1186 = vpack.c.bf16 %v1172, %v1170
    %v1187 = vpack.c.bf16 %v1173, %v1173
    %v1188 = vpack.c.bf16 %v1174, %v1174
    %v1189 = vld [vmem:[#allocation8] sm:$0xff]
    %v1190 = vld [vmem:[#allocation8 + $0x8] sm:$0xff]
    %v1191 = vld [vmem:[#allocation8 + $0x10] sm:$0xff]
    %v1192 = vld [vmem:[#allocation8 + $0x18] sm:$0xff]
    %v1193 = vld [vmem:[#allocation8 + $0x20] sm:$0xff]
    %v1194 = vld [vmem:[#allocation8 + $0x28] sm:$0xff]
    %v1195 = vld [vmem:[#allocation8 + $0x30] sm:$0xff]
    %v1196 = vld [vmem:[#allocation8 + $0x38] sm:$0xff]
    %v1197 = vld [vmem:[#allocation8 + $0x40] sm:$0xff]
    %v1198 = vld [vmem:[#allocation8 + $0x48] sm:$0xff]
    %v1199 = vld [vmem:[#allocation8 + $0x50] sm:$0xff]
    %v1200 = vld [vmem:[#allocation8 + $0x58] sm:$0xff]
    %v1201 = vld [vmem:[#allocation8 + $0x60] sm:$0xff]
    %v1202 = vld [vmem:[#allocation8 + $0x68] sm:$0xff]
    %v1203 = vld [vmem:[#allocation8 + $0x70] sm:$0xff]
    %v1204 = vld [vmem:[#allocation8 + $0x78] sm:$0xff]
    %v1205 = vld [vmem:[#allocation8 + $0x80] sm:$0xff]
    %v1206 = vld [vmem:[#allocation8 + $0x88] sm:$0xff]
    %v1207 = vld [vmem:[#allocation8 + $0x90] sm:$0xff]
    %v1208 = vld [vmem:[#allocation8 + $0x98] sm:$0xff]
    %v1209 = vld [vmem:[#allocation8 + $0xa0] sm:$0xff]
    %v1210 = vld [vmem:[#allocation8 + $0xa8] sm:$0xff]
    %v1211 = vld [vmem:[#allocation8 + $0xb0] sm:$0xff]
    %v1212 = vld [vmem:[#allocation8 + $0xb8] sm:$0xff]
    %v1213 = vld [vmem:[#allocation8 + $0xc0] sm:$0xff]
    %v1214 = vld [vmem:[#allocation8 + $0xc8] sm:$0xff]
    %v1215 = vld [vmem:[#allocation8 + $0xd0] sm:$0xff]
    %v1216 = vld [vmem:[#allocation8 + $0xd8] sm:$0xff]
    %v1217 = vld [vmem:[#allocation8 + $0xe0] sm:$0xff]
    %v1218 = vld [vmem:[#allocation8 + $0xe8] sm:$0xff]
    %v1219 = vld [vmem:[#allocation8 + $0xf0] sm:$0xff]
    %v1220 = vld [vmem:[#allocation8 + $0xf8] sm:$0xff]
    %v1221 = vld [vmem:[%s8] sm:$0x3]
    %v1223 = vperm.slane %v1221, 0
    %v1224 = vperm.slane %v1221, 1
    %v1259 = vunpack.c.l.b16 %v1189
    %v1260 = vunpack.c.h.b16 %v1189
    %v1261 = vunpack.c.l.b16 %v1190
    %v1262 = vunpack.c.h.b16 %v1190
    %v1263 = vunpack.c.l.b16 %v1191
    %v1264 = vunpack.c.h.b16 %v1191
    %v1265 = vunpack.c.l.b16 %v1192
    %v1266 = vunpack.c.h.b16 %v1192
    %v1267 = vunpack.c.l.b16 %v1193
    %v1268 = vunpack.c.h.b16 %v1193
    %v1269 = vunpack.c.l.b16 %v1194
    %v1270 = vunpack.c.h.b16 %v1194
    %v1271 = vunpack.c.l.b16 %v1195
    %v1272 = vunpack.c.h.b16 %v1195
    %v1273 = vunpack.c.l.b16 %v1196
    %v1274 = vunpack.c.h.b16 %v1196
    %v1275 = vunpack.c.l.b16 %v1197
    %v1276 = vunpack.c.h.b16 %v1197
    %v1277 = vunpack.c.l.b16 %v1198
    %v1278 = vunpack.c.h.b16 %v1198
    %v1279 = vunpack.c.l.b16 %v1199
    %v1280 = vunpack.c.h.b16 %v1199
    %v1281 = vunpack.c.l.b16 %v1200
    %v1282 = vunpack.c.h.b16 %v1200
    %v1283 = vunpack.c.l.b16 %v1201
    %v1284 = vunpack.c.h.b16 %v1201
    %v1285 = vunpack.c.l.b16 %v1202
    %v1286 = vunpack.c.h.b16 %v1202
    %v1287 = vunpack.c.l.b16 %v1203
    %v1288 = vunpack.c.h.b16 %v1203
    %v1289 = vunpack.c.l.b16 %v1204
    %v1290 = vunpack.c.h.b16 %v1204
    %v1291 = vunpack.c.l.b16 %v1205
    %v1292 = vunpack.c.h.b16 %v1205
    %v1293 = vunpack.c.l.b16 %v1206
    %v1294 = vunpack.c.h.b16 %v1206
    %v1295 = vunpack.c.l.b16 %v1207
    %v1296 = vunpack.c.h.b16 %v1207
    %v1297 = vunpack.c.l.b16 %v1208
    %v1298 = vunpack.c.h.b16 %v1208
    %v1299 = vunpack.c.l.b16 %v1209
    %v1300 = vunpack.c.h.b16 %v1209
    %v1301 = vunpack.c.l.b16 %v1210
    %v1302 = vunpack.c.h.b16 %v1210
    %v1303 = vunpack.c.l.b16 %v1211
    %v1304 = vunpack.c.h.b16 %v1211
    %v1305 = vunpack.c.l.b16 %v1212
    %v1306 = vunpack.c.h.b16 %v1212
    %v1307 = vunpack.c.l.b16 %v1213
    %v1308 = vunpack.c.h.b16 %v1213
    %v1309 = vunpack.c.l.b16 %v1214
    %v1310 = vunpack.c.h.b16 %v1214
    %v1311 = vunpack.c.l.b16 %v1215
    %v1312 = vunpack.c.h.b16 %v1215
    %v1313 = vunpack.c.l.b16 %v1216
    %v1314 = vunpack.c.h.b16 %v1216
    %v1315 = vunpack.c.l.b16 %v1217
    %v1316 = vunpack.c.h.b16 %v1217
    %v1317 = vunpack.c.l.b16 %v1218
    %v1318 = vunpack.c.h.b16 %v1218
    %v1319 = vunpack.c.l.b16 %v1219
    %v1320 = vunpack.c.h.b16 %v1219
    %v1321 = vunpack.c.l.b16 %v1220
    %v1322 = vunpack.c.h.b16 %v1220
    %v1323 = vpack.c.b16 %v1261, %v1259
    %v1324 = vpack.c.b16 %v1262, %v1260
    %v1325 = vpack.c.b16 %v1265, %v1263
    %v1326 = vpack.c.b16 %v1266, %v1264
    %v1327 = vpack.c.b16 %v1269, %v1267
    %v1328 = vpack.c.b16 %v1270, %v1268
    %v1329 = vpack.c.b16 %v1273, %v1271
    %v1330 = vpack.c.b16 %v1274, %v1272
    %v1331 = vpack.c.b16 %v1277, %v1275
    %v1332 = vpack.c.b16 %v1278, %v1276
    %v1333 = vpack.c.b16 %v1281, %v1279
    %v1334 = vpack.c.b16 %v1282, %v1280
    %v1335 = vpack.c.b16 %v1285, %v1283
    %v1336 = vpack.c.b16 %v1286, %v1284
    %v1337 = vpack.c.b16 %v1289, %v1287
    %v1338 = vpack.c.b16 %v1290, %v1288
    %v1339 = vpack.c.b16 %v1293, %v1291
    %v1340 = vpack.c.b16 %v1294, %v1292
    %v1341 = vpack.c.b16 %v1297, %v1295
    %v1342 = vpack.c.b16 %v1298, %v1296
    %v1343 = vpack.c.b16 %v1301, %v1299
    %v1344 = vpack.c.b16 %v1302, %v1300
    %v1345 = vpack.c.b16 %v1305, %v1303
    %v1346 = vpack.c.b16 %v1306, %v1304
    %v1347 = vpack.c.b16 %v1309, %v1307
    %v1348 = vpack.c.b16 %v1310, %v1308
    %v1349 = vpack.c.b16 %v1313, %v1311
    %v1350 = vpack.c.b16 %v1314, %v1312
    %v1351 = vpack.c.b16 %v1317, %v1315
    %v1352 = vpack.c.b16 %v1318, %v1316
    %v1353 = vpack.c.b16 %v1321, %v1319
    %v1354 = vpack.c.b16 %v1322, %v1320
    %1387 = vmatpush.bf16.msra.mxu0 %v1337
    %1388 = vmatpush.bf16.msra.mxu0 %v1335
    %1389 = vmatpush.bf16.msra.mxu0 %v1333
    %1390 = vmatpush.bf16.msra.mxu0 %v1331
    %1391 = vmatpush.bf16.msra.mxu0 %v1329
    %1392 = vmatpush.bf16.msra.mxu0 %v1327
    %1393 = vmatpush.bf16.msra.mxu0 %v1325
    %1394 = vmatpush.bf16.msra.mxu0 %v1323
    %1395 = vmatmul.bf16.gmra.mxu0 %v1175
    %v1396 = vpop.f32.mrf.mxu0
    %v1397 = vadd.f32 %v1223, %v1396
    %v1398 = vpop.f32.mrf.mxu0
    %v1399 = vadd.f32 %v1223, %v1398
    %1400 = vmatmul.bf16.gmra.mxu0 %v1177
    %v1401 = vpop.f32.mrf.mxu0
    %v1402 = vadd.f32 %v1223, %v1401
    %v1403 = vpop.f32.mrf.mxu0
    %v1404 = vadd.f32 %v1223, %v1403
    %1405 = vmatmul.bf16.gmra.mxu0 %v1179
    %v1406 = vpop.f32.mrf.mxu0
    %v1407 = vadd.f32 %v1223, %v1406
    %v1408 = vpop.f32.mrf.mxu0
    %v1409 = vadd.f32 %v1223, %v1408
    %1410 = vmatmul.bf16.gmra.mxu0 %v1181
    %v1411 = vpop.f32.mrf.mxu0
    %v1412 = vadd.f32 %v1223, %v1411
    %v1413 = vpop.f32.mrf.mxu0
    %v1414 = vadd.f32 %v1223, %v1413
    %1415 = vmatmul.bf16.gmra.mxu0 %v1183
    %v1416 = vpop.f32.mrf.mxu0
    %v1417 = vadd.f32 %v1223, %v1416
    %v1418 = vpop.f32.mrf.mxu0
    %v1419 = vadd.f32 %v1223, %v1418
    %1420 = vmatmul.bf16.gmra.mxu0 %v1185
    %v1421 = vpop.f32.mrf.mxu0
    %v1422 = vadd.f32 %v1223, %v1421
    %v1423 = vpop.f32.mrf.mxu0
    %v1424 = vadd.f32 %v1223, %v1423
    %1425 = vmatmul.bf16.gmra.mxu0 %v1187
    %v1426 = vpop.f32.mrf.mxu0
    %v1427 = vadd.f32 %v1223, %v1426
    %v1428 = vpop.f32.mrf.mxu0
    %1429 = vdwg.mxu0
    %1430 = vmatpush.bf16.msra.mxu0 %v1353
    %1431 = vmatpush.bf16.msra.mxu0 %v1351
    %1432 = vmatpush.bf16.msra.mxu0 %v1349
    %1433 = vmatpush.bf16.msra.mxu0 %v1347
    %1434 = vmatpush.bf16.msra.mxu0 %v1345
    %1435 = vmatpush.bf16.msra.mxu0 %v1343
    %1436 = vmatpush.bf16.msra.mxu0 %v1341
    %1437 = vmatpush.bf16.msra.mxu0 %v1339
    %1438 = vmatmul.bf16.gmra.mxu0 %v1176
    %v1439 = vpop.f32.mrf.mxu0
    %v1440 = vadd.f32 %v1397, %v1439
    %v1441 = vpop.f32.mrf.mxu0
    %v1442 = vadd.f32 %v1399, %v1441
    %1443 = vmatmul.bf16.gmra.mxu0 %v1178
    %v1444 = vpop.f32.mrf.mxu0
    %v1445 = vadd.f32 %v1402, %v1444
    %v1446 = vpop.f32.mrf.mxu0
    %v1447 = vadd.f32 %v1404, %v1446
    %1448 = vmatmul.bf16.gmra.mxu0 %v1180
    %v1449 = vpop.f32.mrf.mxu0
    %v1450 = vadd.f32 %v1407, %v1449
    %v1451 = vpop.f32.mrf.mxu0
    %v1452 = vadd.f32 %v1409, %v1451
    %1453 = vmatmul.bf16.gmra.mxu0 %v1182
    %v1454 = vpop.f32.mrf.mxu0
    %v1455 = vadd.f32 %v1412, %v1454
    %v1456 = vpop.f32.mrf.mxu0
    %v1457 = vadd.f32 %v1414, %v1456
    %1458 = vmatmul.bf16.gmra.mxu0 %v1184
    %v1459 = vpop.f32.mrf.mxu0
    %v1460 = vadd.f32 %v1417, %v1459
    %v1461 = vpop.f32.mrf.mxu0
    %v1462 = vadd.f32 %v1419, %v1461
    %1463 = vmatmul.bf16.gmra.mxu0 %v1186
    %v1464 = vpop.f32.mrf.mxu0
    %v1465 = vadd.f32 %v1422, %v1464
    %v1466 = vpop.f32.mrf.mxu0
    %v1467 = vadd.f32 %v1424, %v1466
    %1468 = vmatmul.bf16.gmra.mxu0 %v1188
    %v1469 = vpop.f32.mrf.mxu0
    %v1470 = vadd.f32 %v1427, %v1469
    %v1471 = vpop.f32.mrf.mxu0
    %1472 = vdwg.mxu0
    %1473 = vmatpush.bf16.msra.mxu0 %v1338
    %1474 = vmatpush.bf16.msra.mxu0 %v1336
    %1475 = vmatpush.bf16.msra.mxu0 %v1334
    %1476 = vmatpush.bf16.msra.mxu0 %v1332
    %1477 = vmatpush.bf16.msra.mxu0 %v1330
    %1478 = vmatpush.bf16.msra.mxu0 %v1328
    %1479 = vmatpush.bf16.msra.mxu0 %v1326
    %1480 = vmatpush.bf16.msra.mxu0 %v1324
    %1481 = vmatmul.bf16.gmra.mxu0 %v1175
    %v1482 = vpop.f32.mrf.mxu0
    %v1483 = vadd.f32 %v1224, %v1482
    %v1484 = vpop.f32.mrf.mxu0
    %v1485 = vadd.f32 %v1224, %v1484
    %1486 = vmatmul.bf16.gmra.mxu0 %v1177
    %v1487 = vpop.f32.mrf.mxu0
    %v1488 = vadd.f32 %v1224, %v1487
    %v1489 = vpop.f32.mrf.mxu0
    %v1490 = vadd.f32 %v1224, %v1489
    %1491 = vmatmul.bf16.gmra.mxu0 %v1179
    %v1492 = vpop.f32.mrf.mxu0
    %v1493 = vadd.f32 %v1224, %v1492
    %v1494 = vpop.f32.mrf.mxu0
    %v1495 = vadd.f32 %v1224, %v1494
    %1496 = vmatmul.bf16.gmra.mxu0 %v1181
    %v1497 = vpop.f32.mrf.mxu0
    %v1498 = vadd.f32 %v1224, %v1497
    %v1499 = vpop.f32.mrf.mxu0
    %v1500 = vadd.f32 %v1224, %v1499
    %1501 = vmatmul.bf16.gmra.mxu0 %v1183
    %v1502 = vpop.f32.mrf.mxu0
    %v1503 = vadd.f32 %v1224, %v1502
    %v1504 = vpop.f32.mrf.mxu0
    %v1505 = vadd.f32 %v1224, %v1504
    %1506 = vmatmul.bf16.gmra.mxu0 %v1185
    %v1507 = vpop.f32.mrf.mxu0
    %v1508 = vadd.f32 %v1224, %v1507
    %v1509 = vpop.f32.mrf.mxu0
    %v1510 = vadd.f32 %v1224, %v1509
    %1511 = vmatmul.bf16.gmra.mxu0 %v1187
    %v1512 = vpop.f32.mrf.mxu0
    %v1513 = vadd.f32 %v1224, %v1512
    %v1514 = vpop.f32.mrf.mxu0
    %1515 = vdwg.mxu0
    %1516 = vmatpush.bf16.msra.mxu0 %v1354
    %1517 = vmatpush.bf16.msra.mxu0 %v1352
    %1518 = vmatpush.bf16.msra.mxu0 %v1350
    %1519 = vmatpush.bf16.msra.mxu0 %v1348
    %1520 = vmatpush.bf16.msra.mxu0 %v1346
    %1521 = vmatpush.bf16.msra.mxu0 %v1344
    %1522 = vmatpush.bf16.msra.mxu0 %v1342
    %1523 = vmatpush.bf16.msra.mxu0 %v1340
    %1524 = vmatmul.bf16.gmra.mxu0 %v1176
    %v1525 = vpop.f32.mrf.mxu0
    %v1526 = vadd.f32 %v1483, %v1525
    %v1527 = vpop.f32.mrf.mxu0
    %v1528 = vadd.f32 %v1485, %v1527
    %1529 = vmatmul.bf16.gmra.mxu0 %v1178
    %v1530 = vpop.f32.mrf.mxu0
    %v1531 = vadd.f32 %v1488, %v1530
    %v1532 = vpop.f32.mrf.mxu0
    %v1533 = vadd.f32 %v1490, %v1532
    %1534 = vmatmul.bf16.gmra.mxu0 %v1180
    %v1535 = vpop.f32.mrf.mxu0
    %v1536 = vadd.f32 %v1493, %v1535
    %v1537 = vpop.f32.mrf.mxu0
    %v1538 = vadd.f32 %v1495, %v1537
    %1539 = vmatmul.bf16.gmra.mxu0 %v1182
    %v1540 = vpop.f32.mrf.mxu0
    %v1541 = vadd.f32 %v1498, %v1540
    %v1542 = vpop.f32.mrf.mxu0
    %v1543 = vadd.f32 %v1500, %v1542
    %1544 = vmatmul.bf16.gmra.mxu0 %v1184
    %v1545 = vpop.f32.mrf.mxu0
    %v1546 = vadd.f32 %v1503, %v1545
    %v1547 = vpop.f32.mrf.mxu0
    %v1548 = vadd.f32 %v1505, %v1547
    %1549 = vmatmul.bf16.gmra.mxu0 %v1186
    %v1550 = vpop.f32.mrf.mxu0
    %v1551 = vadd.f32 %v1508, %v1550
    %v1552 = vpop.f32.mrf.mxu0
    %v1553 = vadd.f32 %v1510, %v1552
    %1554 = vmatmul.bf16.gmra.mxu0 %v1188
    %v1555 = vpop.f32.mrf.mxu0
    %v1556 = vadd.f32 %v1513, %v1555
    %v1557 = vpop.f32.mrf.mxu0
    %1558 = vdwg.mxu0
    %v1559 = vmax.f32 %v1440, 0.0
    %v1560 = vmax.f32 %v1526, 0.0
    %v1561 = vmax.f32 %v1442, 0.0
    %v1562 = vmax.f32 %v1528, 0.0
    %v1563 = vmax.f32 %v1445, 0.0
    %v1564 = vmax.f32 %v1531, 0.0
    %v1565 = vmax.f32 %v1447, 0.0
    %v1566 = vmax.f32 %v1533, 0.0
    %v1567 = vmax.f32 %v1450, 0.0
    %v1568 = vmax.f32 %v1536, 0.0
    %v1569 = vmax.f32 %v1452, 0.0
    %v1570 = vmax.f32 %v1538, 0.0
    %v1571 = vmax.f32 %v1455, 0.0
    %v1572 = vmax.f32 %v1541, 0.0
    %v1573 = vmax.f32 %v1457, 0.0
    %v1574 = vmax.f32 %v1543, 0.0
    %v1575 = vmax.f32 %v1460, 0.0
    %v1576 = vmax.f32 %v1546, 0.0
    %v1577 = vmax.f32 %v1462, 0.0
    %v1578 = vmax.f32 %v1548, 0.0
    %v1579 = vmax.f32 %v1465, 0.0
    %v1580 = vmax.f32 %v1551, 0.0
    %v1581 = vmax.f32 %v1467, 0.0
    %v1582 = vmax.f32 %v1553, 0.0
    %v1583 = vmax.f32 %v1470, 0.0
    %v1584 = vmax.f32 %v1556, 0.0
    %v1585 = vadd.f32 %v1559, %v739
    %v1586 = vadd.f32 %v1560, %v740
    %v1587 = vadd.f32 %v1561, %v741
    %v1588 = vadd.f32 %v1562, %v742
    %v1589 = vadd.f32 %v1563, %v743
    %v1590 = vadd.f32 %v1564, %v744
    %v1591 = vadd.f32 %v1565, %v745
    %v1592 = vadd.f32 %v1566, %v746
    %v1593 = vadd.f32 %v1567, %v747
    %v1594 = vadd.f32 %v1568, %v748
    %v1595 = vadd.f32 %v1569, %v749
    %v1596 = vadd.f32 %v1570, %v750
    %v1597 = vadd.f32 %v1571, %v751
    %v1598 = vadd.f32 %v1572, %v752
    %v1599 = vadd.f32 %v1573, %v753
    %v1600 = vadd.f32 %v1574, %v754
    %v1601 = vadd.f32 %v1575, %v755
    %v1602 = vadd.f32 %v1576, %v756
    %v1603 = vadd.f32 %v1577, %v757
    %v1604 = vadd.f32 %v1578, %v758
    %v1605 = vadd.f32 %v1579, %v759
    %v1606 = vadd.f32 %v1580, %v760
    %v1607 = vadd.f32 %v1581, %v761
    %v1608 = vadd.f32 %v1582, %v762
    %v1609 = vadd.f32 %v1583, %v763
    %v1610 = vadd.f32 %v1584, %v764
    %v1611 = vpack.c.bf16 %v1587, %v1585
    %v1612 = vpack.c.bf16 %v1588, %v1586
    %v1613 = vpack.c.bf16 %v1591, %v1589
    %v1614 = vpack.c.bf16 %v1592, %v1590
    %v1615 = vpack.c.bf16 %v1595, %v1593
    %v1616 = vpack.c.bf16 %v1596, %v1594
    %v1617 = vpack.c.bf16 %v1599, %v1597
    %v1618 = vpack.c.bf16 %v1600, %v1598
    %v1619 = vpack.c.bf16 %v1603, %v1601
    %v1620 = vpack.c.bf16 %v1604, %v1602
    %v1621 = vpack.c.bf16 %v1607, %v1605
    %v1622 = vpack.c.bf16 %v1608, %v1606
    %v1623 = vpack.c.bf16 %v1609, %v1609
    %v1624 = vpack.c.bf16 %v1610, %v1610
    %s1625 = scalar_lea.vmem [#allocation7], 256
    %v1626 = vld [vmem:[%s1625] sm:$0xff]
    %v1627 = vld [vmem:[%s1625 + $0x8] sm:$0xff]
    %v1628 = vld [vmem:[%s1625 + $0x10] sm:$0xff]
    %v1629 = vld [vmem:[%s1625 + $0x18] sm:$0xff]
    %v1630 = vld [vmem:[%s1625 + $0x20] sm:$0xff]
    %v1631 = vld [vmem:[%s1625 + $0x28] sm:$0xff]
    %v1632 = vld [vmem:[%s1625 + $0x30] sm:$0xff]
    %v1633 = vld [vmem:[%s1625 + $0x38] sm:$0xff]
    %v1634 = vld [vmem:[%s1625 + $0x40] sm:$0xff]
    %v1635 = vld [vmem:[%s1625 + $0x48] sm:$0xff]
    %v1636 = vld [vmem:[%s1625 + $0x50] sm:$0xff]
    %v1637 = vld [vmem:[%s1625 + $0x58] sm:$0xff]
    %v1638 = vld [vmem:[%s1625 + $0x60] sm:$0xff]
    %v1639 = vld [vmem:[%s1625 + $0x68] sm:$0xff]
    %v1640 = vld [vmem:[%s1625 + $0x70] sm:$0xff]
    %v1641 = vld [vmem:[%s1625 + $0x78] sm:$0xff]
    %v1642 = vld [vmem:[%s1625 + $0x80] sm:$0xff]
    %v1643 = vld [vmem:[%s1625 + $0x88] sm:$0xff]
    %v1644 = vld [vmem:[%s1625 + $0x90] sm:$0xff]
    %v1645 = vld [vmem:[%s1625 + $0x98] sm:$0xff]
    %v1646 = vld [vmem:[%s1625 + $0xa0] sm:$0xff]
    %v1647 = vld [vmem:[%s1625 + $0xa8] sm:$0xff]
    %v1648 = vld [vmem:[%s1625 + $0xb0] sm:$0xff]
    %v1649 = vld [vmem:[%s1625 + $0xb8] sm:$0xff]
    %v1650 = vld [vmem:[%s1625 + $0xc0] sm:$0xff]
    %v1651 = vld [vmem:[%s1625 + $0xc8] sm:$0xff]
    %v1652 = vld [vmem:[%s1625 + $0xd0] sm:$0xff]
    %v1653 = vld [vmem:[%s1625 + $0xd8] sm:$0xff]
    %v1654 = vld [vmem:[%s1625 + $0xe0] sm:$0xff]
    %v1655 = vld [vmem:[%s1625 + $0xe8] sm:$0xff]
    %v1656 = vld [vmem:[%s1625 + $0xf0] sm:$0xff]
    %v1657 = vld [vmem:[%s1625 + $0xf8] sm:$0xff]
    %s1658 = scalar_lea.vmem %s6, 2
    %v1659 = vld [vmem:[%s1658] sm:$0x3]
    %v1661 = vperm.slane %v1659, 0
    %v1662 = vperm.slane %v1659, 1
    %v1697 = vunpack.c.l.b16 %v1626
    %v1698 = vunpack.c.h.b16 %v1626
    %v1699 = vunpack.c.l.b16 %v1627
    %v1700 = vunpack.c.h.b16 %v1627
    %v1701 = vunpack.c.l.b16 %v1628
    %v1702 = vunpack.c.h.b16 %v1628
    %v1703 = vunpack.c.l.b16 %v1629
    %v1704 = vunpack.c.h.b16 %v1629
    %v1705 = vunpack.c.l.b16 %v1630
    %v1706 = vunpack.c.h.b16 %v1630
    %v1707 = vunpack.c.l.b16 %v1631
    %v1708 = vunpack.c.h.b16 %v1631
    %v1709 = vunpack.c.l.b16 %v1632
    %v1710 = vunpack.c.h.b16 %v1632
    %v1711 = vunpack.c.l.b16 %v1633
    %v1712 = vunpack.c.h.b16 %v1633
    %v1713 = vunpack.c.l.b16 %v1634
    %v1714 = vunpack.c.h.b16 %v1634
    %v1715 = vunpack.c.l.b16 %v1635
    %v1716 = vunpack.c.h.b16 %v1635
    %v1717 = vunpack.c.l.b16 %v1636
    %v1718 = vunpack.c.h.b16 %v1636
    %v1719 = vunpack.c.l.b16 %v1637
    %v1720 = vunpack.c.h.b16 %v1637
    %v1721 = vunpack.c.l.b16 %v1638
    %v1722 = vunpack.c.h.b16 %v1638
    %v1723 = vunpack.c.l.b16 %v1639
    %v1724 = vunpack.c.h.b16 %v1639
    %v1725 = vunpack.c.l.b16 %v1640
    %v1726 = vunpack.c.h.b16 %v1640
    %v1727 = vunpack.c.l.b16 %v1641
    %v1728 = vunpack.c.h.b16 %v1641
    %v1729 = vunpack.c.l.b16 %v1642
    %v1730 = vunpack.c.h.b16 %v1642
    %v1731 = vunpack.c.l.b16 %v1643
    %v1732 = vunpack.c.h.b16 %v1643
    %v1733 = vunpack.c.l.b16 %v1644
    %v1734 = vunpack.c.h.b16 %v1644
    %v1735 = vunpack.c.l.b16 %v1645
    %v1736 = vunpack.c.h.b16 %v1645
    %v1737 = vunpack.c.l.b16 %v1646
    %v1738 = vunpack.c.h.b16 %v1646
    %v1739 = vunpack.c.l.b16 %v1647
    %v1740 = vunpack.c.h.b16 %v1647
    %v1741 = vunpack.c.l.b16 %v1648
    %v1742 = vunpack.c.h.b16 %v1648
    %v1743 = vunpack.c.l.b16 %v1649
    %v1744 = vunpack.c.h.b16 %v1649
    %v1745 = vunpack.c.l.b16 %v1650
    %v1746 = vunpack.c.h.b16 %v1650
    %v1747 = vunpack.c.l.b16 %v1651
    %v1748 = vunpack.c.h.b16 %v1651
    %v1749 = vunpack.c.l.b16 %v1652
    %v1750 = vunpack.c.h.b16 %v1652
    %v1751 = vunpack.c.l.b16 %v1653
    %v1752 = vunpack.c.h.b16 %v1653
    %v1753 = vunpack.c.l.b16 %v1654
    %v1754 = vunpack.c.h.b16 %v1654
    %v1755 = vunpack.c.l.b16 %v1655
    %v1756 = vunpack.c.h.b16 %v1655
    %v1757 = vunpack.c.l.b16 %v1656
    %v1758 = vunpack.c.h.b16 %v1656
    %v1759 = vunpack.c.l.b16 %v1657
    %v1760 = vunpack.c.h.b16 %v1657
    %v1761 = vpack.c.b16 %v1699, %v1697
    %v1762 = vpack.c.b16 %v1700, %v1698
    %v1763 = vpack.c.b16 %v1703, %v1701
    %v1764 = vpack.c.b16 %v1704, %v1702
    %v1765 = vpack.c.b16 %v1707, %v1705
    %v1766 = vpack.c.b16 %v1708, %v1706
    %v1767 = vpack.c.b16 %v1711, %v1709
    %v1768 = vpack.c.b16 %v1712, %v1710
    %v1769 = vpack.c.b16 %v1715, %v1713
    %v1770 = vpack.c.b16 %v1716, %v1714
    %v1771 = vpack.c.b16 %v1719, %v1717
    %v1772 = vpack.c.b16 %v1720, %v1718
    %v1773 = vpack.c.b16 %v1723, %v1721
    %v1774 = vpack.c.b16 %v1724, %v1722
    %v1775 = vpack.c.b16 %v1727, %v1725
    %v1776 = vpack.c.b16 %v1728, %v1726
    %v1777 = vpack.c.b16 %v1731, %v1729
    %v1778 = vpack.c.b16 %v1732, %v1730
    %v1779 = vpack.c.b16 %v1735, %v1733
    %v1780 = vpack.c.b16 %v1736, %v1734
    %v1781 = vpack.c.b16 %v1739, %v1737
    %v1782 = vpack.c.b16 %v1740, %v1738
    %v1783 = vpack.c.b16 %v1743, %v1741
    %v1784 = vpack.c.b16 %v1744, %v1742
    %v1785 = vpack.c.b16 %v1747, %v1745
    %v1786 = vpack.c.b16 %v1748, %v1746
    %v1787 = vpack.c.b16 %v1751, %v1749
    %v1788 = vpack.c.b16 %v1752, %v1750
    %v1789 = vpack.c.b16 %v1755, %v1753
    %v1790 = vpack.c.b16 %v1756, %v1754
    %v1791 = vpack.c.b16 %v1759, %v1757
    %v1792 = vpack.c.b16 %v1760, %v1758
    %1825 = vmatpush.bf16.msra.mxu0 %v1775
    %1826 = vmatpush.bf16.msra.mxu0 %v1773
    %1827 = vmatpush.bf16.msra.mxu0 %v1771
    %1828 = vmatpush.bf16.msra.mxu0 %v1769
    %1829 = vmatpush.bf16.msra.mxu0 %v1767
    %1830 = vmatpush.bf16.msra.mxu0 %v1765
    %1831 = vmatpush.bf16.msra.mxu0 %v1763
    %1832 = vmatpush.bf16.msra.mxu0 %v1761
    %1833 = vmatmul.bf16.gmra.mxu0 %v1611
    %v1834 = vpop.f32.mrf.mxu0
    %v1835 = vadd.f32 %v1661, %v1834
    %v1836 = vpop.f32.mrf.mxu0
    %v1837 = vadd.f32 %v1661, %v1836
    %1838 = vmatmul.bf16.gmra.mxu0 %v1613
    %v1839 = vpop.f32.mrf.mxu0
    %v1840 = vadd.f32 %v1661, %v1839
    %v1841 = vpop.f32.mrf.mxu0
    %v1842 = vadd.f32 %v1661, %v1841
    %1843 = vmatmul.bf16.gmra.mxu0 %v1615
    %v1844 = vpop.f32.mrf.mxu0
    %v1845 = vadd.f32 %v1661, %v1844
    %v1846 = vpop.f32.mrf.mxu0
    %v1847 = vadd.f32 %v1661, %v1846
    %1848 = vmatmul.bf16.gmra.mxu0 %v1617
    %v1849 = vpop.f32.mrf.mxu0
    %v1850 = vadd.f32 %v1661, %v1849
    %v1851 = vpop.f32.mrf.mxu0
    %v1852 = vadd.f32 %v1661, %v1851
    %1853 = vmatmul.bf16.gmra.mxu0 %v1619
    %v1854 = vpop.f32.mrf.mxu0
    %v1855 = vadd.f32 %v1661, %v1854
    %v1856 = vpop.f32.mrf.mxu0
    %v1857 = vadd.f32 %v1661, %v1856
    %1858 = vmatmul.bf16.gmra.mxu0 %v1621
    %v1859 = vpop.f32.mrf.mxu0
    %v1860 = vadd.f32 %v1661, %v1859
    %v1861 = vpop.f32.mrf.mxu0
    %v1862 = vadd.f32 %v1661, %v1861
    %1863 = vmatmul.bf16.gmra.mxu0 %v1623
    %v1864 = vpop.f32.mrf.mxu0
    %v1865 = vadd.f32 %v1661, %v1864
    %v1866 = vpop.f32.mrf.mxu0
    %1867 = vdwg.mxu0
    %1868 = vmatpush.bf16.msra.mxu0 %v1791
    %1869 = vmatpush.bf16.msra.mxu0 %v1789
    %1870 = vmatpush.bf16.msra.mxu0 %v1787
    %1871 = vmatpush.bf16.msra.mxu0 %v1785
    %1872 = vmatpush.bf16.msra.mxu0 %v1783
    %1873 = vmatpush.bf16.msra.mxu0 %v1781
    %1874 = vmatpush.bf16.msra.mxu0 %v1779
    %1875 = vmatpush.bf16.msra.mxu0 %v1777
    %1876 = vmatmul.bf16.gmra.mxu0 %v1612
    %v1877 = vpop.f32.mrf.mxu0
    %v1878 = vadd.f32 %v1835, %v1877
    %v1879 = vpop.f32.mrf.mxu0
    %v1880 = vadd.f32 %v1837, %v1879
    %1881 = vmatmul.bf16.gmra.mxu0 %v1614
    %v1882 = vpop.f32.mrf.mxu0
    %v1883 = vadd.f32 %v1840, %v1882
    %v1884 = vpop.f32.mrf.mxu0
    %v1885 = vadd.f32 %v1842, %v1884
    %1886 = vmatmul.bf16.gmra.mxu0 %v1616
    %v1887 = vpop.f32.mrf.mxu0
    %v1888 = vadd.f32 %v1845, %v1887
    %v1889 = vpop.f32.mrf.mxu0
    %v1890 = vadd.f32 %v1847, %v1889
    %1891 = vmatmul.bf16.gmra.mxu0 %v1618
    %v1892 = vpop.f32.mrf.mxu0
    %v1893 = vadd.f32 %v1850, %v1892
    %v1894 = vpop.f32.mrf.mxu0
    %v1895 = vadd.f32 %v1852, %v1894
    %1896 = vmatmul.bf16.gmra.mxu0 %v1620
    %v1897 = vpop.f32.mrf.mxu0
    %v1898 = vadd.f32 %v1855, %v1897
    %v1899 = vpop.f32.mrf.mxu0
    %v1900 = vadd.f32 %v1857, %v1899
    %1901 = vmatmul.bf16.gmra.mxu0 %v1622
    %v1902 = vpop.f32.mrf.mxu0
    %v1903 = vadd.f32 %v1860, %v1902
    %v1904 = vpop.f32.mrf.mxu0
    %v1905 = vadd.f32 %v1862, %v1904
    %1906 = vmatmul.bf16.gmra.mxu0 %v1624
    %v1907 = vpop.f32.mrf.mxu0
    %v1908 = vadd.f32 %v1865, %v1907
    %v1909 = vpop.f32.mrf.mxu0
    %1910 = vdwg.mxu0
    %1911 = vmatpush.bf16.msra.mxu0 %v1776
    %1912 = vmatpush.bf16.msra.mxu0 %v1774
    %1913 = vmatpush.bf16.msra.mxu0 %v1772
    %1914 = vmatpush.bf16.msra.mxu0 %v1770
    %1915 = vmatpush.bf16.msra.mxu0 %v1768
    %1916 = vmatpush.bf16.msra.mxu0 %v1766
    %1917 = vmatpush.bf16.msra.mxu0 %v1764
    %1918 = vmatpush.bf16.msra.mxu0 %v1762
    %1919 = vmatmul.bf16.gmra.mxu0 %v1611
    %v1920 = vpop.f32.mrf.mxu0
    %v1921 = vadd.f32 %v1662, %v1920
    %v1922 = vpop.f32.mrf.mxu0
    %v1923 = vadd.f32 %v1662, %v1922
    %1924 = vmatmul.bf16.gmra.mxu0 %v1613
    %v1925 = vpop.f32.mrf.mxu0
    %v1926 = vadd.f32 %v1662, %v1925
    %v1927 = vpop.f32.mrf.mxu0
    %v1928 = vadd.f32 %v1662, %v1927
    %1929 = vmatmul.bf16.gmra.mxu0 %v1615
    %v1930 = vpop.f32.mrf.mxu0
    %v1931 = vadd.f32 %v1662, %v1930
    %v1932 = vpop.f32.mrf.mxu0
    %v1933 = vadd.f32 %v1662, %v1932
    %1934 = vmatmul.bf16.gmra.mxu0 %v1617
    %v1935 = vpop.f32.mrf.mxu0
    %v1936 = vadd.f32 %v1662, %v1935
    %v1937 = vpop.f32.mrf.mxu0
    %v1938 = vadd.f32 %v1662, %v1937
    %1939 = vmatmul.bf16.gmra.mxu0 %v1619
    %v1940 = vpop.f32.mrf.mxu0
    %v1941 = vadd.f32 %v1662, %v1940
    %v1942 = vpop.f32.mrf.mxu0
    %v1943 = vadd.f32 %v1662, %v1942
    %1944 = vmatmul.bf16.gmra.mxu0 %v1621
    %v1945 = vpop.f32.mrf.mxu0
    %v1946 = vadd.f32 %v1662, %v1945
    %v1947 = vpop.f32.mrf.mxu0
    %v1948 = vadd.f32 %v1662, %v1947
    %1949 = vmatmul.bf16.gmra.mxu0 %v1623
    %v1950 = vpop.f32.mrf.mxu0
    %v1951 = vadd.f32 %v1662, %v1950
    %v1952 = vpop.f32.mrf.mxu0
    %1953 = vdwg.mxu0
    %1954 = vmatpush.bf16.msra.mxu0 %v1792
    %1955 = vmatpush.bf16.msra.mxu0 %v1790
    %1956 = vmatpush.bf16.msra.mxu0 %v1788
    %1957 = vmatpush.bf16.msra.mxu0 %v1786
    %1958 = vmatpush.bf16.msra.mxu0 %v1784
    %1959 = vmatpush.bf16.msra.mxu0 %v1782
    %1960 = vmatpush.bf16.msra.mxu0 %v1780
    %1961 = vmatpush.bf16.msra.mxu0 %v1778
    %1962 = vmatmul.bf16.gmra.mxu0 %v1612
    %v1963 = vpop.f32.mrf.mxu0
    %v1964 = vadd.f32 %v1921, %v1963
    %v1965 = vpop.f32.mrf.mxu0
    %v1966 = vadd.f32 %v1923, %v1965
    %1967 = vmatmul.bf16.gmra.mxu0 %v1614
    %v1968 = vpop.f32.mrf.mxu0
    %v1969 = vadd.f32 %v1926, %v1968
    %v1970 = vpop.f32.mrf.mxu0
    %v1971 = vadd.f32 %v1928, %v1970
    %1972 = vmatmul.bf16.gmra.mxu0 %v1616
    %v1973 = vpop.f32.mrf.mxu0
    %v1974 = vadd.f32 %v1931, %v1973
    %v1975 = vpop.f32.mrf.mxu0
    %v1976 = vadd.f32 %v1933, %v1975
    %1977 = vmatmul.bf16.gmra.mxu0 %v1618
    %v1978 = vpop.f32.mrf.mxu0
    %v1979 = vadd.f32 %v1936, %v1978
    %v1980 = vpop.f32.mrf.mxu0
    %v1981 = vadd.f32 %v1938, %v1980
    %1982 = vmatmul.bf16.gmra.mxu0 %v1620
    %v1983 = vpop.f32.mrf.mxu0
    %v1984 = vadd.f32 %v1941, %v1983
    %v1985 = vpop.f32.mrf.mxu0
    %v1986 = vadd.f32 %v1943, %v1985
    %1987 = vmatmul.bf16.gmra.mxu0 %v1622
    %v1988 = vpop.f32.mrf.mxu0
    %v1989 = vadd.f32 %v1946, %v1988
    %v1990 = vpop.f32.mrf.mxu0
    %v1991 = vadd.f32 %v1948, %v1990
    %1992 = vmatmul.bf16.gmra.mxu0 %v1624
    %v1993 = vpop.f32.mrf.mxu0
    %v1994 = vadd.f32 %v1951, %v1993
    %v1995 = vpop.f32.mrf.mxu0
    %1996 = vdwg.mxu0
    %v1997 = vmax.f32 %v1878, 0.0
    %v1998 = vmax.f32 %v1964, 0.0
    %v1999 = vmax.f32 %v1880, 0.0
    %v2000 = vmax.f32 %v1966, 0.0
    %v2001 = vmax.f32 %v1883, 0.0
    %v2002 = vmax.f32 %v1969, 0.0
    %v2003 = vmax.f32 %v1885, 0.0
    %v2004 = vmax.f32 %v1971, 0.0
    %v2005 = vmax.f32 %v1888, 0.0
    %v2006 = vmax.f32 %v1974, 0.0
    %v2007 = vmax.f32 %v1890, 0.0
    %v2008 = vmax.f32 %v1976, 0.0
    %v2009 = vmax.f32 %v1893, 0.0
    %v2010 = vmax.f32 %v1979, 0.0
    %v2011 = vmax.f32 %v1895, 0.0
    %v2012 = vmax.f32 %v1981, 0.0
    %v2013 = vmax.f32 %v1898, 0.0
    %v2014 = vmax.f32 %v1984, 0.0
    %v2015 = vmax.f32 %v1900, 0.0
    %v2016 = vmax.f32 %v1986, 0.0
    %v2017 = vmax.f32 %v1903, 0.0
    %v2018 = vmax.f32 %v1989, 0.0
    %v2019 = vmax.f32 %v1905, 0.0
    %v2020 = vmax.f32 %v1991, 0.0
    %v2021 = vmax.f32 %v1908, 0.0
    %v2022 = vmax.f32 %v1994, 0.0
    %v2023 = vpack.c.bf16 %v1999, %v1997
    %v2024 = vpack.c.bf16 %v2000, %v1998
    %v2025 = vpack.c.bf16 %v2003, %v2001
    %v2026 = vpack.c.bf16 %v2004, %v2002
    %v2027 = vpack.c.bf16 %v2007, %v2005
    %v2028 = vpack.c.bf16 %v2008, %v2006
    %v2029 = vpack.c.bf16 %v2011, %v2009
    %v2030 = vpack.c.bf16 %v2012, %v2010
    %v2031 = vpack.c.bf16 %v2015, %v2013
    %v2032 = vpack.c.bf16 %v2016, %v2014
    %v2033 = vpack.c.bf16 %v2019, %v2017
    %v2034 = vpack.c.bf16 %v2020, %v2018
    %v2035 = vpack.c.bf16 %v2021, %v2021
    %v2036 = vpack.c.bf16 %v2022, %v2022
    %s2037 = scalar_lea.vmem [#allocation8], 256
    %v2038 = vld [vmem:[%s2037] sm:$0xff]
    %v2039 = vld [vmem:[%s2037 + $0x8] sm:$0xff]
    %v2040 = vld [vmem:[%s2037 + $0x10] sm:$0xff]
    %v2041 = vld [vmem:[%s2037 + $0x18] sm:$0xff]
    %v2042 = vld [vmem:[%s2037 + $0x20] sm:$0xff]
    %v2043 = vld [vmem:[%s2037 + $0x28] sm:$0xff]
    %v2044 = vld [vmem:[%s2037 + $0x30] sm:$0xff]
    %v2045 = vld [vmem:[%s2037 + $0x38] sm:$0xff]
    %v2046 = vld [vmem:[%s2037 + $0x40] sm:$0xff]
    %v2047 = vld [vmem:[%s2037 + $0x48] sm:$0xff]
    %v2048 = vld [vmem:[%s2037 + $0x50] sm:$0xff]
    %v2049 = vld [vmem:[%s2037 + $0x58] sm:$0xff]
    %v2050 = vld [vmem:[%s2037 + $0x60] sm:$0xff]
    %v2051 = vld [vmem:[%s2037 + $0x68] sm:$0xff]
    %v2052 = vld [vmem:[%s2037 + $0x70] sm:$0xff]
    %v2053 = vld [vmem:[%s2037 + $0x78] sm:$0xff]
    %v2054 = vld [vmem:[%s2037 + $0x80] sm:$0xff]
    %v2055 = vld [vmem:[%s2037 + $0x88] sm:$0xff]
    %v2056 = vld [vmem:[%s2037 + $0x90] sm:$0xff]
    %v2057 = vld [vmem:[%s2037 + $0x98] sm:$0xff]
    %v2058 = vld [vmem:[%s2037 + $0xa0] sm:$0xff]
    %v2059 = vld [vmem:[%s2037 + $0xa8] sm:$0xff]
    %v2060 = vld [vmem:[%s2037 + $0xb0] sm:$0xff]
    %v2061 = vld [vmem:[%s2037 + $0xb8] sm:$0xff]
    %v2062 = vld [vmem:[%s2037 + $0xc0] sm:$0xff]
    %v2063 = vld [vmem:[%s2037 + $0xc8] sm:$0xff]
    %v2064 = vld [vmem:[%s2037 + $0xd0] sm:$0xff]
    %v2065 = vld [vmem:[%s2037 + $0xd8] sm:$0xff]
    %v2066 = vld [vmem:[%s2037 + $0xe0] sm:$0xff]
    %v2067 = vld [vmem:[%s2037 + $0xe8] sm:$0xff]
    %v2068 = vld [vmem:[%s2037 + $0xf0] sm:$0xff]
    %v2069 = vld [vmem:[%s2037 + $0xf8] sm:$0xff]
    %s2070 = scalar_lea.vmem %s8, 2
    %v2071 = vld [vmem:[%s2070] sm:$0x3]
    %v2073 = vperm.slane %v2071, 0
    %v2074 = vperm.slane %v2071, 1
    %v2109 = vunpack.c.l.b16 %v2038
    %v2110 = vunpack.c.h.b16 %v2038
    %v2111 = vunpack.c.l.b16 %v2039
    %v2112 = vunpack.c.h.b16 %v2039
    %v2113 = vunpack.c.l.b16 %v2040
    %v2114 = vunpack.c.h.b16 %v2040
    %v2115 = vunpack.c.l.b16 %v2041
    %v2116 = vunpack.c.h.b16 %v2041
    %v2117 = vunpack.c.l.b16 %v2042
    %v2118 = vunpack.c.h.b16 %v2042
    %v2119 = vunpack.c.l.b16 %v2043
    %v2120 = vunpack.c.h.b16 %v2043
    %v2121 = vunpack.c.l.b16 %v2044
    %v2122 = vunpack.c.h.b16 %v2044
    %v2123 = vunpack.c.l.b16 %v2045
    %v2124 = vunpack.c.h.b16 %v2045
    %v2125 = vunpack.c.l.b16 %v2046
    %v2126 = vunpack.c.h.b16 %v2046
    %v2127 = vunpack.c.l.b16 %v2047
    %v2128 = vunpack.c.h.b16 %v2047
    %v2129 = vunpack.c.l.b16 %v2048
    %v2130 = vunpack.c.h.b16 %v2048
    %v2131 = vunpack.c.l.b16 %v2049
    %v2132 = vunpack.c.h.b16 %v2049
    %v2133 = vunpack.c.l.b16 %v2050
    %v2134 = vunpack.c.h.b16 %v2050
    %v2135 = vunpack.c.l.b16 %v2051
    %v2136 = vunpack.c.h.b16 %v2051
    %v2137 = vunpack.c.l.b16 %v2052
    %v2138 = vunpack.c.h.b16 %v2052
    %v2139 = vunpack.c.l.b16 %v2053
    %v2140 = vunpack.c.h.b16 %v2053
    %v2141 = vunpack.c.l.b16 %v2054
    %v2142 = vunpack.c.h.b16 %v2054
    %v2143 = vunpack.c.l.b16 %v2055
    %v2144 = vunpack.c.h.b16 %v2055
    %v2145 = vunpack.c.l.b16 %v2056
    %v2146 = vunpack.c.h.b16 %v2056
    %v2147 = vunpack.c.l.b16 %v2057
    %v2148 = vunpack.c.h.b16 %v2057
    %v2149 = vunpack.c.l.b16 %v2058
    %v2150 = vunpack.c.h.b16 %v2058
    %v2151 = vunpack.c.l.b16 %v2059
    %v2152 = vunpack.c.h.b16 %v2059
    %v2153 = vunpack.c.l.b16 %v2060
    %v2154 = vunpack.c.h.b16 %v2060
    %v2155 = vunpack.c.l.b16 %v2061
    %v2156 = vunpack.c.h.b16 %v2061
    %v2157 = vunpack.c.l.b16 %v2062
    %v2158 = vunpack.c.h.b16 %v2062
    %v2159 = vunpack.c.l.b16 %v2063
    %v2160 = vunpack.c.h.b16 %v2063
    %v2161 = vunpack.c.l.b16 %v2064
    %v2162 = vunpack.c.h.b16 %v2064
    %v2163 = vunpack.c.l.b16 %v2065
    %v2164 = vunpack.c.h.b16 %v2065
    %v2165 = vunpack.c.l.b16 %v2066
    %v2166 = vunpack.c.h.b16 %v2066
    %v2167 = vunpack.c.l.b16 %v2067
    %v2168 = vunpack.c.h.b16 %v2067
    %v2169 = vunpack.c.l.b16 %v2068
    %v2170 = vunpack.c.h.b16 %v2068
    %v2171 = vunpack.c.l.b16 %v2069
    %v2172 = vunpack.c.h.b16 %v2069
    %v2173 = vpack.c.b16 %v2111, %v2109
    %v2174 = vpack.c.b16 %v2112, %v2110
    %v2175 = vpack.c.b16 %v2115, %v2113
    %v2176 = vpack.c.b16 %v2116, %v2114
    %v2177 = vpack.c.b16 %v2119, %v2117
    %v2178 = vpack.c.b16 %v2120, %v2118
    %v2179 = vpack.c.b16 %v2123, %v2121
    %v2180 = vpack.c.b16 %v2124, %v2122
    %v2181 = vpack.c.b16 %v2127, %v2125
    %v2182 = vpack.c.b16 %v2128, %v2126
    %v2183 = vpack.c.b16 %v2131, %v2129
    %v2184 = vpack.c.b16 %v2132, %v2130
    %v2185 = vpack.c.b16 %v2135, %v2133
    %v2186 = vpack.c.b16 %v2136, %v2134
    %v2187 = vpack.c.b16 %v2139, %v2137
    %v2188 = vpack.c.b16 %v2140, %v2138
    %v2189 = vpack.c.b16 %v2143, %v2141
    %v2190 = vpack.c.b16 %v2144, %v2142
    %v2191 = vpack.c.b16 %v2147, %v2145
    %v2192 = vpack.c.b16 %v2148, %v2146
    %v2193 = vpack.c.b16 %v2151, %v2149
    %v2194 = vpack.c.b16 %v2152, %v2150
    %v2195 = vpack.c.b16 %v2155, %v2153
    %v2196 = vpack.c.b16 %v2156, %v2154
    %v2197 = vpack.c.b16 %v2159, %v2157
    %v2198 = vpack.c.b16 %v2160, %v2158
    %v2199 = vpack.c.b16 %v2163, %v2161
    %v2200 = vpack.c.b16 %v2164, %v2162
    %v2201 = vpack.c.b16 %v2167, %v2165
    %v2202 = vpack.c.b16 %v2168, %v2166
    %v2203 = vpack.c.b16 %v2171, %v2169
    %v2204 = vpack.c.b16 %v2172, %v2170
    %2237 = vmatpush.bf16.msra.mxu0 %v2187
    %2238 = vmatpush.bf16.msra.mxu0 %v2185
    %2239 = vmatpush.bf16.msra.mxu0 %v2183
    %2240 = vmatpush.bf16.msra.mxu0 %v2181
    %2241 = vmatpush.bf16.msra.mxu0 %v2179
    %2242 = vmatpush.bf16.msra.mxu0 %v2177
    %2243 = vmatpush.bf16.msra.mxu0 %v2175
    %2244 = vmatpush.bf16.msra.mxu0 %v2173
    %2245 = vmatmul.bf16.gmra.mxu0 %v2023
    %v2246 = vpop.f32.mrf.mxu0
    %v2247 = vadd.f32 %v2073, %v2246
    %v2248 = vpop.f32.mrf.mxu0
    %v2249 = vadd.f32 %v2073, %v2248
    %2250 = vmatmul.bf16.gmra.mxu0 %v2025
    %v2251 = vpop.f32.mrf.mxu0
    %v2252 = vadd.f32 %v2073, %v2251
    %v2253 = vpop.f32.mrf.mxu0
    %v2254 = vadd.f32 %v2073, %v2253
    %2255 = vmatmul.bf16.gmra.mxu0 %v2027
    %v2256 = vpop.f32.mrf.mxu0
    %v2257 = vadd.f32 %v2073, %v2256
    %v2258 = vpop.f32.mrf.mxu0
    %v2259 = vadd.f32 %v2073, %v2258
    %2260 = vmatmul.bf16.gmra.mxu0 %v2029
    %v2261 = vpop.f32.mrf.mxu0
    %v2262 = vadd.f32 %v2073, %v2261
    %v2263 = vpop.f32.mrf.mxu0
    %v2264 = vadd.f32 %v2073, %v2263
    %2265 = vmatmul.bf16.gmra.mxu0 %v2031
    %v2266 = vpop.f32.mrf.mxu0
    %v2267 = vadd.f32 %v2073, %v2266
    %v2268 = vpop.f32.mrf.mxu0
    %v2269 = vadd.f32 %v2073, %v2268
    %2270 = vmatmul.bf16.gmra.mxu0 %v2033
    %v2271 = vpop.f32.mrf.mxu0
    %v2272 = vadd.f32 %v2073, %v2271
    %v2273 = vpop.f32.mrf.mxu0
    %v2274 = vadd.f32 %v2073, %v2273
    %2275 = vmatmul.bf16.gmra.mxu0 %v2035
    %v2276 = vpop.f32.mrf.mxu0
    %v2277 = vadd.f32 %v2073, %v2276
    %v2278 = vpop.f32.mrf.mxu0
    %2279 = vdwg.mxu0
    %2280 = vmatpush.bf16.msra.mxu0 %v2203
    %2281 = vmatpush.bf16.msra.mxu0 %v2201
    %2282 = vmatpush.bf16.msra.mxu0 %v2199
    %2283 = vmatpush.bf16.msra.mxu0 %v2197
    %2284 = vmatpush.bf16.msra.mxu0 %v2195
    %2285 = vmatpush.bf16.msra.mxu0 %v2193
    %2286 = vmatpush.bf16.msra.mxu0 %v2191
    %2287 = vmatpush.bf16.msra.mxu0 %v2189
    %2288 = vmatmul.bf16.gmra.mxu0 %v2024
    %v2289 = vpop.f32.mrf.mxu0
    %v2290 = vadd.f32 %v2247, %v2289
    %v2291 = vpop.f32.mrf.mxu0
    %v2292 = vadd.f32 %v2249, %v2291
    %2293 = vmatmul.bf16.gmra.mxu0 %v2026
    %v2294 = vpop.f32.mrf.mxu0
    %v2295 = vadd.f32 %v2252, %v2294
    %v2296 = vpop.f32.mrf.mxu0
    %v2297 = vadd.f32 %v2254, %v2296
    %2298 = vmatmul.bf16.gmra.mxu0 %v2028
    %v2299 = vpop.f32.mrf.mxu0
    %v2300 = vadd.f32 %v2257, %v2299
    %v2301 = vpop.f32.mrf.mxu0
    %v2302 = vadd.f32 %v2259, %v2301
    %2303 = vmatmul.bf16.gmra.mxu0 %v2030
    %v2304 = vpop.f32.mrf.mxu0
    %v2305 = vadd.f32 %v2262, %v2304
    %v2306 = vpop.f32.mrf.mxu0
    %v2307 = vadd.f32 %v2264, %v2306
    %2308 = vmatmul.bf16.gmra.mxu0 %v2032
    %v2309 = vpop.f32.mrf.mxu0
    %v2310 = vadd.f32 %v2267, %v2309
    %v2311 = vpop.f32.mrf.mxu0
    %v2312 = vadd.f32 %v2269, %v2311
    %2313 = vmatmul.bf16.gmra.mxu0 %v2034
    %v2314 = vpop.f32.mrf.mxu0
    %v2315 = vadd.f32 %v2272, %v2314
    %v2316 = vpop.f32.mrf.mxu0
    %v2317 = vadd.f32 %v2274, %v2316
    %2318 = vmatmul.bf16.gmra.mxu0 %v2036
    %v2319 = vpop.f32.mrf.mxu0
    %v2320 = vadd.f32 %v2277, %v2319
    %v2321 = vpop.f32.mrf.mxu0
    %2322 = vdwg.mxu0
    %2323 = vmatpush.bf16.msra.mxu0 %v2188
    %2324 = vmatpush.bf16.msra.mxu0 %v2186
    %2325 = vmatpush.bf16.msra.mxu0 %v2184
    %2326 = vmatpush.bf16.msra.mxu0 %v2182
    %2327 = vmatpush.bf16.msra.mxu0 %v2180
    %2328 = vmatpush.bf16.msra.mxu0 %v2178
    %2329 = vmatpush.bf16.msra.mxu0 %v2176
    %2330 = vmatpush.bf16.msra.mxu0 %v2174
    %2331 = vmatmul.bf16.gmra.mxu0 %v2023
    %v2332 = vpop.f32.mrf.mxu0
    %v2333 = vadd.f32 %v2074, %v2332
    %v2334 = vpop.f32.mrf.mxu0
    %v2335 = vadd.f32 %v2074, %v2334
    %2336 = vmatmul.bf16.gmra.mxu0 %v2025
    %v2337 = vpop.f32.mrf.mxu0
    %v2338 = vadd.f32 %v2074, %v2337
    %v2339 = vpop.f32.mrf.mxu0
    %v2340 = vadd.f32 %v2074, %v2339
    %2341 = vmatmul.bf16.gmra.mxu0 %v2027
    %v2342 = vpop.f32.mrf.mxu0
    %v2343 = vadd.f32 %v2074, %v2342
    %v2344 = vpop.f32.mrf.mxu0
    %v2345 = vadd.f32 %v2074, %v2344
    %2346 = vmatmul.bf16.gmra.mxu0 %v2029
    %v2347 = vpop.f32.mrf.mxu0
    %v2348 = vadd.f32 %v2074, %v2347
    %v2349 = vpop.f32.mrf.mxu0
    %v2350 = vadd.f32 %v2074, %v2349
    %2351 = vmatmul.bf16.gmra.mxu0 %v2031
    %v2352 = vpop.f32.mrf.mxu0
    %v2353 = vadd.f32 %v2074, %v2352
    %v2354 = vpop.f32.mrf.mxu0
    %v2355 = vadd.f32 %v2074, %v2354
    %2356 = vmatmul.bf16.gmra.mxu0 %v2033
    %v2357 = vpop.f32.mrf.mxu0
    %v2358 = vadd.f32 %v2074, %v2357
    %v2359 = vpop.f32.mrf.mxu0
    %v2360 = vadd.f32 %v2074, %v2359
    %2361 = vmatmul.bf16.gmra.mxu0 %v2035
    %v2362 = vpop.f32.mrf.mxu0
    %v2363 = vadd.f32 %v2074, %v2362
    %v2364 = vpop.f32.mrf.mxu0
    %2365 = vdwg.mxu0
    %2366 = vmatpush.bf16.msra.mxu0 %v2204
    %2367 = vmatpush.bf16.msra.mxu0 %v2202
    %2368 = vmatpush.bf16.msra.mxu0 %v2200
    %2369 = vmatpush.bf16.msra.mxu0 %v2198
    %2370 = vmatpush.bf16.msra.mxu0 %v2196
    %2371 = vmatpush.bf16.msra.mxu0 %v2194
    %2372 = vmatpush.bf16.msra.mxu0 %v2192
    %2373 = vmatpush.bf16.msra.mxu0 %v2190
    %2374 = vmatmul.bf16.gmra.mxu0 %v2024
    %v2375 = vpop.f32.mrf.mxu0
    %v2376 = vadd.f32 %v2333, %v2375
    %v2377 = vpop.f32.mrf.mxu0
    %v2378 = vadd.f32 %v2335, %v2377
    %2379 = vmatmul.bf16.gmra.mxu0 %v2026
    %v2380 = vpop.f32.mrf.mxu0
    %v2381 = vadd.f32 %v2338, %v2380
    %v2382 = vpop.f32.mrf.mxu0
    %v2383 = vadd.f32 %v2340, %v2382
    %2384 = vmatmul.bf16.gmra.mxu0 %v2028
    %v2385 = vpop.f32.mrf.mxu0
    %v2386 = vadd.f32 %v2343, %v2385
    %v2387 = vpop.f32.mrf.mxu0
    %v2388 = vadd.f32 %v2345, %v2387
    %2389 = vmatmul.bf16.gmra.mxu0 %v2030
    %v2390 = vpop.f32.mrf.mxu0
    %v2391 = vadd.f32 %v2348, %v2390
    %v2392 = vpop.f32.mrf.mxu0
    %v2393 = vadd.f32 %v2350, %v2392
    %2394 = vmatmul.bf16.gmra.mxu0 %v2032
    %v2395 = vpop.f32.mrf.mxu0
    %v2396 = vadd.f32 %v2353, %v2395
    %v2397 = vpop.f32.mrf.mxu0
    %v2398 = vadd.f32 %v2355, %v2397
    %2399 = vmatmul.bf16.gmra.mxu0 %v2034
    %v2400 = vpop.f32.mrf.mxu0
    %v2401 = vadd.f32 %v2358, %v2400
    %v2402 = vpop.f32.mrf.mxu0
    %v2403 = vadd.f32 %v2360, %v2402
    %2404 = vmatmul.bf16.gmra.mxu0 %v2036
    %v2405 = vpop.f32.mrf.mxu0
    %v2406 = vadd.f32 %v2363, %v2405
    %v2407 = vpop.f32.mrf.mxu0
    %2408 = vdwg.mxu0
    %v2409 = vmax.f32 %v2290, 0.0
    %v2410 = vmax.f32 %v2376, 0.0
    %v2411 = vmax.f32 %v2292, 0.0
    %v2412 = vmax.f32 %v2378, 0.0
    %v2413 = vmax.f32 %v2295, 0.0
    %v2414 = vmax.f32 %v2381, 0.0
    %v2415 = vmax.f32 %v2297, 0.0
    %v2416 = vmax.f32 %v2383, 0.0
    %v2417 = vmax.f32 %v2300, 0.0
    %v2418 = vmax.f32 %v2386, 0.0
    %v2419 = vmax.f32 %v2302, 0.0
    %v2420 = vmax.f32 %v2388, 0.0
    %v2421 = vmax.f32 %v2305, 0.0
    %v2422 = vmax.f32 %v2391, 0.0
    %v2423 = vmax.f32 %v2307, 0.0
    %v2424 = vmax.f32 %v2393, 0.0
    %v2425 = vmax.f32 %v2310, 0.0
    %v2426 = vmax.f32 %v2396, 0.0
    %v2427 = vmax.f32 %v2312, 0.0
    %v2428 = vmax.f32 %v2398, 0.0
    %v2429 = vmax.f32 %v2315, 0.0
    %v2430 = vmax.f32 %v2401, 0.0
    %v2431 = vmax.f32 %v2317, 0.0
    %v2432 = vmax.f32 %v2403, 0.0
    %v2433 = vmax.f32 %v2320, 0.0
    %v2434 = vmax.f32 %v2406, 0.0
    %v2435 = vadd.f32 %v2409, %v1585
    %v2436 = vadd.f32 %v2410, %v1586
    %v2437 = vadd.f32 %v2411, %v1587
    %v2438 = vadd.f32 %v2412, %v1588
    %v2439 = vadd.f32 %v2413, %v1589
    %v2440 = vadd.f32 %v2414, %v1590
    %v2441 = vadd.f32 %v2415, %v1591
    %v2442 = vadd.f32 %v2416, %v1592
    %v2443 = vadd.f32 %v2417, %v1593
    %v2444 = vadd.f32 %v2418, %v1594
    %v2445 = vadd.f32 %v2419, %v1595
    %v2446 = vadd.f32 %v2420, %v1596
    %v2447 = vadd.f32 %v2421, %v1597
    %v2448 = vadd.f32 %v2422, %v1598
    %v2449 = vadd.f32 %v2423, %v1599
    %v2450 = vadd.f32 %v2424, %v1600
    %v2451 = vadd.f32 %v2425, %v1601
    %v2452 = vadd.f32 %v2426, %v1602
    %v2453 = vadd.f32 %v2427, %v1603
    %v2454 = vadd.f32 %v2428, %v1604
    %v2455 = vadd.f32 %v2429, %v1605
    %v2456 = vadd.f32 %v2430, %v1606
    %v2457 = vadd.f32 %v2431, %v1607
    %v2458 = vadd.f32 %v2432, %v1608
    %v2459 = vadd.f32 %v2433, %v1609
    %v2460 = vadd.f32 %v2434, %v1610
    %v2461 = vpack.c.bf16 %v2437, %v2435
    %v2462 = vpack.c.bf16 %v2438, %v2436
    %v2463 = vpack.c.bf16 %v2441, %v2439
    %v2464 = vpack.c.bf16 %v2442, %v2440
    %v2465 = vpack.c.bf16 %v2445, %v2443
    %v2466 = vpack.c.bf16 %v2446, %v2444
    %v2467 = vpack.c.bf16 %v2449, %v2447
    %v2468 = vpack.c.bf16 %v2450, %v2448
    %v2469 = vpack.c.bf16 %v2453, %v2451
    %v2470 = vpack.c.bf16 %v2454, %v2452
    %v2471 = vpack.c.bf16 %v2457, %v2455
    %v2472 = vpack.c.bf16 %v2458, %v2456
    %v2473 = vpack.c.bf16 %v2459, %v2459
    %v2474 = vpack.c.bf16 %v2460, %v2460
    %s2475 = scalar_lea.vmem [#allocation7], 512
    %v2476 = vld [vmem:[%s2475] sm:$0xff]
    %v2477 = vld [vmem:[%s2475 + $0x8] sm:$0xff]
    %v2478 = vld [vmem:[%s2475 + $0x10] sm:$0xff]
    %v2479 = vld [vmem:[%s2475 + $0x18] sm:$0xff]
    %v2480 = vld [vmem:[%s2475 + $0x20] sm:$0xff]
    %v2481 = vld [vmem:[%s2475 + $0x28] sm:$0xff]
    %v2482 = vld [vmem:[%s2475 + $0x30] sm:$0xff]
    %v2483 = vld [vmem:[%s2475 + $0x38] sm:$0xff]
    %v2484 = vld [vmem:[%s2475 + $0x40] sm:$0xff]
    %v2485 = vld [vmem:[%s2475 + $0x48] sm:$0xff]
    %v2486 = vld [vmem:[%s2475 + $0x50] sm:$0xff]
    %v2487 = vld [vmem:[%s2475 + $0x58] sm:$0xff]
    %v2488 = vld [vmem:[%s2475 + $0x60] sm:$0xff]
    %v2489 = vld [vmem:[%s2475 + $0x68] sm:$0xff]
    %v2490 = vld [vmem:[%s2475 + $0x70] sm:$0xff]
    %v2491 = vld [vmem:[%s2475 + $0x78] sm:$0xff]
    %v2492 = vld [vmem:[%s2475 + $0x80] sm:$0xff]
    %v2493 = vld [vmem:[%s2475 + $0x88] sm:$0xff]
    %v2494 = vld [vmem:[%s2475 + $0x90] sm:$0xff]
    %v2495 = vld [vmem:[%s2475 + $0x98] sm:$0xff]
    %v2496 = vld [vmem:[%s2475 + $0xa0] sm:$0xff]
    %v2497 = vld [vmem:[%s2475 + $0xa8] sm:$0xff]
    %v2498 = vld [vmem:[%s2475 + $0xb0] sm:$0xff]
    %v2499 = vld [vmem:[%s2475 + $0xb8] sm:$0xff]
    %v2500 = vld [vmem:[%s2475 + $0xc0] sm:$0xff]
    %v2501 = vld [vmem:[%s2475 + $0xc8] sm:$0xff]
    %v2502 = vld [vmem:[%s2475 + $0xd0] sm:$0xff]
    %v2503 = vld [vmem:[%s2475 + $0xd8] sm:$0xff]
    %v2504 = vld [vmem:[%s2475 + $0xe0] sm:$0xff]
    %v2505 = vld [vmem:[%s2475 + $0xe8] sm:$0xff]
    %v2506 = vld [vmem:[%s2475 + $0xf0] sm:$0xff]
    %v2507 = vld [vmem:[%s2475 + $0xf8] sm:$0xff]
    %s2508 = scalar_lea.vmem %s6, 4
    %v2509 = vld [vmem:[%s2508] sm:$0x3]
    %v2511 = vperm.slane %v2509, 0
    %v2512 = vperm.slane %v2509, 1
    %v2547 = vunpack.c.l.b16 %v2476
    %v2548 = vunpack.c.h.b16 %v2476
    %v2549 = vunpack.c.l.b16 %v2477
    %v2550 = vunpack.c.h.b16 %v2477
    %v2551 = vunpack.c.l.b16 %v2478
    %v2552 = vunpack.c.h.b16 %v2478
    %v2553 = vunpack.c.l.b16 %v2479
    %v2554 = vunpack.c.h.b16 %v2479
    %v2555 = vunpack.c.l.b16 %v2480
    %v2556 = vunpack.c.h.b16 %v2480
    %v2557 = vunpack.c.l.b16 %v2481
    %v2558 = vunpack.c.h.b16 %v2481
    %v2559 = vunpack.c.l.b16 %v2482
    %v2560 = vunpack.c.h.b16 %v2482
    %v2561 = vunpack.c.l.b16 %v2483
    %v2562 = vunpack.c.h.b16 %v2483
    %v2563 = vunpack.c.l.b16 %v2484
    %v2564 = vunpack.c.h.b16 %v2484
    %v2565 = vunpack.c.l.b16 %v2485
    %v2566 = vunpack.c.h.b16 %v2485
    %v2567 = vunpack.c.l.b16 %v2486
    %v2568 = vunpack.c.h.b16 %v2486
    %v2569 = vunpack.c.l.b16 %v2487
    %v2570 = vunpack.c.h.b16 %v2487
    %v2571 = vunpack.c.l.b16 %v2488
    %v2572 = vunpack.c.h.b16 %v2488
    %v2573 = vunpack.c.l.b16 %v2489
    %v2574 = vunpack.c.h.b16 %v2489
    %v2575 = vunpack.c.l.b16 %v2490
    %v2576 = vunpack.c.h.b16 %v2490
    %v2577 = vunpack.c.l.b16 %v2491
    %v2578 = vunpack.c.h.b16 %v2491
    %v2579 = vunpack.c.l.b16 %v2492
    %v2580 = vunpack.c.h.b16 %v2492
    %v2581 = vunpack.c.l.b16 %v2493
    %v2582 = vunpack.c.h.b16 %v2493
    %v2583 = vunpack.c.l.b16 %v2494
    %v2584 = vunpack.c.h.b16 %v2494
    %v2585 = vunpack.c.l.b16 %v2495
    %v2586 = vunpack.c.h.b16 %v2495
    %v2587 = vunpack.c.l.b16 %v2496
    %v2588 = vunpack.c.h.b16 %v2496
    %v2589 = vunpack.c.l.b16 %v2497
    %v2590 = vunpack.c.h.b16 %v2497
    %v2591 = vunpack.c.l.b16 %v2498
    %v2592 = vunpack.c.h.b16 %v2498
    %v2593 = vunpack.c.l.b16 %v2499
    %v2594 = vunpack.c.h.b16 %v2499
    %v2595 = vunpack.c.l.b16 %v2500
    %v2596 = vunpack.c.h.b16 %v2500
    %v2597 = vunpack.c.l.b16 %v2501
    %v2598 = vunpack.c.h.b16 %v2501
    %v2599 = vunpack.c.l.b16 %v2502
    %v2600 = vunpack.c.h.b16 %v2502
    %v2601 = vunpack.c.l.b16 %v2503
    %v2602 = vunpack.c.h.b16 %v2503
    %v2603 = vunpack.c.l.b16 %v2504
    %v2604 = vunpack.c.h.b16 %v2504
    %v2605 = vunpack.c.l.b16 %v2505
    %v2606 = vunpack.c.h.b16 %v2505
    %v2607 = vunpack.c.l.b16 %v2506
    %v2608 = vunpack.c.h.b16 %v2506
    %v2609 = vunpack.c.l.b16 %v2507
    %v2610 = vunpack.c.h.b16 %v2507
    %v2611 = vpack.c.b16 %v2549, %v2547
    %v2612 = vpack.c.b16 %v2550, %v2548
    %v2613 = vpack.c.b16 %v2553, %v2551
    %v2614 = vpack.c.b16 %v2554, %v2552
    %v2615 = vpack.c.b16 %v2557, %v2555
    %v2616 = vpack.c.b16 %v2558, %v2556
    %v2617 = vpack.c.b16 %v2561, %v2559
    %v2618 = vpack.c.b16 %v2562, %v2560
    %v2619 = vpack.c.b16 %v2565, %v2563
    %v2620 = vpack.c.b16 %v2566, %v2564
    %v2621 = vpack.c.b16 %v2569, %v2567
    %v2622 = vpack.c.b16 %v2570, %v2568
    %v2623 = vpack.c.b16 %v2573, %v2571
    %v2624 = vpack.c.b16 %v2574, %v2572
    %v2625 = vpack.c.b16 %v2577, %v2575
    %v2626 = vpack.c.b16 %v2578, %v2576
    %v2627 = vpack.c.b16 %v2581, %v2579
    %v2628 = vpack.c.b16 %v2582, %v2580
    %v2629 = vpack.c.b16 %v2585, %v2583
    %v2630 = vpack.c.b16 %v2586, %v2584
    %v2631 = vpack.c.b16 %v2589, %v2587
    %v2632 = vpack.c.b16 %v2590, %v2588
    %v2633 = vpack.c.b16 %v2593, %v2591
    %v2634 = vpack.c.b16 %v2594, %v2592
    %v2635 = vpack.c.b16 %v2597, %v2595
    %v2636 = vpack.c.b16 %v2598, %v2596
    %v2637 = vpack.c.b16 %v2601, %v2599
    %v2638 = vpack.c.b16 %v2602, %v2600
    %v2639 = vpack.c.b16 %v2605, %v2603
    %v2640 = vpack.c.b16 %v2606, %v2604
    %v2641 = vpack.c.b16 %v2609, %v2607
    %v2642 = vpack.c.b16 %v2610, %v2608
    %2675 = vmatpush.bf16.msra.mxu0 %v2625
    %2676 = vmatpush.bf16.msra.mxu0 %v2623
    %2677 = vmatpush.bf16.msra.mxu0 %v2621
    %2678 = vmatpush.bf16.msra.mxu0 %v2619
    %2679 = vmatpush.bf16.msra.mxu0 %v2617
    %2680 = vmatpush.bf16.msra.mxu0 %v2615
    %2681 = vmatpush.bf16.msra.mxu0 %v2613
    %2682 = vmatpush.bf16.msra.mxu0 %v2611
    %2683 = vmatmul.bf16.gmra.mxu0 %v2461
    %v2684 = vpop.f32.mrf.mxu0
    %v2685 = vadd.f32 %v2511, %v2684
    %v2686 = vpop.f32.mrf.mxu0
    %v2687 = vadd.f32 %v2511, %v2686
    %2688 = vmatmul.bf16.gmra.mxu0 %v2463
    %v2689 = vpop.f32.mrf.mxu0
    %v2690 = vadd.f32 %v2511, %v2689
    %v2691 = vpop.f32.mrf.mxu0
    %v2692 = vadd.f32 %v2511, %v2691
    %2693 = vmatmul.bf16.gmra.mxu0 %v2465
    %v2694 = vpop.f32.mrf.mxu0
    %v2695 = vadd.f32 %v2511, %v2694
    %v2696 = vpop.f32.mrf.mxu0
    %v2697 = vadd.f32 %v2511, %v2696
    %2698 = vmatmul.bf16.gmra.mxu0 %v2467
    %v2699 = vpop.f32.mrf.mxu0
    %v2700 = vadd.f32 %v2511, %v2699
    %v2701 = vpop.f32.mrf.mxu0
    %v2702 = vadd.f32 %v2511, %v2701
    %2703 = vmatmul.bf16.gmra.mxu0 %v2469
    %v2704 = vpop.f32.mrf.mxu0
    %v2705 = vadd.f32 %v2511, %v2704
    %v2706 = vpop.f32.mrf.mxu0
    %v2707 = vadd.f32 %v2511, %v2706
    %2708 = vmatmul.bf16.gmra.mxu0 %v2471
    %v2709 = vpop.f32.mrf.mxu0
    %v2710 = vadd.f32 %v2511, %v2709
    %v2711 = vpop.f32.mrf.mxu0
    %v2712 = vadd.f32 %v2511, %v2711
    %2713 = vmatmul.bf16.gmra.mxu0 %v2473
    %v2714 = vpop.f32.mrf.mxu0
    %v2715 = vadd.f32 %v2511, %v2714
    %v2716 = vpop.f32.mrf.mxu0
    %2717 = vdwg.mxu0
    %2718 = vmatpush.bf16.msra.mxu0 %v2641
    %2719 = vmatpush.bf16.msra.mxu0 %v2639
    %2720 = vmatpush.bf16.msra.mxu0 %v2637
    %2721 = vmatpush.bf16.msra.mxu0 %v2635
    %2722 = vmatpush.bf16.msra.mxu0 %v2633
    %2723 = vmatpush.bf16.msra.mxu0 %v2631
    %2724 = vmatpush.bf16.msra.mxu0 %v2629
    %2725 = vmatpush.bf16.msra.mxu0 %v2627
    %2726 = vmatmul.bf16.gmra.mxu0 %v2462
    %v2727 = vpop.f32.mrf.mxu0
    %v2728 = vadd.f32 %v2685, %v2727
    %v2729 = vpop.f32.mrf.mxu0
    %v2730 = vadd.f32 %v2687, %v2729
    %2731 = vmatmul.bf16.gmra.mxu0 %v2464
    %v2732 = vpop.f32.mrf.mxu0
    %v2733 = vadd.f32 %v2690, %v2732
    %v2734 = vpop.f32.mrf.mxu0
    %v2735 = vadd.f32 %v2692, %v2734
    %2736 = vmatmul.bf16.gmra.mxu0 %v2466
    %v2737 = vpop.f32.mrf.mxu0
    %v2738 = vadd.f32 %v2695, %v2737
    %v2739 = vpop.f32.mrf.mxu0
    %v2740 = vadd.f32 %v2697, %v2739
    %2741 = vmatmul.bf16.gmra.mxu0 %v2468
    %v2742 = vpop.f32.mrf.mxu0
    %v2743 = vadd.f32 %v2700, %v2742
    %v2744 = vpop.f32.mrf.mxu0
    %v2745 = vadd.f32 %v2702, %v2744
    %2746 = vmatmul.bf16.gmra.mxu0 %v2470
    %v2747 = vpop.f32.mrf.mxu0
    %v2748 = vadd.f32 %v2705, %v2747
    %v2749 = vpop.f32.mrf.mxu0
    %v2750 = vadd.f32 %v2707, %v2749
    %2751 = vmatmul.bf16.gmra.mxu0 %v2472
    %v2752 = vpop.f32.mrf.mxu0
    %v2753 = vadd.f32 %v2710, %v2752
    %v2754 = vpop.f32.mrf.mxu0
    %v2755 = vadd.f32 %v2712, %v2754
    %2756 = vmatmul.bf16.gmra.mxu0 %v2474
    %v2757 = vpop.f32.mrf.mxu0
    %v2758 = vadd.f32 %v2715, %v2757
    %v2759 = vpop.f32.mrf.mxu0
    %2760 = vdwg.mxu0
    %2761 = vmatpush.bf16.msra.mxu0 %v2626
    %2762 = vmatpush.bf16.msra.mxu0 %v2624
    %2763 = vmatpush.bf16.msra.mxu0 %v2622
    %2764 = vmatpush.bf16.msra.mxu0 %v2620
    %2765 = vmatpush.bf16.msra.mxu0 %v2618
    %2766 = vmatpush.bf16.msra.mxu0 %v2616
    %2767 = vmatpush.bf16.msra.mxu0 %v2614
    %2768 = vmatpush.bf16.msra.mxu0 %v2612
    %2769 = vmatmul.bf16.gmra.mxu0 %v2461
    %v2770 = vpop.f32.mrf.mxu0
    %v2771 = vadd.f32 %v2512, %v2770
    %v2772 = vpop.f32.mrf.mxu0
    %v2773 = vadd.f32 %v2512, %v2772
    %2774 = vmatmul.bf16.gmra.mxu0 %v2463
    %v2775 = vpop.f32.mrf.mxu0
    %v2776 = vadd.f32 %v2512, %v2775
    %v2777 = vpop.f32.mrf.mxu0
    %v2778 = vadd.f32 %v2512, %v2777
    %2779 = vmatmul.bf16.gmra.mxu0 %v2465
    %v2780 = vpop.f32.mrf.mxu0
    %v2781 = vadd.f32 %v2512, %v2780
    %v2782 = vpop.f32.mrf.mxu0
    %v2783 = vadd.f32 %v2512, %v2782
    %2784 = vmatmul.bf16.gmra.mxu0 %v2467
    %v2785 = vpop.f32.mrf.mxu0
    %v2786 = vadd.f32 %v2512, %v2785
    %v2787 = vpop.f32.mrf.mxu0
    %v2788 = vadd.f32 %v2512, %v2787
    %2789 = vmatmul.bf16.gmra.mxu0 %v2469
    %v2790 = vpop.f32.mrf.mxu0
    %v2791 = vadd.f32 %v2512, %v2790
    %v2792 = vpop.f32.mrf.mxu0
    %v2793 = vadd.f32 %v2512, %v2792
    %2794 = vmatmul.bf16.gmra.mxu0 %v2471
    %v2795 = vpop.f32.mrf.mxu0
    %v2796 = vadd.f32 %v2512, %v2795
    %v2797 = vpop.f32.mrf.mxu0
    %v2798 = vadd.f32 %v2512, %v2797
    %2799 = vmatmul.bf16.gmra.mxu0 %v2473
    %v2800 = vpop.f32.mrf.mxu0
    %v2801 = vadd.f32 %v2512, %v2800
    %v2802 = vpop.f32.mrf.mxu0
    %2803 = vdwg.mxu0
    %2804 = vmatpush.bf16.msra.mxu0 %v2642
    %2805 = vmatpush.bf16.msra.mxu0 %v2640
    %2806 = vmatpush.bf16.msra.mxu0 %v2638
    %2807 = vmatpush.bf16.msra.mxu0 %v2636
    %2808 = vmatpush.bf16.msra.mxu0 %v2634
    %2809 = vmatpush.bf16.msra.mxu0 %v2632
    %2810 = vmatpush.bf16.msra.mxu0 %v2630
    %2811 = vmatpush.bf16.msra.mxu0 %v2628
    %2812 = vmatmul.bf16.gmra.mxu0 %v2462
    %v2813 = vpop.f32.mrf.mxu0
    %v2814 = vadd.f32 %v2771, %v2813
    %v2815 = vpop.f32.mrf.mxu0
    %v2816 = vadd.f32 %v2773, %v2815
    %2817 = vmatmul.bf16.gmra.mxu0 %v2464
    %v2818 = vpop.f32.mrf.mxu0
    %v2819 = vadd.f32 %v2776, %v2818
    %v2820 = vpop.f32.mrf.mxu0
    %v2821 = vadd.f32 %v2778, %v2820
    %2822 = vmatmul.bf16.gmra.mxu0 %v2466
    %v2823 = vpop.f32.mrf.mxu0
    %v2824 = vadd.f32 %v2781, %v2823
    %v2825 = vpop.f32.mrf.mxu0
    %v2826 = vadd.f32 %v2783, %v2825
    %2827 = vmatmul.bf16.gmra.mxu0 %v2468
    %v2828 = vpop.f32.mrf.mxu0
    %v2829 = vadd.f32 %v2786, %v2828
    %v2830 = vpop.f32.mrf.mxu0
    %v2831 = vadd.f32 %v2788, %v2830
    %2832 = vmatmul.bf16.gmra.mxu0 %v2470
    %v2833 = vpop.f32.mrf.mxu0
    %v2834 = vadd.f32 %v2791, %v2833
    %v2835 = vpop.f32.mrf.mxu0
    %v2836 = vadd.f32 %v2793, %v2835
    %2837 = vmatmul.bf16.gmra.mxu0 %v2472
    %v2838 = vpop.f32.mrf.mxu0
    %v2839 = vadd.f32 %v2796, %v2838
    %v2840 = vpop.f32.mrf.mxu0
    %v2841 = vadd.f32 %v2798, %v2840
    %2842 = vmatmul.bf16.gmra.mxu0 %v2474
    %v2843 = vpop.f32.mrf.mxu0
    %v2844 = vadd.f32 %v2801, %v2843
    %v2845 = vpop.f32.mrf.mxu0
    %2846 = vdwg.mxu0
    %v2847 = vmax.f32 %v2728, 0.0
    %v2848 = vmax.f32 %v2814, 0.0
    %v2849 = vmax.f32 %v2730, 0.0
    %v2850 = vmax.f32 %v2816, 0.0
    %v2851 = vmax.f32 %v2733, 0.0
    %v2852 = vmax.f32 %v2819, 0.0
    %v2853 = vmax.f32 %v2735, 0.0
    %v2854 = vmax.f32 %v2821, 0.0
    %v2855 = vmax.f32 %v2738, 0.0
    %v2856 = vmax.f32 %v2824, 0.0
    %v2857 = vmax.f32 %v2740, 0.0
    %v2858 = vmax.f32 %v2826, 0.0
    %v2859 = vmax.f32 %v2743, 0.0
    %v2860 = vmax.f32 %v2829, 0.0
    %v2861 = vmax.f32 %v2745, 0.0
    %v2862 = vmax.f32 %v2831, 0.0
    %v2863 = vmax.f32 %v2748, 0.0
    %v2864 = vmax.f32 %v2834, 0.0
    %v2865 = vmax.f32 %v2750, 0.0
    %v2866 = vmax.f32 %v2836, 0.0
    %v2867 = vmax.f32 %v2753, 0.0
    %v2868 = vmax.f32 %v2839, 0.0
    %v2869 = vmax.f32 %v2755, 0.0
    %v2870 = vmax.f32 %v2841, 0.0
    %v2871 = vmax.f32 %v2758, 0.0
    %v2872 = vmax.f32 %v2844, 0.0
    %v2873 = vpack.c.bf16 %v2849, %v2847
    %v2874 = vpack.c.bf16 %v2850, %v2848
    %v2875 = vpack.c.bf16 %v2853, %v2851
    %v2876 = vpack.c.bf16 %v2854, %v2852
    %v2877 = vpack.c.bf16 %v2857, %v2855
    %v2878 = vpack.c.bf16 %v2858, %v2856
    %v2879 = vpack.c.bf16 %v2861, %v2859
    %v2880 = vpack.c.bf16 %v2862, %v2860
    %v2881 = vpack.c.bf16 %v2865, %v2863
    %v2882 = vpack.c.bf16 %v2866, %v2864
    %v2883 = vpack.c.bf16 %v2869, %v2867
    %v2884 = vpack.c.bf16 %v2870, %v2868
    %v2885 = vpack.c.bf16 %v2871, %v2871
    %v2886 = vpack.c.bf16 %v2872, %v2872
    %s2887 = scalar_lea.vmem [#allocation8], 512
    %v2888 = vld [vmem:[%s2887] sm:$0xff]
    %v2889 = vld [vmem:[%s2887 + $0x8] sm:$0xff]
    %v2890 = vld [vmem:[%s2887 + $0x10] sm:$0xff]
    %v2891 = vld [vmem:[%s2887 + $0x18] sm:$0xff]
    %v2892 = vld [vmem:[%s2887 + $0x20] sm:$0xff]
    %v2893 = vld [vmem:[%s2887 + $0x28] sm:$0xff]
    %v2894 = vld [vmem:[%s2887 + $0x30] sm:$0xff]
    %v2895 = vld [vmem:[%s2887 + $0x38] sm:$0xff]
    %v2896 = vld [vmem:[%s2887 + $0x40] sm:$0xff]
    %v2897 = vld [vmem:[%s2887 + $0x48] sm:$0xff]
    %v2898 = vld [vmem:[%s2887 + $0x50] sm:$0xff]
    %v2899 = vld [vmem:[%s2887 + $0x58] sm:$0xff]
    %v2900 = vld [vmem:[%s2887 + $0x60] sm:$0xff]
    %v2901 = vld [vmem:[%s2887 + $0x68] sm:$0xff]
    %v2902 = vld [vmem:[%s2887 + $0x70] sm:$0xff]
    %v2903 = vld [vmem:[%s2887 + $0x78] sm:$0xff]
    %v2904 = vld [vmem:[%s2887 + $0x80] sm:$0xff]
    %v2905 = vld [vmem:[%s2887 + $0x88] sm:$0xff]
    %v2906 = vld [vmem:[%s2887 + $0x90] sm:$0xff]
    %v2907 = vld [vmem:[%s2887 + $0x98] sm:$0xff]
    %v2908 = vld [vmem:[%s2887 + $0xa0] sm:$0xff]
    %v2909 = vld [vmem:[%s2887 + $0xa8] sm:$0xff]
    %v2910 = vld [vmem:[%s2887 + $0xb0] sm:$0xff]
    %v2911 = vld [vmem:[%s2887 + $0xb8] sm:$0xff]
    %v2912 = vld [vmem:[%s2887 + $0xc0] sm:$0xff]
    %v2913 = vld [vmem:[%s2887 + $0xc8] sm:$0xff]
    %v2914 = vld [vmem:[%s2887 + $0xd0] sm:$0xff]
    %v2915 = vld [vmem:[%s2887 + $0xd8] sm:$0xff]
    %v2916 = vld [vmem:[%s2887 + $0xe0] sm:$0xff]
    %v2917 = vld [vmem:[%s2887 + $0xe8] sm:$0xff]
    %v2918 = vld [vmem:[%s2887 + $0xf0] sm:$0xff]
    %v2919 = vld [vmem:[%s2887 + $0xf8] sm:$0xff]
    %s2920 = scalar_lea.vmem %s8, 4
    %v2921 = vld [vmem:[%s2920] sm:$0x3]
    %v2923 = vperm.slane %v2921, 0
    %v2924 = vperm.slane %v2921, 1
    %v2959 = vunpack.c.l.b16 %v2888
    %v2960 = vunpack.c.h.b16 %v2888
    %v2961 = vunpack.c.l.b16 %v2889
    %v2962 = vunpack.c.h.b16 %v2889
    %v2963 = vunpack.c.l.b16 %v2890
    %v2964 = vunpack.c.h.b16 %v2890
    %v2965 = vunpack.c.l.b16 %v2891
    %v2966 = vunpack.c.h.b16 %v2891
    %v2967 = vunpack.c.l.b16 %v2892
    %v2968 = vunpack.c.h.b16 %v2892
    %v2969 = vunpack.c.l.b16 %v2893
    %v2970 = vunpack.c.h.b16 %v2893
    %v2971 = vunpack.c.l.b16 %v2894
    %v2972 = vunpack.c.h.b16 %v2894
    %v2973 = vunpack.c.l.b16 %v2895
    %v2974 = vunpack.c.h.b16 %v2895
    %v2975 = vunpack.c.l.b16 %v2896
    %v2976 = vunpack.c.h.b16 %v2896
    %v2977 = vunpack.c.l.b16 %v2897
    %v2978 = vunpack.c.h.b16 %v2897
    %v2979 = vunpack.c.l.b16 %v2898
    %v2980 = vunpack.c.h.b16 %v2898
    %v2981 = vunpack.c.l.b16 %v2899
    %v2982 = vunpack.c.h.b16 %v2899
    %v2983 = vunpack.c.l.b16 %v2900
    %v2984 = vunpack.c.h.b16 %v2900
    %v2985 = vunpack.c.l.b16 %v2901
    %v2986 = vunpack.c.h.b16 %v2901
    %v2987 = vunpack.c.l.b16 %v2902
    %v2988 = vunpack.c.h.b16 %v2902
    %v2989 = vunpack.c.l.b16 %v2903
    %v2990 = vunpack.c.h.b16 %v2903
    %v2991 = vunpack.c.l.b16 %v2904
    %v2992 = vunpack.c.h.b16 %v2904
    %v2993 = vunpack.c.l.b16 %v2905
    %v2994 = vunpack.c.h.b16 %v2905
    %v2995 = vunpack.c.l.b16 %v2906
    %v2996 = vunpack.c.h.b16 %v2906
    %v2997 = vunpack.c.l.b16 %v2907
    %v2998 = vunpack.c.h.b16 %v2907
    %v2999 = vunpack.c.l.b16 %v2908
    %v3000 = vunpack.c.h.b16 %v2908
    %v3001 = vunpack.c.l.b16 %v2909
    %v3002 = vunpack.c.h.b16 %v2909
    %v3003 = vunpack.c.l.b16 %v2910
    %v3004 = vunpack.c.h.b16 %v2910
    %v3005 = vunpack.c.l.b16 %v2911
    %v3006 = vunpack.c.h.b16 %v2911
    %v3007 = vunpack.c.l.b16 %v2912
    %v3008 = vunpack.c.h.b16 %v2912
    %v3009 = vunpack.c.l.b16 %v2913
    %v3010 = vunpack.c.h.b16 %v2913
    %v3011 = vunpack.c.l.b16 %v2914
    %v3012 = vunpack.c.h.b16 %v2914
    %v3013 = vunpack.c.l.b16 %v2915
    %v3014 = vunpack.c.h.b16 %v2915
    %v3015 = vunpack.c.l.b16 %v2916
    %v3016 = vunpack.c.h.b16 %v2916
    %v3017 = vunpack.c.l.b16 %v2917
    %v3018 = vunpack.c.h.b16 %v2917
    %v3019 = vunpack.c.l.b16 %v2918
    %v3020 = vunpack.c.h.b16 %v2918
    %v3021 = vunpack.c.l.b16 %v2919
    %v3022 = vunpack.c.h.b16 %v2919
    %v3023 = vpack.c.b16 %v2961, %v2959
    %v3024 = vpack.c.b16 %v2962, %v2960
    %v3025 = vpack.c.b16 %v2965, %v2963
    %v3026 = vpack.c.b16 %v2966, %v2964
    %v3027 = vpack.c.b16 %v2969, %v2967
    %v3028 = vpack.c.b16 %v2970, %v2968
    %v3029 = vpack.c.b16 %v2973, %v2971
    %v3030 = vpack.c.b16 %v2974, %v2972
    %v3031 = vpack.c.b16 %v2977, %v2975
    %v3032 = vpack.c.b16 %v2978, %v2976
    %v3033 = vpack.c.b16 %v2981, %v2979
    %v3034 = vpack.c.b16 %v2982, %v2980
    %v3035 = vpack.c.b16 %v2985, %v2983
    %v3036 = vpack.c.b16 %v2986, %v2984
    %v3037 = vpack.c.b16 %v2989, %v2987
    %v3038 = vpack.c.b16 %v2990, %v2988
    %v3039 = vpack.c.b16 %v2993, %v2991
    %v3040 = vpack.c.b16 %v2994, %v2992
    %v3041 = vpack.c.b16 %v2997, %v2995
    %v3042 = vpack.c.b16 %v2998, %v2996
    %v3043 = vpack.c.b16 %v3001, %v2999
    %v3044 = vpack.c.b16 %v3002, %v3000
    %v3045 = vpack.c.b16 %v3005, %v3003
    %v3046 = vpack.c.b16 %v3006, %v3004
    %v3047 = vpack.c.b16 %v3009, %v3007
    %v3048 = vpack.c.b16 %v3010, %v3008
    %v3049 = vpack.c.b16 %v3013, %v3011
    %v3050 = vpack.c.b16 %v3014, %v3012
    %v3051 = vpack.c.b16 %v3017, %v3015
    %v3052 = vpack.c.b16 %v3018, %v3016
    %v3053 = vpack.c.b16 %v3021, %v3019
    %v3054 = vpack.c.b16 %v3022, %v3020
    %3087 = vmatpush.bf16.msra.mxu0 %v3037
    %3088 = vmatpush.bf16.msra.mxu0 %v3035
    %3089 = vmatpush.bf16.msra.mxu0 %v3033
    %3090 = vmatpush.bf16.msra.mxu0 %v3031
    %3091 = vmatpush.bf16.msra.mxu0 %v3029
    %3092 = vmatpush.bf16.msra.mxu0 %v3027
    %3093 = vmatpush.bf16.msra.mxu0 %v3025
    %3094 = vmatpush.bf16.msra.mxu0 %v3023
    %3095 = vmatmul.bf16.gmra.mxu0 %v2873
    %v3096 = vpop.f32.mrf.mxu0
    %v3097 = vadd.f32 %v2923, %v3096
    %v3098 = vpop.f32.mrf.mxu0
    %v3099 = vadd.f32 %v2923, %v3098
    %3100 = vmatmul.bf16.gmra.mxu0 %v2875
    %v3101 = vpop.f32.mrf.mxu0
    %v3102 = vadd.f32 %v2923, %v3101
    %v3103 = vpop.f32.mrf.mxu0
    %v3104 = vadd.f32 %v2923, %v3103
    %3105 = vmatmul.bf16.gmra.mxu0 %v2877
    %v3106 = vpop.f32.mrf.mxu0
    %v3107 = vadd.f32 %v2923, %v3106
    %v3108 = vpop.f32.mrf.mxu0
    %v3109 = vadd.f32 %v2923, %v3108
    %3110 = vmatmul.bf16.gmra.mxu0 %v2879
    %v3111 = vpop.f32.mrf.mxu0
    %v3112 = vadd.f32 %v2923, %v3111
    %v3113 = vpop.f32.mrf.mxu0
    %v3114 = vadd.f32 %v2923, %v3113
    %3115 = vmatmul.bf16.gmra.mxu0 %v2881
    %v3116 = vpop.f32.mrf.mxu0
    %v3117 = vadd.f32 %v2923, %v3116
    %v3118 = vpop.f32.mrf.mxu0
    %v3119 = vadd.f32 %v2923, %v3118
    %3120 = vmatmul.bf16.gmra.mxu0 %v2883
    %v3121 = vpop.f32.mrf.mxu0
    %v3122 = vadd.f32 %v2923, %v3121
    %v3123 = vpop.f32.mrf.mxu0
    %v3124 = vadd.f32 %v2923, %v3123
    %3125 = vmatmul.bf16.gmra.mxu0 %v2885
    %v3126 = vpop.f32.mrf.mxu0
    %v3127 = vadd.f32 %v2923, %v3126
    %v3128 = vpop.f32.mrf.mxu0
    %3129 = vdwg.mxu0
    %3130 = vmatpush.bf16.msra.mxu0 %v3053
    %3131 = vmatpush.bf16.msra.mxu0 %v3051
    %3132 = vmatpush.bf16.msra.mxu0 %v3049
    %3133 = vmatpush.bf16.msra.mxu0 %v3047
    %3134 = vmatpush.bf16.msra.mxu0 %v3045
    %3135 = vmatpush.bf16.msra.mxu0 %v3043
    %3136 = vmatpush.bf16.msra.mxu0 %v3041
    %3137 = vmatpush.bf16.msra.mxu0 %v3039
    %3138 = vmatmul.bf16.gmra.mxu0 %v2874
    %v3139 = vpop.f32.mrf.mxu0
    %v3140 = vadd.f32 %v3097, %v3139
    %v3141 = vpop.f32.mrf.mxu0
    %v3142 = vadd.f32 %v3099, %v3141
    %3143 = vmatmul.bf16.gmra.mxu0 %v2876
    %v3144 = vpop.f32.mrf.mxu0
    %v3145 = vadd.f32 %v3102, %v3144
    %v3146 = vpop.f32.mrf.mxu0
    %v3147 = vadd.f32 %v3104, %v3146
    %3148 = vmatmul.bf16.gmra.mxu0 %v2878
    %v3149 = vpop.f32.mrf.mxu0
    %v3150 = vadd.f32 %v3107, %v3149
    %v3151 = vpop.f32.mrf.mxu0
    %v3152 = vadd.f32 %v3109, %v3151
    %3153 = vmatmul.bf16.gmra.mxu0 %v2880
    %v3154 = vpop.f32.mrf.mxu0
    %v3155 = vadd.f32 %v3112, %v3154
    %v3156 = vpop.f32.mrf.mxu0
    %v3157 = vadd.f32 %v3114, %v3156
    %3158 = vmatmul.bf16.gmra.mxu0 %v2882
    %v3159 = vpop.f32.mrf.mxu0
    %v3160 = vadd.f32 %v3117, %v3159
    %v3161 = vpop.f32.mrf.mxu0
    %v3162 = vadd.f32 %v3119, %v3161
    %3163 = vmatmul.bf16.gmra.mxu0 %v2884
    %v3164 = vpop.f32.mrf.mxu0
    %v3165 = vadd.f32 %v3122, %v3164
    %v3166 = vpop.f32.mrf.mxu0
    %v3167 = vadd.f32 %v3124, %v3166
    %3168 = vmatmul.bf16.gmra.mxu0 %v2886
    %v3169 = vpop.f32.mrf.mxu0
    %v3170 = vadd.f32 %v3127, %v3169
    %v3171 = vpop.f32.mrf.mxu0
    %3172 = vdwg.mxu0
    %3173 = vmatpush.bf16.msra.mxu0 %v3038
    %3174 = vmatpush.bf16.msra.mxu0 %v3036
    %3175 = vmatpush.bf16.msra.mxu0 %v3034
    %3176 = vmatpush.bf16.msra.mxu0 %v3032
    %3177 = vmatpush.bf16.msra.mxu0 %v3030
    %3178 = vmatpush.bf16.msra.mxu0 %v3028
    %3179 = vmatpush.bf16.msra.mxu0 %v3026
    %3180 = vmatpush.bf16.msra.mxu0 %v3024
    %3181 = vmatmul.bf16.gmra.mxu0 %v2873
    %v3182 = vpop.f32.mrf.mxu0
    %v3183 = vadd.f32 %v2924, %v3182
    %v3184 = vpop.f32.mrf.mxu0
    %v3185 = vadd.f32 %v2924, %v3184
    %3186 = vmatmul.bf16.gmra.mxu0 %v2875
    %v3187 = vpop.f32.mrf.mxu0
    %v3188 = vadd.f32 %v2924, %v3187
    %v3189 = vpop.f32.mrf.mxu0
    %v3190 = vadd.f32 %v2924, %v3189
    %3191 = vmatmul.bf16.gmra.mxu0 %v2877
    %v3192 = vpop.f32.mrf.mxu0
    %v3193 = vadd.f32 %v2924, %v3192
    %v3194 = vpop.f32.mrf.mxu0
    %v3195 = vadd.f32 %v2924, %v3194
    %3196 = vmatmul.bf16.gmra.mxu0 %v2879
    %v3197 = vpop.f32.mrf.mxu0
    %v3198 = vadd.f32 %v2924, %v3197
    %v3199 = vpop.f32.mrf.mxu0
    %v3200 = vadd.f32 %v2924, %v3199
    %3201 = vmatmul.bf16.gmra.mxu0 %v2881
    %v3202 = vpop.f32.mrf.mxu0
    %v3203 = vadd.f32 %v2924, %v3202
    %v3204 = vpop.f32.mrf.mxu0
    %v3205 = vadd.f32 %v2924, %v3204
    %3206 = vmatmul.bf16.gmra.mxu0 %v2883
    %v3207 = vpop.f32.mrf.mxu0
    %v3208 = vadd.f32 %v2924, %v3207
    %v3209 = vpop.f32.mrf.mxu0
    %v3210 = vadd.f32 %v2924, %v3209
    %3211 = vmatmul.bf16.gmra.mxu0 %v2885
    %v3212 = vpop.f32.mrf.mxu0
    %v3213 = vadd.f32 %v2924, %v3212
    %v3214 = vpop.f32.mrf.mxu0
    %3215 = vdwg.mxu0
    %3216 = vmatpush.bf16.msra.mxu0 %v3054
    %3217 = vmatpush.bf16.msra.mxu0 %v3052
    %3218 = vmatpush.bf16.msra.mxu0 %v3050
    %3219 = vmatpush.bf16.msra.mxu0 %v3048
    %3220 = vmatpush.bf16.msra.mxu0 %v3046
    %3221 = vmatpush.bf16.msra.mxu0 %v3044
    %3222 = vmatpush.bf16.msra.mxu0 %v3042
    %3223 = vmatpush.bf16.msra.mxu0 %v3040
    %3224 = vmatmul.bf16.gmra.mxu0 %v2874
    %v3225 = vpop.f32.mrf.mxu0
    %v3226 = vadd.f32 %v3183, %v3225
    %v3227 = vpop.f32.mrf.mxu0
    %v3228 = vadd.f32 %v3185, %v3227
    %3229 = vmatmul.bf16.gmra.mxu0 %v2876
    %v3230 = vpop.f32.mrf.mxu0
    %v3231 = vadd.f32 %v3188, %v3230
    %v3232 = vpop.f32.mrf.mxu0
    %v3233 = vadd.f32 %v3190, %v3232
    %3234 = vmatmul.bf16.gmra.mxu0 %v2878
    %v3235 = vpop.f32.mrf.mxu0
    %v3236 = vadd.f32 %v3193, %v3235
    %v3237 = vpop.f32.mrf.mxu0
    %v3238 = vadd.f32 %v3195, %v3237
    %3239 = vmatmul.bf16.gmra.mxu0 %v2880
    %v3240 = vpop.f32.mrf.mxu0
    %v3241 = vadd.f32 %v3198, %v3240
    %v3242 = vpop.f32.mrf.mxu0
    %v3243 = vadd.f32 %v3200, %v3242
    %3244 = vmatmul.bf16.gmra.mxu0 %v2882
    %v3245 = vpop.f32.mrf.mxu0
    %v3246 = vadd.f32 %v3203, %v3245
    %v3247 = vpop.f32.mrf.mxu0
    %v3248 = vadd.f32 %v3205, %v3247
    %3249 = vmatmul.bf16.gmra.mxu0 %v2884
    %v3250 = vpop.f32.mrf.mxu0
    %v3251 = vadd.f32 %v3208, %v3250
    %v3252 = vpop.f32.mrf.mxu0
    %v3253 = vadd.f32 %v3210, %v3252
    %3254 = vmatmul.bf16.gmra.mxu0 %v2886
    %v3255 = vpop.f32.mrf.mxu0
    %v3256 = vadd.f32 %v3213, %v3255
    %v3257 = vpop.f32.mrf.mxu0
    %3258 = vdwg.mxu0
    %v3259 = vmax.f32 %v3140, 0.0
    %v3260 = vmax.f32 %v3226, 0.0
    %v3261 = vmax.f32 %v3142, 0.0
    %v3262 = vmax.f32 %v3228, 0.0
    %v3263 = vmax.f32 %v3145, 0.0
    %v3264 = vmax.f32 %v3231, 0.0
    %v3265 = vmax.f32 %v3147, 0.0
    %v3266 = vmax.f32 %v3233, 0.0
    %v3267 = vmax.f32 %v3150, 0.0
    %v3268 = vmax.f32 %v3236, 0.0
    %v3269 = vmax.f32 %v3152, 0.0
    %v3270 = vmax.f32 %v3238, 0.0
    %v3271 = vmax.f32 %v3155, 0.0
    %v3272 = vmax.f32 %v3241, 0.0
    %v3273 = vmax.f32 %v3157, 0.0
    %v3274 = vmax.f32 %v3243, 0.0
    %v3275 = vmax.f32 %v3160, 0.0
    %v3276 = vmax.f32 %v3246, 0.0
    %v3277 = vmax.f32 %v3162, 0.0
    %v3278 = vmax.f32 %v3248, 0.0
    %v3279 = vmax.f32 %v3165, 0.0
    %v3280 = vmax.f32 %v3251, 0.0
    %v3281 = vmax.f32 %v3167, 0.0
    %v3282 = vmax.f32 %v3253, 0.0
    %v3283 = vmax.f32 %v3170, 0.0
    %v3284 = vmax.f32 %v3256, 0.0
    %v3285 = vadd.f32 %v3259, %v2435
    %v3286 = vadd.f32 %v3260, %v2436
    %v3287 = vadd.f32 %v3261, %v2437
    %v3288 = vadd.f32 %v3262, %v2438
    %v3289 = vadd.f32 %v3263, %v2439
    %v3290 = vadd.f32 %v3264, %v2440
    %v3291 = vadd.f32 %v3265, %v2441
    %v3292 = vadd.f32 %v3266, %v2442
    %v3293 = vadd.f32 %v3267, %v2443
    %v3294 = vadd.f32 %v3268, %v2444
    %v3295 = vadd.f32 %v3269, %v2445
    %v3296 = vadd.f32 %v3270, %v2446
    %v3297 = vadd.f32 %v3271, %v2447
    %v3298 = vadd.f32 %v3272, %v2448
    %v3299 = vadd.f32 %v3273, %v2449
    %v3300 = vadd.f32 %v3274, %v2450
    %v3301 = vadd.f32 %v3275, %v2451
    %v3302 = vadd.f32 %v3276, %v2452
    %v3303 = vadd.f32 %v3277, %v2453
    %v3304 = vadd.f32 %v3278, %v2454
    %v3305 = vadd.f32 %v3279, %v2455
    %v3306 = vadd.f32 %v3280, %v2456
    %v3307 = vadd.f32 %v3281, %v2457
    %v3308 = vadd.f32 %v3282, %v2458
    %v3309 = vadd.f32 %v3283, %v2459
    %v3310 = vadd.f32 %v3284, %v2460
    %v3311 = vpack.c.bf16 %v3287, %v3285
    %v3312 = vpack.c.bf16 %v3288, %v3286
    %v3313 = vpack.c.bf16 %v3291, %v3289
    %v3314 = vpack.c.bf16 %v3292, %v3290
    %v3315 = vpack.c.bf16 %v3295, %v3293
    %v3316 = vpack.c.bf16 %v3296, %v3294
    %v3317 = vpack.c.bf16 %v3299, %v3297
    %v3318 = vpack.c.bf16 %v3300, %v3298
    %v3319 = vpack.c.bf16 %v3303, %v3301
    %v3320 = vpack.c.bf16 %v3304, %v3302
    %v3321 = vpack.c.bf16 %v3307, %v3305
    %v3322 = vpack.c.bf16 %v3308, %v3306
    %v3323 = vpack.c.bf16 %v3309, %v3309
    %v3324 = vpack.c.bf16 %v3310, %v3310
    %v3325 = vld [vmem:[#allocation10] sm:$0xf]
    %v3326 = vld [vmem:[#allocation10 + $0x4] sm:$0xf]
    %v3327 = vld [vmem:[#allocation10 + $0x8] sm:$0xf]
    %v3328 = vld [vmem:[#allocation10 + $0xc] sm:$0xf]
    %v3329 = vld [vmem:[#allocation10 + $0x10] sm:$0xf]
    %v3330 = vld [vmem:[#allocation10 + $0x14] sm:$0xf]
    %v3331 = vld [vmem:[#allocation10 + $0x18] sm:$0xf]
    %v3332 = vld [vmem:[#allocation10 + $0x1c] sm:$0xf]
    %v3333 = vld [vmem:[#allocation10 + $0x20] sm:$0xf]
    %v3334 = vld [vmem:[#allocation10 + $0x24] sm:$0xf]
    %v3335 = vld [vmem:[#allocation10 + $0x28] sm:$0xf]
    %v3336 = vld [vmem:[#allocation10 + $0x2c] sm:$0xf]
    %v3337 = vld [vmem:[#allocation10 + $0x30] sm:$0xf]
    %v3338 = vld [vmem:[#allocation10 + $0x34] sm:$0xf]
    %v3339 = vld [vmem:[#allocation10 + $0x38] sm:$0xf]
    %v3340 = vld [vmem:[#allocation10 + $0x3c] sm:$0xf]
    %v3341 = vld [vmem:[#allocation10 + $0x40] sm:$0xf]
    %v3342 = vld [vmem:[#allocation10 + $0x44] sm:$0xf]
    %v3343 = vld [vmem:[#allocation10 + $0x48] sm:$0xf]
    %v3344 = vld [vmem:[#allocation10 + $0x4c] sm:$0xf]
    %v3345 = vld [vmem:[#allocation10 + $0x50] sm:$0xf]
    %v3346 = vld [vmem:[#allocation10 + $0x54] sm:$0xf]
    %v3347 = vld [vmem:[#allocation10 + $0x58] sm:$0xf]
    %v3348 = vld [vmem:[#allocation10 + $0x5c] sm:$0xf]
    %v3349 = vld [vmem:[#allocation10 + $0x60] sm:$0xf]
    %v3350 = vld [vmem:[#allocation10 + $0x64] sm:$0xf]
    %v3351 = vld [vmem:[#allocation10 + $0x68] sm:$0xf]
    %v3352 = vld [vmem:[#allocation10 + $0x6c] sm:$0xf]
    %v3353 = vld [vmem:[#allocation10 + $0x70] sm:$0xf]
    %v3354 = vld [vmem:[#allocation10 + $0x74] sm:$0xf]
    %v3355 = vld [vmem:[#allocation10 + $0x78] sm:$0xf]
    %v3356 = vld [vmem:[#allocation10 + $0x7c] sm:$0xf]
    %v3357 = vld [vmem:[%s10] sm:$0x1]
    %v3359 = vperm.slane %v3357, 0
    %v3393 = vunpack.c.l.b16 %v3325
    %v3394 = vunpack.c.l.b16 %v3326
    %v3395 = vunpack.c.l.b16 %v3327
    %v3396 = vunpack.c.l.b16 %v3328
    %v3397 = vunpack.c.l.b16 %v3329
    %v3398 = vunpack.c.l.b16 %v3330
    %v3399 = vunpack.c.l.b16 %v3331
    %v3400 = vunpack.c.l.b16 %v3332
    %v3401 = vunpack.c.l.b16 %v3333
    %v3402 = vunpack.c.l.b16 %v3334
    %v3403 = vunpack.c.l.b16 %v3335
    %v3404 = vunpack.c.l.b16 %v3336
    %v3405 = vunpack.c.l.b16 %v3337
    %v3406 = vunpack.c.l.b16 %v3338
    %v3407 = vunpack.c.l.b16 %v3339
    %v3408 = vunpack.c.l.b16 %v3340
    %v3409 = vunpack.c.l.b16 %v3341
    %v3410 = vunpack.c.l.b16 %v3342
    %v3411 = vunpack.c.l.b16 %v3343
    %v3412 = vunpack.c.l.b16 %v3344
    %v3413 = vunpack.c.l.b16 %v3345
    %v3414 = vunpack.c.l.b16 %v3346
    %v3415 = vunpack.c.l.b16 %v3347
    %v3416 = vunpack.c.l.b16 %v3348
    %v3417 = vunpack.c.l.b16 %v3349
    %v3418 = vunpack.c.l.b16 %v3350
    %v3419 = vunpack.c.l.b16 %v3351
    %v3420 = vunpack.c.l.b16 %v3352
    %v3421 = vunpack.c.l.b16 %v3353
    %v3422 = vunpack.c.l.b16 %v3354
    %v3423 = vunpack.c.l.b16 %v3355
    %v3424 = vunpack.c.l.b16 %v3356
    %v3425 = vpack.c.b16 %v3394, %v3393
    %v3426 = vpack.c.b16 %v3396, %v3395
    %v3427 = vpack.c.b16 %v3398, %v3397
    %v3428 = vpack.c.b16 %v3400, %v3399
    %v3429 = vpack.c.b16 %v3402, %v3401
    %v3430 = vpack.c.b16 %v3404, %v3403
    %v3431 = vpack.c.b16 %v3406, %v3405
    %v3432 = vpack.c.b16 %v3408, %v3407
    %v3433 = vpack.c.b16 %v3410, %v3409
    %v3434 = vpack.c.b16 %v3412, %v3411
    %v3435 = vpack.c.b16 %v3414, %v3413
    %v3436 = vpack.c.b16 %v3416, %v3415
    %v3437 = vpack.c.b16 %v3418, %v3417
    %v3438 = vpack.c.b16 %v3420, %v3419
    %v3439 = vpack.c.b16 %v3422, %v3421
    %v3440 = vpack.c.b16 %v3424, %v3423
    %3457 = vmatpush.bf16.msra.mxu0 %v3432
    %3458 = vmatpush.bf16.msra.mxu0 %v3431
    %3459 = vmatpush.bf16.msra.mxu0 %v3430
    %3460 = vmatpush.bf16.msra.mxu0 %v3429
    %3461 = vmatpush.bf16.msra.mxu0 %v3428
    %3462 = vmatpush.bf16.msra.mxu0 %v3427
    %3463 = vmatpush.bf16.msra.mxu0 %v3426
    %3464 = vmatpush.bf16.msra.mxu0 %v3425
    %3465 = vmatmul.bf16.gmra.mxu0 %v3311
    %v3466 = vpop.f32.mrf.mxu0
    %v3467 = vadd.f32 %v3359, %v3466
    %v3468 = vpop.f32.mrf.mxu0
    %v3469 = vadd.f32 %v3359, %v3468
    %3470 = vmatmul.bf16.gmra.mxu0 %v3313
    %v3471 = vpop.f32.mrf.mxu0
    %v3472 = vadd.f32 %v3359, %v3471
    %v3473 = vpop.f32.mrf.mxu0
    %v3474 = vadd.f32 %v3359, %v3473
    %3475 = vmatmul.bf16.gmra.mxu0 %v3315
    %v3476 = vpop.f32.mrf.mxu0
    %v3477 = vadd.f32 %v3359, %v3476
    %v3478 = vpop.f32.mrf.mxu0
    %v3479 = vadd.f32 %v3359, %v3478
    %3480 = vmatmul.bf16.gmra.mxu0 %v3317
    %v3481 = vpop.f32.mrf.mxu0
    %v3482 = vadd.f32 %v3359, %v3481
    %v3483 = vpop.f32.mrf.mxu0
    %v3484 = vadd.f32 %v3359, %v3483
    %3485 = vmatmul.bf16.gmra.mxu0 %v3319
    %v3486 = vpop.f32.mrf.mxu0
    %v3487 = vadd.f32 %v3359, %v3486
    %v3488 = vpop.f32.mrf.mxu0
    %v3489 = vadd.f32 %v3359, %v3488
    %3490 = vmatmul.bf16.gmra.mxu0 %v3321
    %v3491 = vpop.f32.mrf.mxu0
    %v3492 = vadd.f32 %v3359, %v3491
    %v3493 = vpop.f32.mrf.mxu0
    %v3494 = vadd.f32 %v3359, %v3493
    %3495 = vmatmul.bf16.gmra.mxu0 %v3323
    %v3496 = vpop.f32.mrf.mxu0
    %v3497 = vadd.f32 %v3359, %v3496
    %v3498 = vpop.f32.mrf.mxu0
    %3499 = vdwg.mxu0
    %3500 = vmatpush.bf16.msra.mxu0 %v3440
    %3501 = vmatpush.bf16.msra.mxu0 %v3439
    %3502 = vmatpush.bf16.msra.mxu0 %v3438
    %3503 = vmatpush.bf16.msra.mxu0 %v3437
    %3504 = vmatpush.bf16.msra.mxu0 %v3436
    %3505 = vmatpush.bf16.msra.mxu0 %v3435
    %3506 = vmatpush.bf16.msra.mxu0 %v3434
    %3507 = vmatpush.bf16.msra.mxu0 %v3433
    %3508 = vmatmul.bf16.gmra.mxu0 %v3312
    %v3509 = vpop.f32.mrf.mxu0
    %v3510 = vadd.f32 %v3467, %v3509
    %v3511 = vpop.f32.mrf.mxu0
    %v3512 = vadd.f32 %v3469, %v3511
    %3513 = vmatmul.bf16.gmra.mxu0 %v3314
    %v3514 = vpop.f32.mrf.mxu0
    %v3515 = vadd.f32 %v3472, %v3514
    %v3516 = vpop.f32.mrf.mxu0
    %v3517 = vadd.f32 %v3474, %v3516
    %3518 = vmatmul.bf16.gmra.mxu0 %v3316
    %v3519 = vpop.f32.mrf.mxu0
    %v3520 = vadd.f32 %v3477, %v3519
    %v3521 = vpop.f32.mrf.mxu0
    %v3522 = vadd.f32 %v3479, %v3521
    %3523 = vmatmul.bf16.gmra.mxu0 %v3318
    %v3524 = vpop.f32.mrf.mxu0
    %v3525 = vadd.f32 %v3482, %v3524
    %v3526 = vpop.f32.mrf.mxu0
    %v3527 = vadd.f32 %v3484, %v3526
    %3528 = vmatmul.bf16.gmra.mxu0 %v3320
    %v3529 = vpop.f32.mrf.mxu0
    %v3530 = vadd.f32 %v3487, %v3529
    %v3531 = vpop.f32.mrf.mxu0
    %v3532 = vadd.f32 %v3489, %v3531
    %3533 = vmatmul.bf16.gmra.mxu0 %v3322
    %v3534 = vpop.f32.mrf.mxu0
    %v3535 = vadd.f32 %v3492, %v3534
    %v3536 = vpop.f32.mrf.mxu0
    %v3537 = vadd.f32 %v3494, %v3536
    %3538 = vmatmul.bf16.gmra.mxu0 %v3324
    %v3539 = vpop.f32.mrf.mxu0
    %v3540 = vadd.f32 %v3497, %v3539
    %v3541 = vpop.f32.mrf.mxu0
    %3542 = vdwg.mxu0
    %v3543 = vtanh.pop %v3510
    %v3544 = vtanh.pop %v3512
    %v3545 = vtanh.pop %v3515
    %v3546 = vtanh.pop %v3517
    %v3547 = vtanh.pop %v3520
    %v3548 = vtanh.pop %v3522
    %v3549 = vtanh.pop %v3525
    %v3550 = vtanh.pop %v3527
    %v3551 = vtanh.pop %v3530
    %v3552 = vtanh.pop %v3532
    %v3553 = vtanh.pop %v3535
    %v3554 = vtanh.pop %v3537
    %v3555 = vtanh.pop %v3540
    %3556 = vst [vmem:[#allocation11] sm:$0xff] %v3543
    %3557 = vst [vmem:[#allocation11 + $0x8] sm:$0xff] %v3544
    %3558 = vst [vmem:[#allocation11 + $0x10] sm:$0xff] %v3545
    %3559 = vst [vmem:[#allocation11 + $0x18] sm:$0xff] %v3546
    %3560 = vst [vmem:[#allocation11 + $0x20] sm:$0xff] %v3547
    %3561 = vst [vmem:[#allocation11 + $0x28] sm:$0xff] %v3548
    %3562 = vst [vmem:[#allocation11 + $0x30] sm:$0xff] %v3549
    %3563 = vst [vmem:[#allocation11 + $0x38] sm:$0xff] %v3550
    %3564 = vst [vmem:[#allocation11 + $0x40] sm:$0xff] %v3551
    %3565 = vst [vmem:[#allocation11 + $0x48] sm:$0xff] %v3552
    %3566 = vst [vmem:[#allocation11 + $0x50] sm:$0xff] %v3553
    %3567 = vst [vmem:[#allocation11 + $0x58] sm:$0xff] %v3554
    %3568 = vst [vmem:[#allocation11 + $0x60] sm:$0xff] %v3555
    // Predicated region
    $region66: #{tpu_custom_call.1} parent=1 // pred_check
      _
    $region67: #{tpu_custom_call.1} parent=1 // pred_check_branch
      %3570 = sbr.rel (0) target = $region69
    $region68: #{tpu_custom_call.1} parent=1 // pred_region
      %3572 = vsyncadd [#allocation4], 0
      %s3573 = sshll.u32 [#allocation11], 4
      %s3574 = int_to_ptr.vmem [resolvable:$true] %s3573
      %s3575 = sshll.u32 %s11, 4
      %s3576 = int_to_ptr.hbm [resolvable:$true] %s3575
      %3581 = dma.vmem_to_hbm [thread:$0]  %s3574, 1664, %s3576, [#allocation4], 128, 128, 8
    $region69: #{tpu_custom_call.1} parent=1 // pred_fallthru
      _
    // Predicated region
    $region70: #{tpu_custom_call.1} parent=1 // pred_check
      _
    $region71: #{tpu_custom_call.1} parent=1 // pred_check_branch
      %3583 = sbr.rel (0) target = $region73
    $region72: #{tpu_custom_call.1} parent=1 // pred_region
      %3585 = dma.done [#allocation4], 1664
    $region73: #{tpu_custom_call.1} parent=1 // pred_fallthru
      _
    %3586 = vsyncpa [#allocation3], 1
    %3587 = vsyncpa [#allocation6], 1
    %3588 = vsyncpa [#allocation9], 1
    %3589 = vsyncpa [#allocation4], 1

</llo_original>
